<compile_context>
chip_gen: v5e
topology: v5e:2x2
jax: 0.10.0
libtpu: 0.0.40
codegen_flags: <defaults>
</compile_context>

<pallas_src>
import functools

import jax
import jax.numpy as jnp
from jax.experimental import pallas as pl
from jax.experimental.pallas import tpu as pltpu


# ----------------------------------------------------------------------------
# Fused matmul kernel: y = act(x @ w + b)  (BN already folded into w, b)
# ----------------------------------------------------------------------------
def _apply_act(x, act):
    if act == "relu":
        return jnp.maximum(x, 0.0)
    if act == "sigmoid":
        return jax.nn.sigmoid(x)
    return x


def _matmul_kernel(act, x_ref, w_ref, b_ref, o_ref):
    acc = jnp.dot(x_ref[...], w_ref[...], preferred_element_type=jnp.float32)
    acc = acc + b_ref[...]
    o_ref[...] = _apply_act(acc, act).astype(o_ref.dtype)


def matmul_bias_act(x, w, b, act="none", row_tile=512):
    """y = act(x @ w + b).  x:(M,K) w:(K,N) b:(1,N) -> (M,N).  M-tiled, parallel."""
    M, K = x.shape
    _, Nc = w.shape
    tm = M if M <= row_tile else row_tile
    return pl.pallas_call(
        functools.partial(_matmul_kernel, act),
        out_shape=jax.ShapeDtypeStruct((M, Nc), x.dtype),
        grid=(pl.cdiv(M, tm),),
        in_specs=[
            pl.BlockSpec((tm, K), lambda i: (i, 0)),
            pl.BlockSpec((K, Nc), lambda i: (0, 0)),
            pl.BlockSpec((1, Nc), lambda i: (0, 0)),
        ],
        out_specs=pl.BlockSpec((tm, Nc), lambda i: (i, 0)),
        compiler_params=pltpu.CompilerParams(dimension_semantics=("parallel",)),
    )(x, w, b)


# ----------------------------------------------------------------------------
# Shared SE + pointwise-projection tail (runs on VMEM-resident data)
# ----------------------------------------------------------------------------
def _se_pw_tail(y, x_res, w1, b1, w2, b2, wpw, bpw, inv_hw, out_dtype):
    """y:(H,W,C) -> SE gate -> 1x1 proj (+folded BN) -> optional residual."""
    pooled = jnp.sum(jnp.sum(y, axis=0), axis=0, keepdims=True) * inv_hw   # (1, C)
    h1 = jnp.maximum(
        jnp.dot(pooled, w1, preferred_element_type=jnp.float32) + b1, 0.0)
    gate = jax.nn.sigmoid(
        jnp.dot(h1, w2, preferred_element_type=jnp.float32) + b2)          # (1, C)
    y = y * gate                                                           # per-channel gate
    H = y.shape[0]
    C, D = wpw.shape
    wpw_b = jnp.broadcast_to(wpw[None, :, :], (H, C, D))
    out = jax.lax.dot_general(y, wpw_b, (((2,), (1,)), ((0,), (0,))),
                              preferred_element_type=jnp.float32) + bpw    # (H, W, D)
    if x_res is not None:
        out = out + x_res
    return out.astype(out_dtype)


# ----------------------------------------------------------------------------
# Stride-1 block: expand(1x1)+ReLU -> pad (VMEM scratch) -> dw3x3+ReLU -> SE ->
#                 pw1x1 -> residual, all in one kernel, one image per program.
# ----------------------------------------------------------------------------
def _block_s1_kernel(H, W, has_expand, has_residual, *refs):
    idx = 0
    x_ref = refs[idx]; idx += 1
    if has_expand:
        we_ref, be_ref = refs[idx], refs[idx + 1]; idx += 2
    (wdw_ref, bdw_ref, w1_ref, b1_ref, w2_ref, b2_ref,
     wpw_ref, bpw_ref) = refs[idx:idx + 8]
    o_ref = refs[idx + 8]
    pad_ref = refs[idx + 9]                                 # VMEM scratch (H+2, W+16, Cm)

    x = x_ref[...]                                          # (H, W, Cin)

    # ---- expand 1x1 (+ folded BN) + ReLU, or identity for DS blocks ----
    if has_expand:
        we = we_ref[...]                                    # (Cin, Cm)
        cin, cm = we.shape
        we_b = jnp.broadcast_to(we[None, :, :], (H, cin, cm))
        y = jax.lax.dot_general(x, we_b, (((2,), (1,)), ((0,), (0,))),
                                preferred_element_type=jnp.float32)
        y = jnp.maximum(y + be_ref[...], 0.0)               # (H, W, Cm)
    else:
        y = x.astype(jnp.float32)                           # (H, W, C)

    # ---- zero-pad into VMEM scratch; interior at sublane-aligned offset 8 ----
    pad_ref[...] = jnp.zeros_like(pad_ref)
    pad_ref[1:H + 1, 8:W + 8, :] = y

    # ---- depthwise 3x3 (+ folded BN) + ReLU: 9 static window loads ----
    wdw = wdw_ref[...]                                      # (9, Cm)
    offs = [(di, dj) for di in range(3) for dj in range(3)]
    acc = None
    for t, (di, dj) in enumerate(offs):
        tap = pad_ref[di:di + H, dj + 7:dj + 7 + W, :]      # (H, W, Cm)
        term = tap * wdw[t:t + 1, :]
        acc = term if acc is None else acc + term
    y = jnp.maximum(acc + bdw_ref[...], 0.0)                # (H, W, Cm)

    # ---- SE + pointwise projection + residual ----
    x_res = x.astype(jnp.float32) if has_residual else None
    o_ref[...] = _se_pw_tail(y, x_res, w1_ref[...], b1_ref[...], w2_ref[...],
                             b2_ref[...], wpw_ref[...], bpw_ref[...],
                             1.0 / (H * W), o_ref.dtype)


def fused_block_s1(x, blk):
    """One fused stride-1 MobileNet block; grid over batch ('parallel')."""
    N, H, W, Cin = x.shape
    has_expand = blk["type"] == "ir"
    Cm = blk["dw_w"].shape[1]
    D = blk["pw_w"].shape[1]
    has_res = blk["has_residual"]
    if has_res:
        assert Cin == D, "residual requires matching channels"

    weights = []
    if has_expand:
        weights += [blk["exp_w"], blk["exp_b"]]
    weights += [blk["dw_w"], blk["dw_b"], blk["se1_w"], blk["se1_b"],
                blk["se2_w"], blk["se2_b"], blk["pw_w"], blk["pw_b"]]

    x_spec = pl.BlockSpec((None, H, W, Cin), lambda n: (n, 0, 0, 0))
    w_specs = [pl.BlockSpec(tuple(w.shape), lambda n, nd=w.ndim: (0,) * nd)
               for w in weights]

    return pl.pallas_call(
        functools.partial(_block_s1_kernel, H, W, has_expand, has_res),
        out_shape=jax.ShapeDtypeStruct((N, H, W, D), x.dtype),
        grid=(N,),
        in_specs=[x_spec] + w_specs,
        out_specs=pl.BlockSpec((None, H, W, D), lambda n: (n, 0, 0, 0)),
        scratch_shapes=[pltpu.VMEM((H + 2, W + 16, Cm), jnp.float32)],
        compiler_params=pltpu.CompilerParams(dimension_semantics=("parallel",)),
    )(x, *weights)


# ----------------------------------------------------------------------------
# Stride-2 block: padded input arrives pre-split by row/col parity so every
# stride-2 depthwise tap is a static window load.  dw+SE+pw fused in-kernel.
# ----------------------------------------------------------------------------
def _block_s2_kernel(OH, OW, *refs):
    act_refs = refs[:4]                                     # (ee, eo, oe, oo)
    (wdw_ref, bdw_ref, w1_ref, b1_ref, w2_ref, b2_ref,
     wpw_ref, bpw_ref) = refs[4:12]
    o_ref = refs[12]

    wdw = wdw_ref[...]                                      # (9, C)
    offs = [(di, dj) for di in range(3) for dj in range(3)]
    acc = None
    for t, (di, dj) in enumerate(offs):
        tap = act_refs[(di % 2) * 2 + (dj % 2)][di // 2:di // 2 + OH,
                                                dj // 2:dj // 2 + OW, :]
        term = tap * wdw[t:t + 1, :]
        acc = term if acc is None else acc + term
    y = jnp.maximum(acc + bdw_ref[...], 0.0)                # (OH, OW, C)

    o_ref[...] = _se_pw_tail(y, None, w1_ref[...], b1_ref[...], w2_ref[...],
                             b2_ref[...], wpw_ref[...], bpw_ref[...],
                             1.0 / (OH * OW), o_ref.dtype)


def fused_block_s2(x_nhwc, blk):
    N, H, W, _ = x_nhwc.shape
    OH = (H + 2 - 3) // 2 + 1
    OW = (W + 2 - 3) // 2 + 1
    D = blk["pw_w"].shape[1]
    assert not blk["has_residual"]                          # impossible at stride 2

    xp = jnp.pad(x_nhwc, ((0, 0), (1, 1), (1, 1), (0, 0)))
    acts = [xp[:, 0::2, 0::2, :], xp[:, 0::2, 1::2, :],
            xp[:, 1::2, 0::2, :], xp[:, 1::2, 1::2, :]]
    act_specs = [pl.BlockSpec((None,) + tuple(a.shape[1:]), lambda n: (n, 0, 0, 0))
                 for a in acts]
    weights = [blk["dw_w"], blk["dw_b"], blk["se1_w"], blk["se1_b"],
               blk["se2_w"], blk["se2_b"], blk["pw_w"], blk["pw_b"]]
    w_specs = [pl.BlockSpec(tuple(w.shape), lambda n, nd=w.ndim: (0,) * nd)
               for w in weights]

    return pl.pallas_call(
        functools.partial(_block_s2_kernel, OH, OW),
        out_shape=jax.ShapeDtypeStruct((N, OH, OW, D), x_nhwc.dtype),
        grid=(N,),
        in_specs=act_specs + w_specs,
        out_specs=pl.BlockSpec((None, OH, OW, D), lambda n: (n, 0, 0, 0)),
        compiler_params=pltpu.CompilerParams(dimension_semantics=("parallel",)),
    )(*(acts + weights))


# ----------------------------------------------------------------------------
# Fused head: global avg pool -> conv_head(1x1) + ReLU -> classifier
# ----------------------------------------------------------------------------
def _head_kernel(inv_hw, x_ref, wh_ref, bh_ref, wc_ref, bc_ref, o_ref):
    x = x_ref[...]                                          # (N, H, W, C)
    pooled = jnp.sum(jnp.sum(x, axis=1), axis=1) * inv_hw   # (N, C)
    feats = jnp.maximum(
        jnp.dot(pooled, wh_ref[...], preferred_element_type=jnp.float32) + bh_ref[...],
        0.0)
    logits = jnp.dot(feats, wc_ref[...], preferred_element_type=jnp.float32) + bc_ref[...]
    o_ref[...] = logits.astype(o_ref.dtype)


def head_forward(x_nhwc, wh, bh, wc, bc):
    N, H, W, _ = x_nhwc.shape
    nc = wc.shape[1]
    args = [x_nhwc, wh, bh, wc, bc]
    specs = [pl.BlockSpec(tuple(a.shape), lambda i, nd=a.ndim: (0,) * nd) for a in args]
    return pl.pallas_call(
        functools.partial(_head_kernel, 1.0 / (H * W)),
        out_shape=jax.ShapeDtypeStruct((N, nc), x_nhwc.dtype),
        grid=(1,),
        in_specs=specs,
        out_specs=pl.BlockSpec((N, nc), lambda i: (0, 0)),
    )(*args)


# ----------------------------------------------------------------------------
# Plain-JAX glue: im2col for the stem, BN folding, layout plumbing
# ----------------------------------------------------------------------------
def _im2col(x_nhwc, kh, kw, stride, padding):
    N, H, W, C = x_nhwc.shape
    xp = jnp.pad(x_nhwc, ((0, 0), (padding, padding), (padding, padding), (0, 0)))
    OH = (H + 2 * padding - kh) // stride + 1
    OW = (W + 2 * padding - kw) // stride + 1
    cols = [xp[:, i:i + stride * OH:stride, j:j + stride * OW:stride, :]
            for i in range(kh) for j in range(kw)]
    patches = jnp.stack(cols, axis=3)                       # (N, OH, OW, KH*KW, C)
    return patches.reshape(N * OH * OW, kh * kw * C), OH, OW


def _bn_fold(w2d, bn, eps=1e-5):
    """Fold inference-mode BN into a conv whose matmul weight is (K, OC)."""
    scale = bn["gamma"] * jax.lax.rsqrt(bn["var"] + eps)            # (OC,)
    return w2d * scale[None, :], (bn["beta"] - bn["mean"] * scale).reshape(1, -1)


def prepare_params(params, eps=1e-5):
    """Fold BN into conv weights and put everything in kernel-ready layouts."""
    P = {}
    OC, IC, KH, KW = params["stem_w"].shape
    stem_w2d = jnp.transpose(params["stem_w"], (2, 3, 1, 0)).reshape(KH * KW * IC, OC)
    P["stem_w"], P["stem_b"] = _bn_fold(stem_w2d, params["bn1"], eps)

    blocks = []
    for blk in params["blocks"]:
        q = {"type": blk["type"], "stride": blk["stride"],
             "has_residual": blk["has_residual"]}
        if blk["type"] == "ir":
            q["exp_w"], q["exp_b"] = _bn_fold(blk["exp_w"][:, :, 0, 0].T,
                                              blk["bn_exp"], eps)
        C = blk["dw_w"].shape[0]
        wdw = jnp.transpose(blk["dw_w"][:, 0], (1, 2, 0)).reshape(9, C)
        q["dw_w"], q["dw_b"] = _bn_fold(wdw, blk["bn_dw"], eps)
        q["se1_w"] = blk["se"]["fc1_w"]
        q["se1_b"] = blk["se"]["fc1_b"].reshape(1, -1)
        q["se2_w"] = blk["se"]["fc2_w"]
        q["se2_b"] = blk["se"]["fc2_b"].reshape(1, -1)
        q["pw_w"], q["pw_b"] = _bn_fold(blk["pw_w"][:, :, 0, 0].T, blk["bn_pw"], eps)
        blocks.append(q)
    P["blocks"] = blocks

    P["head_w"] = params["head_w"]
    P["head_b"] = params["head_b"].reshape(1, -1)
    P["cls_w"] = params["cls_w"]
    P["cls_b"] = params["cls_b"].reshape(1, -1)
    return P


def mobilenet_v3_forward(x_nchw, params):
    """Input: NCHW float32 (PyTorch convention).  Output: (N, num_classes)."""
    fp = prepare_params(params)                              # BN folding (inference mode)
    x = jnp.transpose(x_nchw, (0, 2, 3, 1))                  # NCHW -> NHWC
    N = x.shape[0]

    # ---- forward_features ----
    x2d, OH, OW = _im2col(x, 3, 3, 2, 1)                     # stem 3x3 / s2
    x = matmul_bias_act(x2d, fp["stem_w"], fp["stem_b"], "relu").reshape(N, OH, OW, -1)

    for blk in fp["blocks"]:
        if blk["stride"] == 1:
            # expand + dw + SE + pw + residual fused in ONE kernel (VMEM resident)
            x = fused_block_s1(x, blk)
        else:
            if blk["type"] == "ir":                          # expand 1x1 + folded BN + ReLU
                n, h, w, ci = x.shape
                cm = blk["exp_w"].shape[1]
                x = matmul_bias_act(x.reshape(n * h * w, ci), blk["exp_w"],
                                    blk["exp_b"], "relu").reshape(n, h, w, cm)
            x = fused_block_s2(x, blk)

    # ---- forward_head (drop_rate = 0 -> dropout is a no-op) ----
    return head_forward(x, fp["head_w"], fp["head_b"], fp["cls_w"], fp["cls_b"])


# ----------------------------------------------------------------------------
# Deterministic synthetic parameters (small MobileNetV3-style config)
# ----------------------------------------------------------------------------
def init_params(key):
    dt = jnp.float32
    keys = iter(jax.random.split(key, 128))

    def nrm(shape, scale=0.1):
        return scale * jax.random.normal(next(keys), shape, dtype=dt)

    def bn(c):
        return dict(gamma=1.0 + nrm((c,)), beta=nrm((c,)), mean=nrm((c,)),
                    var=1.0 + 0.1 * jnp.abs(jax.random.normal(next(keys), (c,), dtype=dt)))

    def se(c, rd):
        # SE 1x1 convs stored directly in matmul layout: (C, rd) and (rd, C).
        return dict(fc1_w=nrm((c, rd)), fc1_b=nrm((rd,)),
                    fc2_w=nrm((rd, c)), fc2_b=nrm((c,)))

    return dict(
        stem_w=nrm((16, 3, 3, 3)),            # (OC, IC, KH, KW), stride 2
        bn1=bn(16),
        blocks=[
            # DepthwiseSeparable: 16 -> 16, stride 1, SE 0.25, residual
            dict(type="ds", stride=1, has_residual=True,
                 dw_w=nrm((16, 1, 3, 3)), bn_dw=bn(16), se=se(16, 4),
                 pw_w=nrm((16, 16, 1, 1)), bn_pw=bn(16)),
            # InvertedResidual: 16 -> 24, expand 48, stride 2, SE, no residual
            dict(type="ir", stride=2, has_residual=False,
                 exp_w=nrm((48, 16, 1, 1)), bn_exp=bn(48),
                 dw_w=nrm((48, 1, 3, 3)), bn_dw=bn(48), se=se(48, 12),
                 pw_w=nrm((24, 48, 1, 1)), bn_pw=bn(24)),
            # InvertedResidual: 24 -> 24, expand 72, stride 1, SE, residual
            dict(type="ir", stride=1, has_residual=True,
                 exp_w=nrm((72, 24, 1, 1)), bn_exp=bn(72),
                 dw_w=nrm((72, 1, 3, 3)), bn_dw=bn(72), se=se(72, 18),
                 pw_w=nrm((24, 72, 1, 1)), bn_pw=bn(24)),
        ],
        head_w=nrm((24, 64)),                 # conv_head 1x1 (head_chs=24 -> num_features=64)
        head_b=nrm((64,)),
        cls_w=nrm((64, 10)),                  # classifier (num_features=64 -> num_classes=10)
        cls_b=nrm((10,)),
    )


if __name__ == "__main__":
    key = jax.random.PRNGKey(0)
    pkey, xkey = jax.random.split(key)
    params = init_params(pkey)
    x = jax.random.normal(xkey, (2, 3, 16, 16), dtype=jnp.float32)  # NCHW like PyTorch

    # Params are closed over (they contain static config like strides) so jit
    # only traces the array input.
    fwd = jax.jit(lambda inp: mobilenet_v3_forward(inp, params))
    out = jax.block_until_ready(fwd(x))
    assert out.shape == (2, 10), out.shape
    assert bool(jnp.all(jnp.isfinite(out)))
    print("KERNEL_OK")
</pallas_src>

<mosaic_0001>
module attributes {stable_mosaic.version = 11 : i64} {
  func.func @_matmul_kernel(%arg0: i32, %arg1: memref<128x27xf32, #tpu.memory_space<vmem>>, %arg2: memref<27x16xf32, #tpu.memory_space<vmem>>, %arg3: memref<1x16xf32, #tpu.memory_space<vmem>>, %arg4: memref<128x16xf32, #tpu.memory_space<vmem>>) attributes {dimension_semantics = [#tpu.dimension_semantics<parallel>], iteration_bounds = array<i64: 1>, scalar_prefetch = 0 : i64, scratch_operands = 0 : i64, tpu.core_type = #tpu.core_type<tc>, window_params = [{transform_indices = @transform_0, window_bounds = array<i64: 128, 27>}, {pipeline_mode = #tpu.pipeline_mode<synchronous>, transform_indices = @transform_1, window_bounds = array<i64: 27, 16>}, {pipeline_mode = #tpu.pipeline_mode<synchronous>, transform_indices = @transform_2, window_bounds = array<i64: 1, 16>}, {transform_indices = @transform_3, window_bounds = array<i64: 128, 16>}]} {
    %c0 = arith.constant 0 : index
    %c0_0 = arith.constant 0 : index
    %0 = vector.load %arg1[%c0, %c0_0] : memref<128x27xf32, #tpu.memory_space<vmem>>, vector<128x27xf32>
    %c0_1 = arith.constant 0 : index
    %c0_2 = arith.constant 0 : index
    %1 = vector.load %arg2[%c0_1, %c0_2] : memref<27x16xf32, #tpu.memory_space<vmem>>, vector<27x16xf32>
    %cst = arith.constant dense<0.000000e+00> : vector<128x16xf32>
    %2 = tpu.matmul %0, %1, %cst {dimension_numbers = #tpu.dot_dimension_numbers<[1], [0], [0], [1], [0, 0, 1, 1], [], []>} : vector<128x27xf32>, vector<27x16xf32>, vector<128x16xf32> -> vector<128x16xf32>
    %c0_3 = arith.constant 0 : index
    %c0_4 = arith.constant 0 : index
    %3 = vector.load %arg3[%c0_3, %c0_4] : memref<1x16xf32, #tpu.memory_space<vmem>>, vector<1x16xf32>
    %4 = vector.broadcast %3 : vector<1x16xf32> to vector<128x16xf32>
    %5 = arith.addf %2, %4 : vector<128x16xf32>
    %cst_5 = arith.constant 0.000000e+00 : f32
    %6 = vector.broadcast %cst_5 : f32 to vector<128x16xf32>
    %7 = arith.maximumf %5, %6 : vector<128x16xf32>
    %c0_6 = arith.constant 0 : index
    %c0_7 = arith.constant 0 : index
    %8 = vector.load %arg4[%c0_6, %c0_7] : memref<128x16xf32, #tpu.memory_space<vmem>>, vector<128x16xf32>
    tpu.vector_store %arg4[%c0_6, %c0_7], %7 {strides = array<i32>} : memref<128x16xf32, #tpu.memory_space<vmem>>, vector<128x16xf32>,
    return
  }
  func.func @transform_0(%arg0: i32) -> (i32, i32) {
    %c0_i32 = arith.constant 0 : i32
    %c0_i32_0 = arith.constant 0 : i32
    return %arg0, %c0_i32 : i32, i32
  }
  func.func @transform_1(%arg0: i32) -> (i32, i32) {
    %c0_i32 = arith.constant 0 : i32
    %c0_i32_0 = arith.constant 0 : i32
    %c0_i32_1 = arith.constant 0 : i32
    return %c0_i32, %c0_i32_0 : i32, i32
  }
  func.func @transform_2(%arg0: i32) -> (i32, i32) {
    %c0_i32 = arith.constant 0 : i32
    %c0_i32_0 = arith.constant 0 : i32
    %c0_i32_1 = arith.constant 0 : i32
    return %c0_i32, %c0_i32_0 : i32, i32
  }
  func.func @transform_3(%arg0: i32) -> (i32, i32) {
    %c0_i32 = arith.constant 0 : i32
    %c0_i32_0 = arith.constant 0 : i32
    return %arg0, %c0_i32 : i32, i32
  }
}

module attributes {stable_mosaic.version = 11 : i64} {
  func.func @_matmul_kernel(%arg0: i32, %arg1: memref<128x16xf32, #tpu.memory_space<vmem>>, %arg2: memref<16x48xf32, #tpu.memory_space<vmem>>, %arg3: memref<1x48xf32, #tpu.memory_space<vmem>>, %arg4: memref<128x48xf32, #tpu.memory_space<vmem>>) attributes {dimension_semantics = [#tpu.dimension_semantics<parallel>], iteration_bounds = array<i64: 1>, scalar_prefetch = 0 : i64, scratch_operands = 0 : i64, tpu.core_type = #tpu.core_type<tc>, window_params = [{transform_indices = @transform_0, window_bounds = array<i64: 128, 16>}, {pipeline_mode = #tpu.pipeline_mode<synchronous>, transform_indices = @transform_1, window_bounds = array<i64: 16, 48>}, {pipeline_mode = #tpu.pipeline_mode<synchronous>, transform_indices = @transform_2, window_bounds = array<i64: 1, 48>}, {transform_indices = @transform_3, window_bounds = array<i64: 128, 48>}]} {
    %c0 = arith.constant 0 : index
    %c0_0 = arith.constant 0 : index
    %0 = vector.load %arg1[%c0, %c0_0] : memref<128x16xf32, #tpu.memory_space<vmem>>, vector<128x16xf32>
    %c0_1 = arith.constant 0 : index
    %c0_2 = arith.constant 0 : index
    %1 = vector.load %arg2[%c0_1, %c0_2] : memref<16x48xf32, #tpu.memory_space<vmem>>, vector<16x48xf32>
    %cst = arith.constant dense<0.000000e+00> : vector<128x48xf32>
    %2 = tpu.matmul %0, %1, %cst {dimension_numbers = #tpu.dot_dimension_numbers<[1], [0], [0], [1], [0, 0, 1, 1], [], []>} : vector<128x16xf32>, vector<16x48xf32>, vector<128x48xf32> -> vector<128x48xf32>
    %c0_3 = arith.constant 0 : index
    %c0_4 = arith.constant 0 : index
    %3 = vector.load %arg3[%c0_3, %c0_4] : memref<1x48xf32, #tpu.memory_space<vmem>>, vector<1x48xf32>
    %4 = vector.broadcast %3 : vector<1x48xf32> to vector<128x48xf32>
    %5 = arith.addf %2, %4 : vector<128x48xf32>
    %cst_5 = arith.constant 0.000000e+00 : f32
    %6 = vector.broadcast %cst_5 : f32 to vector<128x48xf32>
    %7 = arith.maximumf %5, %6 : vector<128x48xf32>
    %c0_6 = arith.constant 0 : index
    %c0_7 = arith.constant 0 : index
    %8 = vector.load %arg4[%c0_6, %c0_7] : memref<128x48xf32, #tpu.memory_space<vmem>>, vector<128x48xf32>
    tpu.vector_store %arg4[%c0_6, %c0_7], %7 {strides = array<i32>} : memref<128x48xf32, #tpu.memory_space<vmem>>, vector<128x48xf32>,
    return
  }
  func.func @transform_0(%arg0: i32) -> (i32, i32) {
    %c0_i32 = arith.constant 0 : i32
    %c0_i32_0 = arith.constant 0 : i32
    return %arg0, %c0_i32 : i32, i32
  }
  func.func @transform_1(%arg0: i32) -> (i32, i32) {
    %c0_i32 = arith.constant 0 : i32
    %c0_i32_0 = arith.constant 0 : i32
    %c0_i32_1 = arith.constant 0 : i32
    return %c0_i32, %c0_i32_0 : i32, i32
  }
  func.func @transform_2(%arg0: i32) -> (i32, i32) {
    %c0_i32 = arith.constant 0 : i32
    %c0_i32_0 = arith.constant 0 : i32
    %c0_i32_1 = arith.constant 0 : i32
    return %c0_i32, %c0_i32_0 : i32, i32
  }
  func.func @transform_3(%arg0: i32) -> (i32, i32) {
    %c0_i32 = arith.constant 0 : i32
    %c0_i32_0 = arith.constant 0 : i32
    return %arg0, %c0_i32 : i32, i32
  }
}

module attributes {stable_mosaic.version = 11 : i64} {
  func.func @_block_s1_kernel(%arg0: i32, %arg1: memref<1x8x8x16xf32, #tpu.memory_space<vmem>>, %arg2: memref<9x16xf32, #tpu.memory_space<vmem>>, %arg3: memref<1x16xf32, #tpu.memory_space<vmem>>, %arg4: memref<16x4xf32, #tpu.memory_space<vmem>>, %arg5: memref<1x4xf32, #tpu.memory_space<vmem>>, %arg6: memref<4x16xf32, #tpu.memory_space<vmem>>, %arg7: memref<1x16xf32, #tpu.memory_space<vmem>>, %arg8: memref<16x16xf32, #tpu.memory_space<vmem>>, %arg9: memref<1x16xf32, #tpu.memory_space<vmem>>, %arg10: memref<1x8x8x16xf32, #tpu.memory_space<vmem>>, %arg11: memref<10x24x16xf32, #tpu.memory_space<vmem>>) attributes {dimension_semantics = [#tpu.dimension_semantics<parallel>], iteration_bounds = array<i64: 2>, scalar_prefetch = 0 : i64, scratch_operands = 1 : i64, tpu.core_type = #tpu.core_type<tc>, window_params = [{transform_indices = @transform_0, window_bounds = array<i64: 1, 8, 8, 16>}, {pipeline_mode = #tpu.pipeline_mode<synchronous>, transform_indices = @transform_1, window_bounds = array<i64: 9, 16>}, {pipeline_mode = #tpu.pipeline_mode<synchronous>, transform_indices = @transform_2, window_bounds = array<i64: 1, 16>}, {pipeline_mode = #tpu.pipeline_mode<synchronous>, transform_indices = @transform_3, window_bounds = array<i64: 16, 4>}, {pipeline_mode = #tpu.pipeline_mode<synchronous>, transform_indices = @transform_4, window_bounds = array<i64: 1, 4>}, {pipeline_mode = #tpu.pipeline_mode<synchronous>, transform_indices = @transform_5, window_bounds = array<i64: 4, 16>}, {pipeline_mode = #tpu.pipeline_mode<synchronous>, transform_indices = @transform_6, window_bounds = array<i64: 1, 16>}, {pipeline_mode = #tpu.pipeline_mode<synchronous>, transform_indices = @transform_7, window_bounds = array<i64: 16, 16>}, {pipeline_mode = #tpu.pipeline_mode<synchronous>, transform_indices = @transform_8, window_bounds = array<i64: 1, 16>}, {transform_indices = @transform_9, window_bounds = array<i64: 1, 8, 8, 16>}]} {
    %c0 = arith.constant 0 : index
    %c0_0 = arith.constant 0 : index
    %c0_1 = arith.constant 0 : index
    %c0_2 = arith.constant 0 : index
    %0 = vector.load %arg1[%c0, %c0_0, %c0_1, %c0_2] : memref<1x8x8x16xf32, #tpu.memory_space<vmem>>, vector<1x8x8x16xf32>
    %1 = vector.shape_cast %0 : vector<1x8x8x16xf32> to vector<8x8x16xf32>
    %cst = arith.constant 0.000000e+00 : f32
    %2 = vector.broadcast %cst : f32 to vector<10x24x16xf32>
    %c0_3 = arith.constant 0 : index
    %c0_4 = arith.constant 0 : index
    %c0_5 = arith.constant 0 : index
    %3 = vector.load %arg11[%c0_3, %c0_4, %c0_5] : memref<10x24x16xf32, #tpu.memory_space<vmem>>, vector<10x24x16xf32>
    tpu.vector_store %arg11[%c0_3, %c0_4, %c0_5], %2 {strides = array<i32>} : memref<10x24x16xf32, #tpu.memory_space<vmem>>, vector<10x24x16xf32>,
    %c1 = arith.constant 1 : index
    %c8 = arith.constant 8 : index
    %c0_6 = arith.constant 0 : index
    %4 = vector.load %arg11[%c1, %c8, %c0_6] : memref<10x24x16xf32, #tpu.memory_space<vmem>>, vector<8x8x16xf32>
    tpu.vector_store %arg11[%c1, %c8, %c0_6], %1 {strides = array<i32>} : memref<10x24x16xf32, #tpu.memory_space<vmem>>, vector<8x8x16xf32>,
    %c0_7 = arith.constant 0 : index
    %c0_8 = arith.constant 0 : index
    %5 = vector.load %arg2[%c0_7, %c0_8] : memref<9x16xf32, #tpu.memory_space<vmem>>, vector<9x16xf32>
    %c0_9 = arith.constant 0 : index
    %c7 = arith.constant 7 : index
    %c0_10 = arith.constant 0 : index
    %6 = vector.load %arg11[%c0_9, %c7, %c0_10] : memref<10x24x16xf32, #tpu.memory_space<vmem>>, vector<8x8x16xf32>
    %7 = vector.extract_strided_slice %5 {offsets = [0, 0], sizes = [1, 16], strides = [1, 1]} : vector<9x16xf32> to vector<1x16xf32>
    %8 = vector.shape_cast %7 : vector<1x16xf32> to vector<1x1x16xf32>
    %9 = vector.broadcast %8 : vector<1x1x16xf32> to vector<8x8x16xf32>
    %10 = arith.mulf %6, %9 : vector<8x8x16xf32>
    %c0_11 = arith.constant 0 : index
    %c8_12 = arith.constant 8 : index
    %c0_13 = arith.constant 0 : index
    %11 = vector.load %arg11[%c0_11, %c8_12, %c0_13] : memref<10x24x16xf32, #tpu.memory_space<vmem>>, vector<8x8x16xf32>
    %12 = vector.extract_strided_slice %5 {offsets = [1, 0], sizes = [1, 16], strides = [1, 1]} : vector<9x16xf32> to vector<1x16xf32>
    %13 = vector.shape_cast %12 : vector<1x16xf32> to vector<1x1x16xf32>
    %14 = vector.broadcast %13 : vector<1x1x16xf32> to vector<8x8x16xf32>
    %15 = arith.mulf %11, %14 : vector<8x8x16xf32>
    %16 = arith.addf %10, %15 : vector<8x8x16xf32>
    %c0_14 = arith.constant 0 : index
    %c9 = arith.constant 9 : index
    %c0_15 = arith.constant 0 : index
    %17 = vector.load %arg11[%c0_14, %c9, %c0_15] : memref<10x24x16xf32, #tpu.memory_space<vmem>>, vector<8x8x16xf32>
    %18 = vector.extract_strided_slice %5 {offsets = [2, 0], sizes = [1, 16], strides = [1, 1]} : vector<9x16xf32> to vector<1x16xf32>
    %19 = vector.shape_cast %18 : vector<1x16xf32> to vector<1x1x16xf32>
    %20 = vector.broadcast %19 : vector<1x1x16xf32> to vector<8x8x16xf32>
    %21 = arith.mulf %17, %20 : vector<8x8x16xf32>
    %22 = arith.addf %16, %21 : vector<8x8x16xf32>
    %c1_16 = arith.constant 1 : index
    %c7_17 = arith.constant 7 : index
    %c0_18 = arith.constant 0 : index
    %23 = vector.load %arg11[%c1_16, %c7_17, %c0_18] : memref<10x24x16xf32, #tpu.memory_space<vmem>>, vector<8x8x16xf32>
    %24 = vector.extract_strided_slice %5 {offsets = [3, 0], sizes = [1, 16], strides = [1, 1]} : vector<9x16xf32> to vector<1x16xf32>
    %25 = vector.shape_cast %24 : vector<1x16xf32> to vector<1x1x16xf32>
    %26 = vector.broadcast %25 : vector<1x1x16xf32> to vector<8x8x16xf32>
    %27 = arith.mulf %23, %26 : vector<8x8x16xf32>
    %28 = arith.addf %22, %27 : vector<8x8x16xf32>
    %c1_19 = arith.constant 1 : index
    %c8_20 = arith.constant 8 : index
    %c0_21 = arith.constant 0 : index
    %29 = vector.load %arg11[%c1_19, %c8_20, %c0_21] : memref<10x24x16xf32, #tpu.memory_space<vmem>>, vector<8x8x16xf32>
    %30 = vector.extract_strided_slice %5 {offsets = [4, 0], sizes = [1, 16], strides = [1, 1]} : vector<9x16xf32> to vector<1x16xf32>
    %31 = vector.shape_cast %30 : vector<1x16xf32> to vector<1x1x16xf32>
    %32 = vector.broadcast %31 : vector<1x1x16xf32> to vector<8x8x16xf32>
    %33 = arith.mulf %29, %32 : vector<8x8x16xf32>
    %34 = arith.addf %28, %33 : vector<8x8x16xf32>
    %c1_22 = arith.constant 1 : index
    %c9_23 = arith.constant 9 : index
    %c0_24 = arith.constant 0 : index
    %35 = vector.load %arg11[%c1_22, %c9_23, %c0_24] : memref<10x24x16xf32, #tpu.memory_space<vmem>>, vector<8x8x16xf32>
    %36 = vector.extract_strided_slice %5 {offsets = [5, 0], sizes = [1, 16], strides = [1, 1]} : vector<9x16xf32> to vector<1x16xf32>
    %37 = vector.shape_cast %36 : vector<1x16xf32> to vector<1x1x16xf32>
    %38 = vector.broadcast %37 : vector<1x1x16xf32> to vector<8x8x16xf32>
    %39 = arith.mulf %35, %38 : vector<8x8x16xf32>
    %40 = arith.addf %34, %39 : vector<8x8x16xf32>
    %c2 = arith.constant 2 : index
    %c7_25 = arith.constant 7 : index
    %c0_26 = arith.constant 0 : index
    %41 = vector.load %arg11[%c2, %c7_25, %c0_26] : memref<10x24x16xf32, #tpu.memory_space<vmem>>, vector<8x8x16xf32>
    %42 = vector.extract_strided_slice %5 {offsets = [6, 0], sizes = [1, 16], strides = [1, 1]} : vector<9x16xf32> to vector<1x16xf32>
    %43 = vector.shape_cast %42 : vector<1x16xf32> to vector<1x1x16xf32>
    %44 = vector.broadcast %43 : vector<1x1x16xf32> to vector<8x8x16xf32>
    %45 = arith.mulf %41, %44 : vector<8x8x16xf32>
    %46 = arith.addf %40, %45 : vector<8x8x16xf32>
    %c2_27 = arith.constant 2 : index
    %c8_28 = arith.constant 8 : index
    %c0_29 = arith.constant 0 : index
    %47 = vector.load %arg11[%c2_27, %c8_28, %c0_29] : memref<10x24x16xf32, #tpu.memory_space<vmem>>, vector<8x8x16xf32>
    %48 = vector.extract_strided_slice %5 {offsets = [7, 0], sizes = [1, 16], strides = [1, 1]} : vector<9x16xf32> to vector<1x16xf32>
    %49 = vector.shape_cast %48 : vector<1x16xf32> to vector<1x1x16xf32>
    %50 = vector.broadcast %49 : vector<1x1x16xf32> to vector<8x8x16xf32>
    %51 = arith.mulf %47, %50 : vector<8x8x16xf32>
    %52 = arith.addf %46, %51 : vector<8x8x16xf32>
    %c2_30 = arith.constant 2 : index
    %c9_31 = arith.constant 9 : index
    %c0_32 = arith.constant 0 : index
    %53 = vector.load %arg11[%c2_30, %c9_31, %c0_32] : memref<10x24x16xf32, #tpu.memory_space<vmem>>, vector<8x8x16xf32>
    %54 = vector.extract_strided_slice %5 {offsets = [8, 0], sizes = [1, 16], strides = [1, 1]} : vector<9x16xf32> to vector<1x16xf32>
    %55 = vector.shape_cast %54 : vector<1x16xf32> to vector<1x1x16xf32>
    %56 = vector.broadcast %55 : vector<1x1x16xf32> to vector<8x8x16xf32>
    %57 = arith.mulf %53, %56 : vector<8x8x16xf32>
    %58 = arith.addf %52, %57 : vector<8x8x16xf32>
    %c0_33 = arith.constant 0 : index
    %c0_34 = arith.constant 0 : index
    %59 = vector.load %arg3[%c0_33, %c0_34] : memref<1x16xf32, #tpu.memory_space<vmem>>, vector<1x16xf32>
    %60 = vector.shape_cast %59 : vector<1x16xf32> to vector<1x1x16xf32>
    %61 = vector.broadcast %60 : vector<1x1x16xf32> to vector<8x8x16xf32>
    %62 = arith.addf %58, %61 : vector<8x8x16xf32>
    %cst_35 = arith.constant 0.000000e+00 : f32
    %63 = vector.broadcast %cst_35 : f32 to vector<8x8x16xf32>
    %64 = arith.maximumf %62, %63 : vector<8x8x16xf32>
    %c0_36 = arith.constant 0 : index
    %c0_37 = arith.constant 0 : index
    %65 = vector.load %arg4[%c0_36, %c0_37] : memref<16x4xf32, #tpu.memory_space<vmem>>, vector<16x4xf32>
    %c0_38 = arith.constant 0 : index
    %c0_39 = arith.constant 0 : index
    %66 = vector.load %arg5[%c0_38, %c0_39] : memref<1x4xf32, #tpu.memory_space<vmem>>, vector<1x4xf32>
    %c0_40 = arith.constant 0 : index
    %c0_41 = arith.constant 0 : index
    %67 = vector.load %arg6[%c0_40, %c0_41] : memref<4x16xf32, #tpu.memory_space<vmem>>, vector<4x16xf32>
    %c0_42 = arith.constant 0 : index
    %c0_43 = arith.constant 0 : index
    %68 = vector.load %arg7[%c0_42, %c0_43] : memref<1x16xf32, #tpu.memory_space<vmem>>, vector<1x16xf32>
    %c0_44 = arith.constant 0 : index
    %c0_45 = arith.constant 0 : index
    %69 = vector.load %arg8[%c0_44, %c0_45] : memref<16x16xf32, #tpu.memory_space<vmem>>, vector<16x16xf32>
    %c0_46 = arith.constant 0 : index
    %c0_47 = arith.constant 0 : index
    %70 = vector.load %arg9[%c0_46, %c0_47] : memref<1x16xf32, #tpu.memory_space<vmem>>, vector<1x16xf32>
    %cst_48 = arith.constant dense<0.000000e+00> : vector<8x16xf32>
    %71 = vector.multi_reduction <add>, %64, %cst_48 [0] : vector<8x8x16xf32> to vector<8x16xf32>
    %cst_49 = arith.constant dense<0.000000e+00> : vector<16xf32>
    %72 = vector.multi_reduction <add>, %71, %cst_49 [0] : vector<8x16xf32> to vector<16xf32>
    %73 = vector.shape_cast %72 : vector<16xf32> to vector<1x16xf32>
    %cst_50 = arith.constant 1.562500e-02 : f32
    %74 = vector.broadcast %cst_50 : f32 to vector<1x16xf32>
    %75 = arith.mulf %73, %74 : vector<1x16xf32>
    %cst_51 = arith.constant dense<0.000000e+00> : vector<1x4xf32>
    %76 = tpu.matmul %75, %65, %cst_51 {dimension_numbers = #tpu.dot_dimension_numbers<[1], [0], [0], [1], [0, 0, 1, 1], [], []>} : vector<1x16xf32>, vector<16x4xf32>, vector<1x4xf32> -> vector<1x4xf32>
    %77 = arith.addf %76, %66 : vector<1x4xf32>
    %cst_52 = arith.constant 0.000000e+00 : f32
    %78 = vector.broadcast %cst_52 : f32 to vector<1x4xf32>
    %79 = arith.maximumf %77, %78 : vector<1x4xf32>
    %cst_53 = arith.constant dense<0.000000e+00> : vector<1x16xf32>
    %80 = tpu.matmul %79, %67, %cst_53 {dimension_numbers = #tpu.dot_dimension_numbers<[1], [0], [0], [1], [0, 0, 1, 1], [], []>} : vector<1x4xf32>, vector<4x16xf32>, vector<1x16xf32> -> vector<1x16xf32>
    %81 = arith.addf %80, %68 : vector<1x16xf32>
    %82 = arith.negf %81 : vector<1x16xf32>
    %83 = math.exp %82 : vector<1x16xf32>
    %cst_54 = arith.constant 1.000000e+00 : f32
    %84 = vector.broadcast %cst_54 : f32 to vector<1x16xf32>
    %85 = arith.addf %84, %83 : vector<1x16xf32>
    %86 = arith.divf %84, %85 : vector<1x16xf32>
    %87 = vector.shape_cast %86 : vector<1x16xf32> to vector<1x1x16xf32>
    %88 = vector.broadcast %87 : vector<1x1x16xf32> to vector<8x8x16xf32>
    %89 = arith.mulf %64, %88 : vector<8x8x16xf32>
    %90 = vector.shape_cast %69 : vector<16x16xf32> to vector<1x16x16xf32>
    %91 = vector.shape_cast %90 : vector<1x16x16xf32> to vector<1x16x16xf32>
    %92 = vector.broadcast %91 : vector<1x16x16xf32> to vector<8x16x16xf32>
    %cst_55 = arith.constant dense<0.000000e+00> : vector<8x8x16xf32>
    %93 = tpu.matmul %89, %92, %cst_55 {dimension_numbers = #tpu.dot_dimension_numbers<[2], [1], [1], [2], [0, 0, 0, 1, 1, 2], [0], [0]>} : vector<8x8x16xf32>, vector<8x16x16xf32>, vector<8x8x16xf32> -> vector<8x8x16xf32>
    %94 = vector.shape_cast %70 : vector<1x16xf32> to vector<1x1x16xf32>
    %95 = vector.broadcast %94 : vector<1x1x16xf32> to vector<8x8x16xf32>
    %96 = arith.addf %93, %95 : vector<8x8x16xf32>
    %97 = arith.addf %96, %1 : vector<8x8x16xf32>
    %c0_56 = arith.constant 0 : index
    %c0_57 = arith.constant 0 : index
    %c0_58 = arith.constant 0 : index
    %c0_59 = arith.constant 0 : index
    %98 = vector.load %arg10[%c0_56, %c0_57, %c0_58, %c0_59] : memref<1x8x8x16xf32, #tpu.memory_space<vmem>>, vector<1x8x8x16xf32>
    %99 = vector.shape_cast %98 : vector<1x8x8x16xf32> to vector<8x8x16xf32>
    %100 = vector.shape_cast %97 : vector<8x8x16xf32> to vector<1x8x8x16xf32>
    tpu.vector_store %arg10[%c0_56, %c0_57, %c0_58, %c0_59], %100 {strides = array<i32>} : memref<1x8x8x16xf32, #tpu.memory_space<vmem>>, vector<1x8x8x16xf32>,
    return
  }
  func.func @transform_0(%arg0: i32) -> (i32, i32, i32, i32) {
    %c0_i32 = arith.constant 0 : i32
    %c0_i32_0 = arith.constant 0 : i32
    %c0_i32_1 = arith.constant 0 : i32
    %c0_i32_2 = arith.constant 0 : i32
    return %arg0, %c0_i32, %c0_i32_0, %c0_i32_1 : i32, i32, i32, i32
  }
  func.func @transform_1(%arg0: i32) -> (i32, i32) {
    %c0_i32 = arith.constant 0 : i32
    %c0_i32_0 = arith.constant 0 : i32
    %c0_i32_1 = arith.constant 0 : i32
    return %c0_i32, %c0_i32_0 : i32, i32
  }
  func.func @transform_2(%arg0: i32) -> (i32, i32) {
    %c0_i32 = arith.constant 0 : i32
    %c0_i32_0 = arith.constant 0 : i32
    %c0_i32_1 = arith.constant 0 : i32
    return %c0_i32, %c0_i32_0 : i32, i32
  }
  func.func @transform_3(%arg0: i32) -> (i32, i32) {
    %c0_i32 = arith.constant 0 : i32
    %c0_i32_0 = arith.constant 0 : i32
    %c0_i32_1 = arith.constant 0 : i32
    return %c0_i32, %c0_i32_0 : i32, i32
  }
  func.func @transform_4(%arg0: i32) -> (i32, i32) {
    %c0_i32 = arith.constant 0 : i32
    %c0_i32_0 = arith.constant 0 : i32
    %c0_i32_1 = arith.constant 0 : i32
    return %c0_i32, %c0_i32_0 : i32, i32
  }
  func.func @transform_5(%arg0: i32) -> (i32, i32) {
    %c0_i32 = arith.constant 0 : i32
    %c0_i32_0 = arith.constant 0 : i32
    %c0_i32_1 = arith.constant 0 : i32
    return %c0_i32, %c0_i32_0 : i32, i32
  }
  func.func @transform_6(%arg0: i32) -> (i32, i32) {
    %c0_i32 = arith.constant 0 : i32
    %c0_i32_0 = arith.constant 0 : i32
    %c0_i32_1 = arith.constant 0 : i32
    return %c0_i32, %c0_i32_0 : i32, i32
  }
  func.func @transform_7(%arg0: i32) -> (i32, i32) {
    %c0_i32 = arith.constant 0 : i32
    %c0_i32_0 = arith.constant 0 : i32
    %c0_i32_1 = arith.constant 0 : i32
    return %c0_i32, %c0_i32_0 : i32, i32
  }
  func.func @transform_8(%arg0: i32) -> (i32, i32) {
    %c0_i32 = arith.constant 0 : i32
    %c0_i32_0 = arith.constant 0 : i32
    %c0_i32_1 = arith.constant 0 : i32
    return %c0_i32, %c0_i32_0 : i32, i32
  }
  func.func @transform_9(%arg0: i32) -> (i32, i32, i32, i32) {
    %c0_i32 = arith.constant 0 : i32
    %c0_i32_0 = arith.constant 0 : i32
    %c0_i32_1 = arith.constant 0 : i32
    %c0_i32_2 = arith.constant 0 : i32
    return %arg0, %c0_i32, %c0_i32_0, %c0_i32_1 : i32, i32, i32, i32
  }
}

module attributes {stable_mosaic.version = 11 : i64} {
  func.func @_block_s2_kernel(%arg0: i32, %arg1: memref<1x5x5x48xf32, #tpu.memory_space<vmem>>, %arg2: memref<1x5x5x48xf32, #tpu.memory_space<vmem>>, %arg3: memref<1x5x5x48xf32, #tpu.memory_space<vmem>>, %arg4: memref<1x5x5x48xf32, #tpu.memory_space<vmem>>, %arg5: memref<9x48xf32, #tpu.memory_space<vmem>>, %arg6: memref<1x48xf32, #tpu.memory_space<vmem>>, %arg7: memref<48x12xf32, #tpu.memory_space<vmem>>, %arg8: memref<1x12xf32, #tpu.memory_space<vmem>>, %arg9: memref<12x48xf32, #tpu.memory_space<vmem>>, %arg10: memref<1x48xf32, #tpu.memory_space<vmem>>, %arg11: memref<48x24xf32, #tpu.memory_space<vmem>>, %arg12: memref<1x24xf32, #tpu.memory_space<vmem>>, %arg13: memref<1x4x4x24xf32, #tpu.memory_space<vmem>>) attributes {dimension_semantics = [#tpu.dimension_semantics<parallel>], iteration_bounds = array<i64: 2>, scalar_prefetch = 0 : i64, scratch_operands = 0 : i64, tpu.core_type = #tpu.core_type<tc>, window_params = [{transform_indices = @transform_0, window_bounds = array<i64: 1, 5, 5, 48>}, {transform_indices = @transform_1, window_bounds = array<i64: 1, 5, 5, 48>}, {transform_indices = @transform_2, window_bounds = array<i64: 1, 5, 5, 48>}, {transform_indices = @transform_3, window_bounds = array<i64: 1, 5, 5, 48>}, {pipeline_mode = #tpu.pipeline_mode<synchronous>, transform_indices = @transform_4, window_bounds = array<i64: 9, 48>}, {pipeline_mode = #tpu.pipeline_mode<synchronous>, transform_indices = @transform_5, window_bounds = array<i64: 1, 48>}, {pipeline_mode = #tpu.pipeline_mode<synchronous>, transform_indices = @transform_6, window_bounds = array<i64: 48, 12>}, {pipeline_mode = #tpu.pipeline_mode<synchronous>, transform_indices = @transform_7, window_bounds = array<i64: 1, 12>}, {pipeline_mode = #tpu.pipeline_mode<synchronous>, transform_indices = @transform_8, window_bounds = array<i64: 12, 48>}, {pipeline_mode = #tpu.pipeline_mode<synchronous>, transform_indices = @transform_9, window_bounds = array<i64: 1, 48>}, {pipeline_mode = #tpu.pipeline_mode<synchronous>, transform_indices = @transform_10, window_bounds = array<i64: 48, 24>}, {pipeline_mode = #tpu.pipeline_mode<synchronous>, transform_indices = @transform_11, window_bounds = array<i64: 1, 24>}, {transform_indices = @transform_12, window_bounds = array<i64: 1, 4, 4, 24>}]} {
    %c0 = arith.constant 0 : index
    %c0_0 = arith.constant 0 : index
    %0 = vector.load %arg5[%c0, %c0_0] : memref<9x48xf32, #tpu.memory_space<vmem>>, vector<9x48xf32>
    %c0_1 = arith.constant 0 : index
    %c0_2 = arith.constant 0 : index
    %c0_3 = arith.constant 0 : index
    %c0_4 = arith.constant 0 : index
    %1 = vector.load %arg1[%c0_1, %c0_2, %c0_3, %c0_4] : memref<1x5x5x48xf32, #tpu.memory_space<vmem>>, vector<1x4x4x48xf32>
    %2 = vector.shape_cast %1 : vector<1x4x4x48xf32> to vector<4x4x48xf32>
    %3 = vector.extract_strided_slice %0 {offsets = [0, 0], sizes = [1, 48], strides = [1, 1]} : vector<9x48xf32> to vector<1x48xf32>
    %4 = vector.shape_cast %3 : vector<1x48xf32> to vector<1x1x48xf32>
    %5 = vector.broadcast %4 : vector<1x1x48xf32> to vector<4x4x48xf32>
    %6 = arith.mulf %2, %5 : vector<4x4x48xf32>
    %c0_5 = arith.constant 0 : index
    %c0_6 = arith.constant 0 : index
    %c0_7 = arith.constant 0 : index
    %c0_8 = arith.constant 0 : index
    %7 = vector.load %arg2[%c0_5, %c0_6, %c0_7, %c0_8] : memref<1x5x5x48xf32, #tpu.memory_space<vmem>>, vector<1x4x4x48xf32>
    %8 = vector.shape_cast %7 : vector<1x4x4x48xf32> to vector<4x4x48xf32>
    %9 = vector.extract_strided_slice %0 {offsets = [1, 0], sizes = [1, 48], strides = [1, 1]} : vector<9x48xf32> to vector<1x48xf32>
    %10 = vector.shape_cast %9 : vector<1x48xf32> to vector<1x1x48xf32>
    %11 = vector.broadcast %10 : vector<1x1x48xf32> to vector<4x4x48xf32>
    %12 = arith.mulf %8, %11 : vector<4x4x48xf32>
    %13 = arith.addf %6, %12 : vector<4x4x48xf32>
    %c0_9 = arith.constant 0 : index
    %c0_10 = arith.constant 0 : index
    %c1 = arith.constant 1 : index
    %c0_11 = arith.constant 0 : index
    %14 = vector.load %arg1[%c0_9, %c0_10, %c1, %c0_11] : memref<1x5x5x48xf32, #tpu.memory_space<vmem>>, vector<1x4x4x48xf32>
    %15 = vector.shape_cast %14 : vector<1x4x4x48xf32> to vector<4x4x48xf32>
    %16 = vector.extract_strided_slice %0 {offsets = [2, 0], sizes = [1, 48], strides = [1, 1]} : vector<9x48xf32> to vector<1x48xf32>
    %17 = vector.shape_cast %16 : vector<1x48xf32> to vector<1x1x48xf32>
    %18 = vector.broadcast %17 : vector<1x1x48xf32> to vector<4x4x48xf32>
    %19 = arith.mulf %15, %18 : vector<4x4x48xf32>
    %20 = arith.addf %13, %19 : vector<4x4x48xf32>
    %c0_12 = arith.constant 0 : index
    %c0_13 = arith.constant 0 : index
    %c0_14 = arith.constant 0 : index
    %c0_15 = arith.constant 0 : index
    %21 = vector.load %arg3[%c0_12, %c0_13, %c0_14, %c0_15] : memref<1x5x5x48xf32, #tpu.memory_space<vmem>>, vector<1x4x4x48xf32>
    %22 = vector.shape_cast %21 : vector<1x4x4x48xf32> to vector<4x4x48xf32>
    %23 = vector.extract_strided_slice %0 {offsets = [3, 0], sizes = [1, 48], strides = [1, 1]} : vector<9x48xf32> to vector<1x48xf32>
    %24 = vector.shape_cast %23 : vector<1x48xf32> to vector<1x1x48xf32>
    %25 = vector.broadcast %24 : vector<1x1x48xf32> to vector<4x4x48xf32>
    %26 = arith.mulf %22, %25 : vector<4x4x48xf32>
    %27 = arith.addf %20, %26 : vector<4x4x48xf32>
    %c0_16 = arith.constant 0 : index
    %c0_17 = arith.constant 0 : index
    %c0_18 = arith.constant 0 : index
    %c0_19 = arith.constant 0 : index
    %28 = vector.load %arg4[%c0_16, %c0_17, %c0_18, %c0_19] : memref<1x5x5x48xf32, #tpu.memory_space<vmem>>, vector<1x4x4x48xf32>
    %29 = vector.shape_cast %28 : vector<1x4x4x48xf32> to vector<4x4x48xf32>
    %30 = vector.extract_strided_slice %0 {offsets = [4, 0], sizes = [1, 48], strides = [1, 1]} : vector<9x48xf32> to vector<1x48xf32>
    %31 = vector.shape_cast %30 : vector<1x48xf32> to vector<1x1x48xf32>
    %32 = vector.broadcast %31 : vector<1x1x48xf32> to vector<4x4x48xf32>
    %33 = arith.mulf %29, %32 : vector<4x4x48xf32>
    %34 = arith.addf %27, %33 : vector<4x4x48xf32>
    %c0_20 = arith.constant 0 : index
    %c0_21 = arith.constant 0 : index
    %c1_22 = arith.constant 1 : index
    %c0_23 = arith.constant 0 : index
    %35 = vector.load %arg3[%c0_20, %c0_21, %c1_22, %c0_23] : memref<1x5x5x48xf32, #tpu.memory_space<vmem>>, vector<1x4x4x48xf32>
    %36 = vector.shape_cast %35 : vector<1x4x4x48xf32> to vector<4x4x48xf32>
    %37 = vector.extract_strided_slice %0 {offsets = [5, 0], sizes = [1, 48], strides = [1, 1]} : vector<9x48xf32> to vector<1x48xf32>
    %38 = vector.shape_cast %37 : vector<1x48xf32> to vector<1x1x48xf32>
    %39 = vector.broadcast %38 : vector<1x1x48xf32> to vector<4x4x48xf32>
    %40 = arith.mulf %36, %39 : vector<4x4x48xf32>
    %41 = arith.addf %34, %40 : vector<4x4x48xf32>
    %c0_24 = arith.constant 0 : index
    %c1_25 = arith.constant 1 : index
    %c0_26 = arith.constant 0 : index
    %c0_27 = arith.constant 0 : index
    %42 = vector.load %arg1[%c0_24, %c1_25, %c0_26, %c0_27] : memref<1x5x5x48xf32, #tpu.memory_space<vmem>>, vector<1x4x4x48xf32>
    %43 = vector.shape_cast %42 : vector<1x4x4x48xf32> to vector<4x4x48xf32>
    %44 = vector.extract_strided_slice %0 {offsets = [6, 0], sizes = [1, 48], strides = [1, 1]} : vector<9x48xf32> to vector<1x48xf32>
    %45 = vector.shape_cast %44 : vector<1x48xf32> to vector<1x1x48xf32>
    %46 = vector.broadcast %45 : vector<1x1x48xf32> to vector<4x4x48xf32>
    %47 = arith.mulf %43, %46 : vector<4x4x48xf32>
    %48 = arith.addf %41, %47 : vector<4x4x48xf32>
    %c0_28 = arith.constant 0 : index
    %c1_29 = arith.constant 1 : index
    %c0_30 = arith.constant 0 : index
    %c0_31 = arith.constant 0 : index
    %49 = vector.load %arg2[%c0_28, %c1_29, %c0_30, %c0_31] : memref<1x5x5x48xf32, #tpu.memory_space<vmem>>, vector<1x4x4x48xf32>
    %50 = vector.shape_cast %49 : vector<1x4x4x48xf32> to vector<4x4x48xf32>
    %51 = vector.extract_strided_slice %0 {offsets = [7, 0], sizes = [1, 48], strides = [1, 1]} : vector<9x48xf32> to vector<1x48xf32>
    %52 = vector.shape_cast %51 : vector<1x48xf32> to vector<1x1x48xf32>
    %53 = vector.broadcast %52 : vector<1x1x48xf32> to vector<4x4x48xf32>
    %54 = arith.mulf %50, %53 : vector<4x4x48xf32>
    %55 = arith.addf %48, %54 : vector<4x4x48xf32>
    %c0_32 = arith.constant 0 : index
    %c1_33 = arith.constant 1 : index
    %c1_34 = arith.constant 1 : index
    %c0_35 = arith.constant 0 : index
    %56 = vector.load %arg1[%c0_32, %c1_33, %c1_34, %c0_35] : memref<1x5x5x48xf32, #tpu.memory_space<vmem>>, vector<1x4x4x48xf32>
    %57 = vector.shape_cast %56 : vector<1x4x4x48xf32> to vector<4x4x48xf32>
    %58 = vector.extract_strided_slice %0 {offsets = [8, 0], sizes = [1, 48], strides = [1, 1]} : vector<9x48xf32> to vector<1x48xf32>
    %59 = vector.shape_cast %58 : vector<1x48xf32> to vector<1x1x48xf32>
    %60 = vector.broadcast %59 : vector<1x1x48xf32> to vector<4x4x48xf32>
    %61 = arith.mulf %57, %60 : vector<4x4x48xf32>
    %62 = arith.addf %55, %61 : vector<4x4x48xf32>
    %c0_36 = arith.constant 0 : index
    %c0_37 = arith.constant 0 : index
    %63 = vector.load %arg6[%c0_36, %c0_37] : memref<1x48xf32, #tpu.memory_space<vmem>>, vector<1x48xf32>
    %64 = vector.shape_cast %63 : vector<1x48xf32> to vector<1x1x48xf32>
    %65 = vector.broadcast %64 : vector<1x1x48xf32> to vector<4x4x48xf32>
    %66 = arith.addf %62, %65 : vector<4x4x48xf32>
    %cst = arith.constant 0.000000e+00 : f32
    %67 = vector.broadcast %cst : f32 to vector<4x4x48xf32>
    %68 = arith.maximumf %66, %67 : vector<4x4x48xf32>
    %c0_38 = arith.constant 0 : index
    %c0_39 = arith.constant 0 : index
    %69 = vector.load %arg7[%c0_38, %c0_39] : memref<48x12xf32, #tpu.memory_space<vmem>>, vector<48x12xf32>
    %c0_40 = arith.constant 0 : index
    %c0_41 = arith.constant 0 : index
    %70 = vector.load %arg8[%c0_40, %c0_41] : memref<1x12xf32, #tpu.memory_space<vmem>>, vector<1x12xf32>
    %c0_42 = arith.constant 0 : index
    %c0_43 = arith.constant 0 : index
    %71 = vector.load %arg9[%c0_42, %c0_43] : memref<12x48xf32, #tpu.memory_space<vmem>>, vector<12x48xf32>
    %c0_44 = arith.constant 0 : index
    %c0_45 = arith.constant 0 : index
    %72 = vector.load %arg10[%c0_44, %c0_45] : memref<1x48xf32, #tpu.memory_space<vmem>>, vector<1x48xf32>
    %c0_46 = arith.constant 0 : index
    %c0_47 = arith.constant 0 : index
    %73 = vector.load %arg11[%c0_46, %c0_47] : memref<48x24xf32, #tpu.memory_space<vmem>>, vector<48x24xf32>
    %c0_48 = arith.constant 0 : index
    %c0_49 = arith.constant 0 : index
    %74 = vector.load %arg12[%c0_48, %c0_49] : memref<1x24xf32, #tpu.memory_space<vmem>>, vector<1x24xf32>
    %cst_50 = arith.constant dense<0.000000e+00> : vector<4x48xf32>
    %75 = vector.multi_reduction <add>, %68, %cst_50 [0] : vector<4x4x48xf32> to vector<4x48xf32>
    %cst_51 = arith.constant dense<0.000000e+00> : vector<48xf32>
    %76 = vector.multi_reduction <add>, %75, %cst_51 [0] : vector<4x48xf32> to vector<48xf32>
    %77 = vector.shape_cast %76 : vector<48xf32> to vector<1x48xf32>
    %cst_52 = arith.constant 6.250000e-02 : f32
    %78 = vector.broadcast %cst_52 : f32 to vector<1x48xf32>
    %79 = arith.mulf %77, %78 : vector<1x48xf32>
    %cst_53 = arith.constant dense<0.000000e+00> : vector<1x12xf32>
    %80 = tpu.matmul %79, %69, %cst_53 {dimension_numbers = #tpu.dot_dimension_numbers<[1], [0], [0], [1], [0, 0, 1, 1], [], []>} : vector<1x48xf32>, vector<48x12xf32>, vector<1x12xf32> -> vector<1x12xf32>
    %81 = arith.addf %80, %70 : vector<1x12xf32>
    %cst_54 = arith.constant 0.000000e+00 : f32
    %82 = vector.broadcast %cst_54 : f32 to vector<1x12xf32>
    %83 = arith.maximumf %81, %82 : vector<1x12xf32>
    %cst_55 = arith.constant dense<0.000000e+00> : vector<1x48xf32>
    %84 = tpu.matmul %83, %71, %cst_55 {dimension_numbers = #tpu.dot_dimension_numbers<[1], [0], [0], [1], [0, 0, 1, 1], [], []>} : vector<1x12xf32>, vector<12x48xf32>, vector<1x48xf32> -> vector<1x48xf32>
    %85 = arith.addf %84, %72 : vector<1x48xf32>
    %86 = arith.negf %85 : vector<1x48xf32>
    %87 = math.exp %86 : vector<1x48xf32>
    %cst_56 = arith.constant 1.000000e+00 : f32
    %88 = vector.broadcast %cst_56 : f32 to vector<1x48xf32>
    %89 = arith.addf %88, %87 : vector<1x48xf32>
    %90 = arith.divf %88, %89 : vector<1x48xf32>
    %91 = vector.shape_cast %90 : vector<1x48xf32> to vector<1x1x48xf32>
    %92 = vector.broadcast %91 : vector<1x1x48xf32> to vector<4x4x48xf32>
    %93 = arith.mulf %68, %92 : vector<4x4x48xf32>
    %94 = vector.shape_cast %73 : vector<48x24xf32> to vector<1x48x24xf32>
    %95 = vector.shape_cast %94 : vector<1x48x24xf32> to vector<1x48x24xf32>
    %96 = vector.broadcast %95 : vector<1x48x24xf32> to vector<4x48x24xf32>
    %cst_57 = arith.constant dense<0.000000e+00> : vector<4x4x24xf32>
    %97 = tpu.matmul %93, %96, %cst_57 {dimension_numbers = #tpu.dot_dimension_numbers<[2], [1], [1], [2], [0, 0, 0, 1, 1, 2], [0], [0]>} : vector<4x4x48xf32>, vector<4x48x24xf32>, vector<4x4x24xf32> -> vector<4x4x24xf32>
    %98 = vector.shape_cast %74 : vector<1x24xf32> to vector<1x1x24xf32>
    %99 = vector.broadcast %98 : vector<1x1x24xf32> to vector<4x4x24xf32>
    %100 = arith.addf %97, %99 : vector<4x4x24xf32>
    %c0_58 = arith.constant 0 : index
    %c0_59 = arith.constant 0 : index
    %c0_60 = arith.constant 0 : index
    %c0_61 = arith.constant 0 : index
    %101 = vector.load %arg13[%c0_58, %c0_59, %c0_60, %c0_61] : memref<1x4x4x24xf32, #tpu.memory_space<vmem>>, vector<1x4x4x24xf32>
    %102 = vector.shape_cast %101 : vector<1x4x4x24xf32> to vector<4x4x24xf32>
    %103 = vector.shape_cast %100 : vector<4x4x24xf32> to vector<1x4x4x24xf32>
    tpu.vector_store %arg13[%c0_58, %c0_59, %c0_60, %c0_61], %103 {strides = array<i32>} : memref<1x4x4x24xf32, #tpu.memory_space<vmem>>, vector<1x4x4x24xf32>,
    return
  }
  func.func @transform_0(%arg0: i32) -> (i32, i32, i32, i32) {
    %c0_i32 = arith.constant 0 : i32
    %c0_i32_0 = arith.constant 0 : i32
    %c0_i32_1 = arith.constant 0 : i32
    %c0_i32_2 = arith.constant 0 : i32
    return %arg0, %c0_i32, %c0_i32_0, %c0_i32_1 : i32, i32, i32, i32
  }
  func.func @transform_1(%arg0: i32) -> (i32, i32, i32, i32) {
    %c0_i32 = arith.constant 0 : i32
    %c0_i32_0 = arith.constant 0 : i32
    %c0_i32_1 = arith.constant 0 : i32
    %c0_i32_2 = arith.constant 0 : i32
    return %arg0, %c0_i32, %c0_i32_0, %c0_i32_1 : i32, i32, i32, i32
  }
  func.func @transform_2(%arg0: i32) -> (i32, i32, i32, i32) {
    %c0_i32 = arith.constant 0 : i32
    %c0_i32_0 = arith.constant 0 : i32
    %c0_i32_1 = arith.constant 0 : i32
    %c0_i32_2 = arith.constant 0 : i32
    return %arg0, %c0_i32, %c0_i32_0, %c0_i32_1 : i32, i32, i32, i32
  }
  func.func @transform_3(%arg0: i32) -> (i32, i32, i32, i32) {
    %c0_i32 = arith.constant 0 : i32
    %c0_i32_0 = arith.constant 0 : i32
    %c0_i32_1 = arith.constant 0 : i32
    %c0_i32_2 = arith.constant 0 : i32
    return %arg0, %c0_i32, %c0_i32_0, %c0_i32_1 : i32, i32, i32, i32
  }
  func.func @transform_4(%arg0: i32) -> (i32, i32) {
    %c0_i32 = arith.constant 0 : i32
    %c0_i32_0 = arith.constant 0 : i32
    %c0_i32_1 = arith.constant 0 : i32
    return %c0_i32, %c0_i32_0 : i32, i32
  }
  func.func @transform_5(%arg0: i32) -> (i32, i32) {
    %c0_i32 = arith.constant 0 : i32
    %c0_i32_0 = arith.constant 0 : i32
    %c0_i32_1 = arith.constant 0 : i32
    return %c0_i32, %c0_i32_0 : i32, i32
  }
  func.func @transform_6(%arg0: i32) -> (i32, i32) {
    %c0_i32 = arith.constant 0 : i32
    %c0_i32_0 = arith.constant 0 : i32
    %c0_i32_1 = arith.constant 0 : i32
    return %c0_i32, %c0_i32_0 : i32, i32
  }
  func.func @transform_7(%arg0: i32) -> (i32, i32) {
    %c0_i32 = arith.constant 0 : i32
    %c0_i32_0 = arith.constant 0 : i32
    %c0_i32_1 = arith.constant 0 : i32
    return %c0_i32, %c0_i32_0 : i32, i32
  }
  func.func @transform_8(%arg0: i32) -> (i32, i32) {
    %c0_i32 = arith.constant 0 : i32
    %c0_i32_0 = arith.constant 0 : i32
    %c0_i32_1 = arith.constant 0 : i32
    return %c0_i32, %c0_i32_0 : i32, i32
  }
  func.func @transform_9(%arg0: i32) -> (i32, i32) {
    %c0_i32 = arith.constant 0 : i32
    %c0_i32_0 = arith.constant 0 : i32
    %c0_i32_1 = arith.constant 0 : i32
    return %c0_i32, %c0_i32_0 : i32, i32
  }
  func.func @transform_10(%arg0: i32) -> (i32, i32) {
    %c0_i32 = arith.constant 0 : i32
    %c0_i32_0 = arith.constant 0 : i32
    %c0_i32_1 = arith.constant 0 : i32
    return %c0_i32, %c0_i32_0 : i32, i32
  }
  func.func @transform_11(%arg0: i32) -> (i32, i32) {
    %c0_i32 = arith.constant 0 : i32
    %c0_i32_0 = arith.constant 0 : i32
    %c0_i32_1 = arith.constant 0 : i32
    return %c0_i32, %c0_i32_0 : i32, i32
  }
  func.func @transform_12(%arg0: i32) -> (i32, i32, i32, i32) {
    %c0_i32 = arith.constant 0 : i32
    %c0_i32_0 = arith.constant 0 : i32
    %c0_i32_1 = arith.constant 0 : i32
    %c0_i32_2 = arith.constant 0 : i32
    return %arg0, %c0_i32, %c0_i32_0, %c0_i32_1 : i32, i32, i32, i32
  }
}

module attributes {stable_mosaic.version = 11 : i64} {
  func.func @_block_s1_kernel(%arg0: i32, %arg1: memref<1x4x4x24xf32, #tpu.memory_space<vmem>>, %arg2: memref<24x72xf32, #tpu.memory_space<vmem>>, %arg3: memref<1x72xf32, #tpu.memory_space<vmem>>, %arg4: memref<9x72xf32, #tpu.memory_space<vmem>>, %arg5: memref<1x72xf32, #tpu.memory_space<vmem>>, %arg6: memref<72x18xf32, #tpu.memory_space<vmem>>, %arg7: memref<1x18xf32, #tpu.memory_space<vmem>>, %arg8: memref<18x72xf32, #tpu.memory_space<vmem>>, %arg9: memref<1x72xf32, #tpu.memory_space<vmem>>, %arg10: memref<72x24xf32, #tpu.memory_space<vmem>>, %arg11: memref<1x24xf32, #tpu.memory_space<vmem>>, %arg12: memref<1x4x4x24xf32, #tpu.memory_space<vmem>>, %arg13: memref<6x20x72xf32, #tpu.memory_space<vmem>>) attributes {dimension_semantics = [#tpu.dimension_semantics<parallel>], iteration_bounds = array<i64: 2>, scalar_prefetch = 0 : i64, scratch_operands = 1 : i64, tpu.core_type = #tpu.core_type<tc>, window_params = [{transform_indices = @transform_0, window_bounds = array<i64: 1, 4, 4, 24>}, {pipeline_mode = #tpu.pipeline_mode<synchronous>, transform_indices = @transform_1, window_bounds = array<i64: 24, 72>}, {pipeline_mode = #tpu.pipeline_mode<synchronous>, transform_indices = @transform_2, window_bounds = array<i64: 1, 72>}, {pipeline_mode = #tpu.pipeline_mode<synchronous>, transform_indices = @transform_3, window_bounds = array<i64: 9, 72>}, {pipeline_mode = #tpu.pipeline_mode<synchronous>, transform_indices = @transform_4, window_bounds = array<i64: 1, 72>}, {pipeline_mode = #tpu.pipeline_mode<synchronous>, transform_indices = @transform_5, window_bounds = array<i64: 72, 18>}, {pipeline_mode = #tpu.pipeline_mode<synchronous>, transform_indices = @transform_6, window_bounds = array<i64: 1, 18>}, {pipeline_mode = #tpu.pipeline_mode<synchronous>, transform_indices = @transform_7, window_bounds = array<i64: 18, 72>}, {pipeline_mode = #tpu.pipeline_mode<synchronous>, transform_indices = @transform_8, window_bounds = array<i64: 1, 72>}, {pipeline_mode = #tpu.pipeline_mode<synchronous>, transform_indices = @transform_9, window_bounds = array<i64: 72, 24>}, {pipeline_mode = #tpu.pipeline_mode<synchronous>, transform_indices = @transform_10, window_bounds = array<i64: 1, 24>}, {transform_indices = @transform_11, window_bounds = array<i64: 1, 4, 4, 24>}]} {
    %c0 = arith.constant 0 : index
    %c0_0 = arith.constant 0 : index
    %c0_1 = arith.constant 0 : index
    %c0_2 = arith.constant 0 : index
    %0 = vector.load %arg1[%c0, %c0_0, %c0_1, %c0_2] : memref<1x4x4x24xf32, #tpu.memory_space<vmem>>, vector<1x4x4x24xf32>
    %1 = vector.shape_cast %0 : vector<1x4x4x24xf32> to vector<4x4x24xf32>
    %c0_3 = arith.constant 0 : index
    %c0_4 = arith.constant 0 : index
    %2 = vector.load %arg2[%c0_3, %c0_4] : memref<24x72xf32, #tpu.memory_space<vmem>>, vector<24x72xf32>
    %3 = vector.shape_cast %2 : vector<24x72xf32> to vector<1x24x72xf32>
    %4 = vector.shape_cast %3 : vector<1x24x72xf32> to vector<1x24x72xf32>
    %5 = vector.broadcast %4 : vector<1x24x72xf32> to vector<4x24x72xf32>
    %cst = arith.constant dense<0.000000e+00> : vector<4x4x72xf32>
    %6 = tpu.matmul %1, %5, %cst {dimension_numbers = #tpu.dot_dimension_numbers<[2], [1], [1], [2], [0, 0, 0, 1, 1, 2], [0], [0]>} : vector<4x4x24xf32>, vector<4x24x72xf32>, vector<4x4x72xf32> -> vector<4x4x72xf32>
    %c0_5 = arith.constant 0 : index
    %c0_6 = arith.constant 0 : index
    %7 = vector.load %arg3[%c0_5, %c0_6] : memref<1x72xf32, #tpu.memory_space<vmem>>, vector<1x72xf32>
    %8 = vector.shape_cast %7 : vector<1x72xf32> to vector<1x1x72xf32>
    %9 = vector.broadcast %8 : vector<1x1x72xf32> to vector<4x4x72xf32>
    %10 = arith.addf %6, %9 : vector<4x4x72xf32>
    %cst_7 = arith.constant 0.000000e+00 : f32
    %11 = vector.broadcast %cst_7 : f32 to vector<4x4x72xf32>
    %12 = arith.maximumf %10, %11 : vector<4x4x72xf32>
    %cst_8 = arith.constant 0.000000e+00 : f32
    %13 = vector.broadcast %cst_8 : f32 to vector<6x20x72xf32>
    %c0_9 = arith.constant 0 : index
    %c0_10 = arith.constant 0 : index
    %c0_11 = arith.constant 0 : index
    %14 = vector.load %arg13[%c0_9, %c0_10, %c0_11] : memref<6x20x72xf32, #tpu.memory_space<vmem>>, vector<6x20x72xf32>
    tpu.vector_store %arg13[%c0_9, %c0_10, %c0_11], %13 {strides = array<i32>} : memref<6x20x72xf32, #tpu.memory_space<vmem>>, vector<6x20x72xf32>,
    %c1 = arith.constant 1 : index
    %c8 = arith.constant 8 : index
    %c0_12 = arith.constant 0 : index
    %15 = vector.load %arg13[%c1, %c8, %c0_12] : memref<6x20x72xf32, #tpu.memory_space<vmem>>, vector<4x4x72xf32>
    tpu.vector_store %arg13[%c1, %c8, %c0_12], %12 {strides = array<i32>} : memref<6x20x72xf32, #tpu.memory_space<vmem>>, vector<4x4x72xf32>,
    %c0_13 = arith.constant 0 : index
    %c0_14 = arith.constant 0 : index
    %16 = vector.load %arg4[%c0_13, %c0_14] : memref<9x72xf32, #tpu.memory_space<vmem>>, vector<9x72xf32>
    %c0_15 = arith.constant 0 : index
    %c7 = arith.constant 7 : index
    %c0_16 = arith.constant 0 : index
    %17 = vector.load %arg13[%c0_15, %c7, %c0_16] : memref<6x20x72xf32, #tpu.memory_space<vmem>>, vector<4x4x72xf32>
    %18 = vector.extract_strided_slice %16 {offsets = [0, 0], sizes = [1, 72], strides = [1, 1]} : vector<9x72xf32> to vector<1x72xf32>
    %19 = vector.shape_cast %18 : vector<1x72xf32> to vector<1x1x72xf32>
    %20 = vector.broadcast %19 : vector<1x1x72xf32> to vector<4x4x72xf32>
    %21 = arith.mulf %17, %20 : vector<4x4x72xf32>
    %c0_17 = arith.constant 0 : index
    %c8_18 = arith.constant 8 : index
    %c0_19 = arith.constant 0 : index
    %22 = vector.load %arg13[%c0_17, %c8_18, %c0_19] : memref<6x20x72xf32, #tpu.memory_space<vmem>>, vector<4x4x72xf32>
    %23 = vector.extract_strided_slice %16 {offsets = [1, 0], sizes = [1, 72], strides = [1, 1]} : vector<9x72xf32> to vector<1x72xf32>
    %24 = vector.shape_cast %23 : vector<1x72xf32> to vector<1x1x72xf32>
    %25 = vector.broadcast %24 : vector<1x1x72xf32> to vector<4x4x72xf32>
    %26 = arith.mulf %22, %25 : vector<4x4x72xf32>
    %27 = arith.addf %21, %26 : vector<4x4x72xf32>
    %c0_20 = arith.constant 0 : index
    %c9 = arith.constant 9 : index
    %c0_21 = arith.constant 0 : index
    %28 = vector.load %arg13[%c0_20, %c9, %c0_21] : memref<6x20x72xf32, #tpu.memory_space<vmem>>, vector<4x4x72xf32>
    %29 = vector.extract_strided_slice %16 {offsets = [2, 0], sizes = [1, 72], strides = [1, 1]} : vector<9x72xf32> to vector<1x72xf32>
    %30 = vector.shape_cast %29 : vector<1x72xf32> to vector<1x1x72xf32>
    %31 = vector.broadcast %30 : vector<1x1x72xf32> to vector<4x4x72xf32>
    %32 = arith.mulf %28, %31 : vector<4x4x72xf32>
    %33 = arith.addf %27, %32 : vector<4x4x72xf32>
    %c1_22 = arith.constant 1 : index
    %c7_23 = arith.constant 7 : index
    %c0_24 = arith.constant 0 : index
    %34 = vector.load %arg13[%c1_22, %c7_23, %c0_24] : memref<6x20x72xf32, #tpu.memory_space<vmem>>, vector<4x4x72xf32>
    %35 = vector.extract_strided_slice %16 {offsets = [3, 0], sizes = [1, 72], strides = [1, 1]} : vector<9x72xf32> to vector<1x72xf32>
    %36 = vector.shape_cast %35 : vector<1x72xf32> to vector<1x1x72xf32>
    %37 = vector.broadcast %36 : vector<1x1x72xf32> to vector<4x4x72xf32>
    %38 = arith.mulf %34, %37 : vector<4x4x72xf32>
    %39 = arith.addf %33, %38 : vector<4x4x72xf32>
    %c1_25 = arith.constant 1 : index
    %c8_26 = arith.constant 8 : index
    %c0_27 = arith.constant 0 : index
    %40 = vector.load %arg13[%c1_25, %c8_26, %c0_27] : memref<6x20x72xf32, #tpu.memory_space<vmem>>, vector<4x4x72xf32>
    %41 = vector.extract_strided_slice %16 {offsets = [4, 0], sizes = [1, 72], strides = [1, 1]} : vector<9x72xf32> to vector<1x72xf32>
    %42 = vector.shape_cast %41 : vector<1x72xf32> to vector<1x1x72xf32>
    %43 = vector.broadcast %42 : vector<1x1x72xf32> to vector<4x4x72xf32>
    %44 = arith.mulf %40, %43 : vector<4x4x72xf32>
    %45 = arith.addf %39, %44 : vector<4x4x72xf32>
    %c1_28 = arith.constant 1 : index
    %c9_29 = arith.constant 9 : index
    %c0_30 = arith.constant 0 : index
    %46 = vector.load %arg13[%c1_28, %c9_29, %c0_30] : memref<6x20x72xf32, #tpu.memory_space<vmem>>, vector<4x4x72xf32>
    %47 = vector.extract_strided_slice %16 {offsets = [5, 0], sizes = [1, 72], strides = [1, 1]} : vector<9x72xf32> to vector<1x72xf32>
    %48 = vector.shape_cast %47 : vector<1x72xf32> to vector<1x1x72xf32>
    %49 = vector.broadcast %48 : vector<1x1x72xf32> to vector<4x4x72xf32>
    %50 = arith.mulf %46, %49 : vector<4x4x72xf32>
    %51 = arith.addf %45, %50 : vector<4x4x72xf32>
    %c2 = arith.constant 2 : index
    %c7_31 = arith.constant 7 : index
    %c0_32 = arith.constant 0 : index
    %52 = vector.load %arg13[%c2, %c7_31, %c0_32] : memref<6x20x72xf32, #tpu.memory_space<vmem>>, vector<4x4x72xf32>
    %53 = vector.extract_strided_slice %16 {offsets = [6, 0], sizes = [1, 72], strides = [1, 1]} : vector<9x72xf32> to vector<1x72xf32>
    %54 = vector.shape_cast %53 : vector<1x72xf32> to vector<1x1x72xf32>
    %55 = vector.broadcast %54 : vector<1x1x72xf32> to vector<4x4x72xf32>
    %56 = arith.mulf %52, %55 : vector<4x4x72xf32>
    %57 = arith.addf %51, %56 : vector<4x4x72xf32>
    %c2_33 = arith.constant 2 : index
    %c8_34 = arith.constant 8 : index
    %c0_35 = arith.constant 0 : index
    %58 = vector.load %arg13[%c2_33, %c8_34, %c0_35] : memref<6x20x72xf32, #tpu.memory_space<vmem>>, vector<4x4x72xf32>
    %59 = vector.extract_strided_slice %16 {offsets = [7, 0], sizes = [1, 72], strides = [1, 1]} : vector<9x72xf32> to vector<1x72xf32>
    %60 = vector.shape_cast %59 : vector<1x72xf32> to vector<1x1x72xf32>
    %61 = vector.broadcast %60 : vector<1x1x72xf32> to vector<4x4x72xf32>
    %62 = arith.mulf %58, %61 : vector<4x4x72xf32>
    %63 = arith.addf %57, %62 : vector<4x4x72xf32>
    %c2_36 = arith.constant 2 : index
    %c9_37 = arith.constant 9 : index
    %c0_38 = arith.constant 0 : index
    %64 = vector.load %arg13[%c2_36, %c9_37, %c0_38] : memref<6x20x72xf32, #tpu.memory_space<vmem>>, vector<4x4x72xf32>
    %65 = vector.extract_strided_slice %16 {offsets = [8, 0], sizes = [1, 72], strides = [1, 1]} : vector<9x72xf32> to vector<1x72xf32>
    %66 = vector.shape_cast %65 : vector<1x72xf32> to vector<1x1x72xf32>
    %67 = vector.broadcast %66 : vector<1x1x72xf32> to vector<4x4x72xf32>
    %68 = arith.mulf %64, %67 : vector<4x4x72xf32>
    %69 = arith.addf %63, %68 : vector<4x4x72xf32>
    %c0_39 = arith.constant 0 : index
    %c0_40 = arith.constant 0 : index
    %70 = vector.load %arg5[%c0_39, %c0_40] : memref<1x72xf32, #tpu.memory_space<vmem>>, vector<1x72xf32>
    %71 = vector.shape_cast %70 : vector<1x72xf32> to vector<1x1x72xf32>
    %72 = vector.broadcast %71 : vector<1x1x72xf32> to vector<4x4x72xf32>
    %73 = arith.addf %69, %72 : vector<4x4x72xf32>
    %cst_41 = arith.constant 0.000000e+00 : f32
    %74 = vector.broadcast %cst_41 : f32 to vector<4x4x72xf32>
    %75 = arith.maximumf %73, %74 : vector<4x4x72xf32>
    %c0_42 = arith.constant 0 : index
    %c0_43 = arith.constant 0 : index
    %76 = vector.load %arg6[%c0_42, %c0_43] : memref<72x18xf32, #tpu.memory_space<vmem>>, vector<72x18xf32>
    %c0_44 = arith.constant 0 : index
    %c0_45 = arith.constant 0 : index
    %77 = vector.load %arg7[%c0_44, %c0_45] : memref<1x18xf32, #tpu.memory_space<vmem>>, vector<1x18xf32>
    %c0_46 = arith.constant 0 : index
    %c0_47 = arith.constant 0 : index
    %78 = vector.load %arg8[%c0_46, %c0_47] : memref<18x72xf32, #tpu.memory_space<vmem>>, vector<18x72xf32>
    %c0_48 = arith.constant 0 : index
    %c0_49 = arith.constant 0 : index
    %79 = vector.load %arg9[%c0_48, %c0_49] : memref<1x72xf32, #tpu.memory_space<vmem>>, vector<1x72xf32>
    %c0_50 = arith.constant 0 : index
    %c0_51 = arith.constant 0 : index
    %80 = vector.load %arg10[%c0_50, %c0_51] : memref<72x24xf32, #tpu.memory_space<vmem>>, vector<72x24xf32>
    %c0_52 = arith.constant 0 : index
    %c0_53 = arith.constant 0 : index
    %81 = vector.load %arg11[%c0_52, %c0_53] : memref<1x24xf32, #tpu.memory_space<vmem>>, vector<1x24xf32>
    %cst_54 = arith.constant dense<0.000000e+00> : vector<4x72xf32>
    %82 = vector.multi_reduction <add>, %75, %cst_54 [0] : vector<4x4x72xf32> to vector<4x72xf32>
    %cst_55 = arith.constant dense<0.000000e+00> : vector<72xf32>
    %83 = vector.multi_reduction <add>, %82, %cst_55 [0] : vector<4x72xf32> to vector<72xf32>
    %84 = vector.shape_cast %83 : vector<72xf32> to vector<1x72xf32>
    %cst_56 = arith.constant 6.250000e-02 : f32
    %85 = vector.broadcast %cst_56 : f32 to vector<1x72xf32>
    %86 = arith.mulf %84, %85 : vector<1x72xf32>
    %cst_57 = arith.constant dense<0.000000e+00> : vector<1x18xf32>
    %87 = tpu.matmul %86, %76, %cst_57 {dimension_numbers = #tpu.dot_dimension_numbers<[1], [0], [0], [1], [0, 0, 1, 1], [], []>} : vector<1x72xf32>, vector<72x18xf32>, vector<1x18xf32> -> vector<1x18xf32>
    %88 = arith.addf %87, %77 : vector<1x18xf32>
    %cst_58 = arith.constant 0.000000e+00 : f32
    %89 = vector.broadcast %cst_58 : f32 to vector<1x18xf32>
    %90 = arith.maximumf %88, %89 : vector<1x18xf32>
    %cst_59 = arith.constant dense<0.000000e+00> : vector<1x72xf32>
    %91 = tpu.matmul %90, %78, %cst_59 {dimension_numbers = #tpu.dot_dimension_numbers<[1], [0], [0], [1], [0, 0, 1, 1], [], []>} : vector<1x18xf32>, vector<18x72xf32>, vector<1x72xf32> -> vector<1x72xf32>
    %92 = arith.addf %91, %79 : vector<1x72xf32>
    %93 = arith.negf %92 : vector<1x72xf32>
    %94 = math.exp %93 : vector<1x72xf32>
    %cst_60 = arith.constant 1.000000e+00 : f32
    %95 = vector.broadcast %cst_60 : f32 to vector<1x72xf32>
    %96 = arith.addf %95, %94 : vector<1x72xf32>
    %97 = arith.divf %95, %96 : vector<1x72xf32>
    %98 = vector.shape_cast %97 : vector<1x72xf32> to vector<1x1x72xf32>
    %99 = vector.broadcast %98 : vector<1x1x72xf32> to vector<4x4x72xf32>
    %100 = arith.mulf %75, %99 : vector<4x4x72xf32>
    %101 = vector.shape_cast %80 : vector<72x24xf32> to vector<1x72x24xf32>
    %102 = vector.shape_cast %101 : vector<1x72x24xf32> to vector<1x72x24xf32>
    %103 = vector.broadcast %102 : vector<1x72x24xf32> to vector<4x72x24xf32>
    %cst_61 = arith.constant dense<0.000000e+00> : vector<4x4x24xf32>
    %104 = tpu.matmul %100, %103, %cst_61 {dimension_numbers = #tpu.dot_dimension_numbers<[2], [1], [1], [2], [0, 0, 0, 1, 1, 2], [0], [0]>} : vector<4x4x72xf32>, vector<4x72x24xf32>, vector<4x4x24xf32> -> vector<4x4x24xf32>
    %105 = vector.shape_cast %81 : vector<1x24xf32> to vector<1x1x24xf32>
    %106 = vector.broadcast %105 : vector<1x1x24xf32> to vector<4x4x24xf32>
    %107 = arith.addf %104, %106 : vector<4x4x24xf32>
    %108 = arith.addf %107, %1 : vector<4x4x24xf32>
    %c0_62 = arith.constant 0 : index
    %c0_63 = arith.constant 0 : index
    %c0_64 = arith.constant 0 : index
    %c0_65 = arith.constant 0 : index
    %109 = vector.load %arg12[%c0_62, %c0_63, %c0_64, %c0_65] : memref<1x4x4x24xf32, #tpu.memory_space<vmem>>, vector<1x4x4x24xf32>
    %110 = vector.shape_cast %109 : vector<1x4x4x24xf32> to vector<4x4x24xf32>
    %111 = vector.shape_cast %108 : vector<4x4x24xf32> to vector<1x4x4x24xf32>
    tpu.vector_store %arg12[%c0_62, %c0_63, %c0_64, %c0_65], %111 {strides = array<i32>} : memref<1x4x4x24xf32, #tpu.memory_space<vmem>>, vector<1x4x4x24xf32>,
    return
  }
  func.func @transform_0(%arg0: i32) -> (i32, i32, i32, i32) {
    %c0_i32 = arith.constant 0 : i32
    %c0_i32_0 = arith.constant 0 : i32
    %c0_i32_1 = arith.constant 0 : i32
    %c0_i32_2 = arith.constant 0 : i32
    return %arg0, %c0_i32, %c0_i32_0, %c0_i32_1 : i32, i32, i32, i32
  }
  func.func @transform_1(%arg0: i32) -> (i32, i32) {
    %c0_i32 = arith.constant 0 : i32
    %c0_i32_0 = arith.constant 0 : i32
    %c0_i32_1 = arith.constant 0 : i32
    return %c0_i32, %c0_i32_0 : i32, i32
  }
  func.func @transform_2(%arg0: i32) -> (i32, i32) {
    %c0_i32 = arith.constant 0 : i32
    %c0_i32_0 = arith.constant 0 : i32
    %c0_i32_1 = arith.constant 0 : i32
    return %c0_i32, %c0_i32_0 : i32, i32
  }
  func.func @transform_3(%arg0: i32) -> (i32, i32) {
    %c0_i32 = arith.constant 0 : i32
    %c0_i32_0 = arith.constant 0 : i32
    %c0_i32_1 = arith.constant 0 : i32
    return %c0_i32, %c0_i32_0 : i32, i32
  }
  func.func @transform_4(%arg0: i32) -> (i32, i32) {
    %c0_i32 = arith.constant 0 : i32
    %c0_i32_0 = arith.constant 0 : i32
    %c0_i32_1 = arith.constant 0 : i32
    return %c0_i32, %c0_i32_0 : i32, i32
  }
  func.func @transform_5(%arg0: i32) -> (i32, i32) {
    %c0_i32 = arith.constant 0 : i32
    %c0_i32_0 = arith.constant 0 : i32
    %c0_i32_1 = arith.constant 0 : i32
    return %c0_i32, %c0_i32_0 : i32, i32
  }
  func.func @transform_6(%arg0: i32) -> (i32, i32) {
    %c0_i32 = arith.constant 0 : i32
    %c0_i32_0 = arith.constant 0 : i32
    %c0_i32_1 = arith.constant 0 : i32
    return %c0_i32, %c0_i32_0 : i32, i32
  }
  func.func @transform_7(%arg0: i32) -> (i32, i32) {
    %c0_i32 = arith.constant 0 : i32
    %c0_i32_0 = arith.constant 0 : i32
    %c0_i32_1 = arith.constant 0 : i32
    return %c0_i32, %c0_i32_0 : i32, i32
  }
  func.func @transform_8(%arg0: i32) -> (i32, i32) {
    %c0_i32 = arith.constant 0 : i32
    %c0_i32_0 = arith.constant 0 : i32
    %c0_i32_1 = arith.constant 0 : i32
    return %c0_i32, %c0_i32_0 : i32, i32
  }
  func.func @transform_9(%arg0: i32) -> (i32, i32) {
    %c0_i32 = arith.constant 0 : i32
    %c0_i32_0 = arith.constant 0 : i32
    %c0_i32_1 = arith.constant 0 : i32
    return %c0_i32, %c0_i32_0 : i32, i32
  }
  func.func @transform_10(%arg0: i32) -> (i32, i32) {
    %c0_i32 = arith.constant 0 : i32
    %c0_i32_0 = arith.constant 0 : i32
    %c0_i32_1 = arith.constant 0 : i32
    return %c0_i32, %c0_i32_0 : i32, i32
  }
  func.func @transform_11(%arg0: i32) -> (i32, i32, i32, i32) {
    %c0_i32 = arith.constant 0 : i32
    %c0_i32_0 = arith.constant 0 : i32
    %c0_i32_1 = arith.constant 0 : i32
    %c0_i32_2 = arith.constant 0 : i32
    return %arg0, %c0_i32, %c0_i32_0, %c0_i32_1 : i32, i32, i32, i32
  }
}

module attributes {stable_mosaic.version = 11 : i64} {
  func.func @_head_kernel(%arg0: i32, %arg1: memref<2x4x4x24xf32, #tpu.memory_space<vmem>>, %arg2: memref<24x64xf32, #tpu.memory_space<vmem>>, %arg3: memref<1x64xf32, #tpu.memory_space<vmem>>, %arg4: memref<64x10xf32, #tpu.memory_space<vmem>>, %arg5: memref<1x10xf32, #tpu.memory_space<vmem>>, %arg6: memref<2x10xf32, #tpu.memory_space<vmem>>) attributes {dimension_semantics = [#tpu.dimension_semantics<arbitrary>], iteration_bounds = array<i64: 1>, scalar_prefetch = 0 : i64, scratch_operands = 0 : i64, tpu.core_type = #tpu.core_type<tc>, window_params = [{pipeline_mode = #tpu.pipeline_mode<synchronous>, transform_indices = @transform_0, window_bounds = array<i64: 2, 4, 4, 24>}, {pipeline_mode = #tpu.pipeline_mode<synchronous>, transform_indices = @transform_1, window_bounds = array<i64: 24, 64>}, {pipeline_mode = #tpu.pipeline_mode<synchronous>, transform_indices = @transform_2, window_bounds = array<i64: 1, 64>}, {pipeline_mode = #tpu.pipeline_mode<synchronous>, transform_indices = @transform_3, window_bounds = array<i64: 64, 10>}, {pipeline_mode = #tpu.pipeline_mode<synchronous>, transform_indices = @transform_4, window_bounds = array<i64: 1, 10>}, {pipeline_mode = #tpu.pipeline_mode<synchronous>, transform_indices = @transform_5, window_bounds = array<i64: 2, 10>}]} {
    %c0 = arith.constant 0 : index
    %c0_0 = arith.constant 0 : index
    %c0_1 = arith.constant 0 : index
    %c0_2 = arith.constant 0 : index
    %0 = vector.load %arg1[%c0, %c0_0, %c0_1, %c0_2] : memref<2x4x4x24xf32, #tpu.memory_space<vmem>>, vector<2x4x4x24xf32>
    %cst = arith.constant dense<0.000000e+00> : vector<2x4x24xf32>
    %1 = vector.multi_reduction <add>, %0, %cst [1] : vector<2x4x4x24xf32> to vector<2x4x24xf32>
    %cst_3 = arith.constant dense<0.000000e+00> : vector<2x24xf32>
    %2 = vector.multi_reduction <add>, %1, %cst_3 [1] : vector<2x4x24xf32> to vector<2x24xf32>
    %cst_4 = arith.constant 6.250000e-02 : f32
    %3 = vector.broadcast %cst_4 : f32 to vector<2x24xf32>
    %4 = arith.mulf %2, %3 : vector<2x24xf32>
    %c0_5 = arith.constant 0 : index
    %c0_6 = arith.constant 0 : index
    %5 = vector.load %arg2[%c0_5, %c0_6] : memref<24x64xf32, #tpu.memory_space<vmem>>, vector<24x64xf32>
    %cst_7 = arith.constant dense<0.000000e+00> : vector<2x64xf32>
    %6 = tpu.matmul %4, %5, %cst_7 {dimension_numbers = #tpu.dot_dimension_numbers<[1], [0], [0], [1], [0, 0, 1, 1], [], []>} : vector<2x24xf32>, vector<24x64xf32>, vector<2x64xf32> -> vector<2x64xf32>
    %c0_8 = arith.constant 0 : index
    %c0_9 = arith.constant 0 : index
    %7 = vector.load %arg3[%c0_8, %c0_9] : memref<1x64xf32, #tpu.memory_space<vmem>>, vector<1x64xf32>
    %8 = vector.broadcast %7 : vector<1x64xf32> to vector<2x64xf32>
    %9 = arith.addf %6, %8 : vector<2x64xf32>
    %cst_10 = arith.constant 0.000000e+00 : f32
    %10 = vector.broadcast %cst_10 : f32 to vector<2x64xf32>
    %11 = arith.maximumf %9, %10 : vector<2x64xf32>
    %c0_11 = arith.constant 0 : index
    %c0_12 = arith.constant 0 : index
    %12 = vector.load %arg4[%c0_11, %c0_12] : memref<64x10xf32, #tpu.memory_space<vmem>>, vector<64x10xf32>
    %cst_13 = arith.constant dense<0.000000e+00> : vector<2x10xf32>
    %13 = tpu.matmul %11, %12, %cst_13 {dimension_numbers = #tpu.dot_dimension_numbers<[1], [0], [0], [1], [0, 0, 1, 1], [], []>} : vector<2x64xf32>, vector<64x10xf32>, vector<2x10xf32> -> vector<2x10xf32>
    %c0_14 = arith.constant 0 : index
    %c0_15 = arith.constant 0 : index
    %14 = vector.load %arg5[%c0_14, %c0_15] : memref<1x10xf32, #tpu.memory_space<vmem>>, vector<1x10xf32>
    %15 = vector.broadcast %14 : vector<1x10xf32> to vector<2x10xf32>
    %16 = arith.addf %13, %15 : vector<2x10xf32>
    %c0_16 = arith.constant 0 : index
    %c0_17 = arith.constant 0 : index
    %17 = vector.load %arg6[%c0_16, %c0_17] : memref<2x10xf32, #tpu.memory_space<vmem>>, vector<2x10xf32>
    tpu.vector_store %arg6[%c0_16, %c0_17], %16 {strides = array<i32>} : memref<2x10xf32, #tpu.memory_space<vmem>>, vector<2x10xf32>,
    return
  }
  func.func @transform_0(%arg0: i32) -> (i32, i32, i32, i32) {
    %c0_i32 = arith.constant 0 : i32
    %c0_i32_0 = arith.constant 0 : i32
    %c0_i32_1 = arith.constant 0 : i32
    %c0_i32_2 = arith.constant 0 : i32
    %c0_i32_3 = arith.constant 0 : i32
    return %c0_i32, %c0_i32_0, %c0_i32_1, %c0_i32_2 : i32, i32, i32, i32
  }
  func.func @transform_1(%arg0: i32) -> (i32, i32) {
    %c0_i32 = arith.constant 0 : i32
    %c0_i32_0 = arith.constant 0 : i32
    %c0_i32_1 = arith.constant 0 : i32
    return %c0_i32, %c0_i32_0 : i32, i32
  }
  func.func @transform_2(%arg0: i32) -> (i32, i32) {
    %c0_i32 = arith.constant 0 : i32
    %c0_i32_0 = arith.constant 0 : i32
    %c0_i32_1 = arith.constant 0 : i32
    return %c0_i32, %c0_i32_0 : i32, i32
  }
  func.func @transform_3(%arg0: i32) -> (i32, i32) {
    %c0_i32 = arith.constant 0 : i32
    %c0_i32_0 = arith.constant 0 : i32
    %c0_i32_1 = arith.constant 0 : i32
    return %c0_i32, %c0_i32_0 : i32, i32
  }
  func.func @transform_4(%arg0: i32) -> (i32, i32) {
    %c0_i32 = arith.constant 0 : i32
    %c0_i32_0 = arith.constant 0 : i32
    %c0_i32_1 = arith.constant 0 : i32
    return %c0_i32, %c0_i32_0 : i32, i32
  }
  func.func @transform_5(%arg0: i32) -> (i32, i32) {
    %c0_i32 = arith.constant 0 : i32
    %c0_i32_0 = arith.constant 0 : i32
    %c0_i32_1 = arith.constant 0 : i32
    return %c0_i32, %c0_i32_0 : i32, i32
  }
}

</mosaic_0001>

<llo_original>
// kernel: _lambda_.8
$region0: #{_lambda_.8}
  #allocation0 [shape = 'u32[]', space=smem, size = 0x4, offset = 0x4, fixed_abs, tag = 'smem constant byte address 0x4 - core index']
  #allocation1 [shape = 'u32[72,128]{1,0:T(1,128)}', space=vmem, size = 0x9000, scoped, tag = 'internal scratch']
  %s0 = inlined_call_operand.vmem [shape: f32[128,16], index: 0, kind: input, shape index: {}]
  %s1 = inlined_call_operand.vmem [shape: f32[16,48], index: 1, kind: input, shape index: {}]
  %s2 = inlined_call_operand.vmem [shape: f32[1,48], index: 2, kind: input, shape index: {}]
  %s3 = inlined_call_operand.vmem [shape: f32[128,48], index: 3, kind: output, shape index: {}]
  %s4 = sld [smem:[#allocation0]]
  $region22: #{_lambda_.8} parent=0
    _
  %s6 = ssub.s32 1, %s4
  %s7 = scalar_select 0, %s6, %s4
  // Predicated region
  $region2: #{_lambda_.8} parent=0 // pred_check
    _
  $region3: #{_lambda_.8} parent=0 // pred_check_branch
    %9 = sbr.rel (0) target = $region5
  $region4: #{_lambda_.8} parent=0 // pred_region
    _
  $region5: #{_lambda_.8} parent=0 // pred_fallthru
    _
  // Predicated region
  $region6: #{_lambda_.8} parent=0 // pred_check
    _
  $region7: #{_lambda_.8} parent=0 // pred_check_branch
    %11 = sbr.rel (0) target = $region9
  $region8: #{_lambda_.8} parent=0 // pred_region
    _
  $region9: #{_lambda_.8} parent=0 // pred_fallthru
    _
  // Predicated region
  $region10: #{_lambda_.8} parent=0 // pred_check
    _
  $region11: #{_lambda_.8} parent=0 // pred_check_branch
    %13 = sbr.rel (0) target = $region13
  $region12: #{_lambda_.8} parent=0 // pred_region
    _
  $region13: #{_lambda_.8} parent=0 // pred_fallthru
    _
  %v14 = vld [vmem:[%s0] sm:$0xff]
  %v15 = vld [vmem:[%s0 + $0x8] sm:$0xff]
  %v16 = vld [vmem:[%s0 + $0x10] sm:$0xff]
  %v17 = vld [vmem:[%s0 + $0x18] sm:$0xff]
  %v18 = vld [vmem:[%s0 + $0x20] sm:$0xff]
  %v19 = vld [vmem:[%s0 + $0x28] sm:$0xff]
  %v20 = vld [vmem:[%s0 + $0x30] sm:$0xff]
  %v21 = vld [vmem:[%s0 + $0x38] sm:$0xff]
  %v22 = vld [vmem:[%s0 + $0x40] sm:$0xff]
  %v23 = vld [vmem:[%s0 + $0x48] sm:$0xff]
  %v24 = vld [vmem:[%s0 + $0x50] sm:$0xff]
  %v25 = vld [vmem:[%s0 + $0x58] sm:$0xff]
  %v26 = vld [vmem:[%s0 + $0x60] sm:$0xff]
  %v27 = vld [vmem:[%s0 + $0x68] sm:$0xff]
  %v28 = vld [vmem:[%s0 + $0x70] sm:$0xff]
  %v29 = vld [vmem:[%s0 + $0x78] sm:$0xff]
  %v30 = vld [vmem:[%s1] sm:$0xff]
  %v31 = vld [vmem:[%s1 + $0x8] sm:$0xff]
  %v32 = vld [vmem:[%s2] sm:$0x1]
  %v34 = vperm.slane %v32, 0
  %vm36 = vcmask 130048
  %v38 = vsel %vm36, %v14, 0
  %v41 = vsel %vm36, %v15, 0
  %v44 = vsel %vm36, %v16, 0
  %v47 = vsel %vm36, %v17, 0
  %v50 = vsel %vm36, %v18, 0
  %v53 = vsel %vm36, %v19, 0
  %v56 = vsel %vm36, %v20, 0
  %v59 = vsel %vm36, %v21, 0
  %v62 = vsel %vm36, %v22, 0
  %v65 = vsel %vm36, %v23, 0
  %v68 = vsel %vm36, %v24, 0
  %v71 = vsel %vm36, %v25, 0
  %v74 = vsel %vm36, %v26, 0
  %v77 = vsel %vm36, %v27, 0
  %v80 = vsel %vm36, %v28, 0
  %v83 = vsel %vm36, %v29, 0
  %85 = vmatpush.msra.mxu0 0.0
  %86 = vmatpush.msra.mxu0 0.0
  %87 = vmatpush.msra.mxu0 0.0
  %88 = vmatpush.msra.mxu0 0.0
  %89 = vmatpush.msra.mxu0 0.0
  %90 = vmatpush.msra.mxu0 0.0
  %91 = vmatpush.msra.mxu0 0.0
  %92 = vmatpush.msra.mxu0 0.0
  %93 = vmatpush.msra.mxu0 0.0
  %94 = vmatpush.msra.mxu0 0.0
  %95 = vmatpush.msra.mxu0 0.0
  %96 = vmatpush.msra.mxu0 0.0
  %97 = vmatpush.msra.mxu0 0.0
  %98 = vmatpush.msra.mxu0 0.0
  %99 = vmatpush.msra.mxu0 %v31
  %100 = vmatpush.msra.mxu0 %v30
  %101 = vmatmul.f32.gmra.mxu0 %v38
  %v102 = vpop.f32.mrf.mxu0
  %v103 = vadd.f32 %v34, %v102
  %104 = vmatmul.f32.gmra.mxu0 %v41
  %v105 = vpop.f32.mrf.mxu0
  %v106 = vadd.f32 %v34, %v105
  %107 = vmatmul.f32.gmra.mxu0 %v44
  %v108 = vpop.f32.mrf.mxu0
  %v109 = vadd.f32 %v34, %v108
  %110 = vmatmul.f32.gmra.mxu0 %v47
  %v111 = vpop.f32.mrf.mxu0
  %v112 = vadd.f32 %v34, %v111
  %113 = vmatmul.f32.gmra.mxu0 %v50
  %v114 = vpop.f32.mrf.mxu0
  %v115 = vadd.f32 %v34, %v114
  %116 = vmatmul.f32.gmra.mxu0 %v53
  %v117 = vpop.f32.mrf.mxu0
  %v118 = vadd.f32 %v34, %v117
  %119 = vmatmul.f32.gmra.mxu0 %v56
  %v120 = vpop.f32.mrf.mxu0
  %v121 = vadd.f32 %v34, %v120
  %122 = vmatmul.f32.gmra.mxu0 %v59
  %v123 = vpop.f32.mrf.mxu0
  %v124 = vadd.f32 %v34, %v123
  %125 = vmatmul.f32.gmra.mxu0 %v62
  %v126 = vpop.f32.mrf.mxu0
  %v127 = vadd.f32 %v34, %v126
  %128 = vmatmul.f32.gmra.mxu0 %v65
  %v129 = vpop.f32.mrf.mxu0
  %v130 = vadd.f32 %v34, %v129
  %131 = vmatmul.f32.gmra.mxu0 %v68
  %v132 = vpop.f32.mrf.mxu0
  %v133 = vadd.f32 %v34, %v132
  %134 = vmatmul.f32.gmra.mxu0 %v71
  %v135 = vpop.f32.mrf.mxu0
  %v136 = vadd.f32 %v34, %v135
  %137 = vmatmul.f32.gmra.mxu0 %v74
  %v138 = vpop.f32.mrf.mxu0
  %v139 = vadd.f32 %v34, %v138
  %140 = vmatmul.f32.gmra.mxu0 %v77
  %v141 = vpop.f32.mrf.mxu0
  %v142 = vadd.f32 %v34, %v141
  %143 = vmatmul.f32.gmra.mxu0 %v80
  %v144 = vpop.f32.mrf.mxu0
  %v145 = vadd.f32 %v34, %v144
  %146 = vmatmul.f32.gmra.mxu0 %v83
  %v147 = vpop.f32.mrf.mxu0
  %v148 = vadd.f32 %v34, %v147
  %149 = vdwg.mxu0
  %v150 = vmax.f32 %v103, 0.0
  %v151 = vmax.f32 %v106, 0.0
  %v152 = vmax.f32 %v109, 0.0
  %v153 = vmax.f32 %v112, 0.0
  %v154 = vmax.f32 %v115, 0.0
  %v155 = vmax.f32 %v118, 0.0
  %v156 = vmax.f32 %v121, 0.0
  %v157 = vmax.f32 %v124, 0.0
  %v158 = vmax.f32 %v127, 0.0
  %v159 = vmax.f32 %v130, 0.0
  %v160 = vmax.f32 %v133, 0.0
  %v161 = vmax.f32 %v136, 0.0
  %v162 = vmax.f32 %v139, 0.0
  %v163 = vmax.f32 %v142, 0.0
  %v164 = vmax.f32 %v145, 0.0
  %v165 = vmax.f32 %v148, 0.0
  %vm166 = vcmask 392192
  %167 = vst.msk [vmem:[%s3] sm:$0xff] %vm166, %v150
  %168 = vst.msk [vmem:[%s3 + $0x8] sm:$0xff] %vm166, %v151
  %169 = vst.msk [vmem:[%s3 + $0x10] sm:$0xff] %vm166, %v152
  %170 = vst.msk [vmem:[%s3 + $0x18] sm:$0xff] %vm166, %v153
  %171 = vst.msk [vmem:[%s3 + $0x20] sm:$0xff] %vm166, %v154
  %172 = vst.msk [vmem:[%s3 + $0x28] sm:$0xff] %vm166, %v155
  %173 = vst.msk [vmem:[%s3 + $0x30] sm:$0xff] %vm166, %v156
  %174 = vst.msk [vmem:[%s3 + $0x38] sm:$0xff] %vm166, %v157
  %175 = vst.msk [vmem:[%s3 + $0x40] sm:$0xff] %vm166, %v158
  %176 = vst.msk [vmem:[%s3 + $0x48] sm:$0xff] %vm166, %v159
  %177 = vst.msk [vmem:[%s3 + $0x50] sm:$0xff] %vm166, %v160
  %178 = vst.msk [vmem:[%s3 + $0x58] sm:$0xff] %vm166, %v161
  %179 = vst.msk [vmem:[%s3 + $0x60] sm:$0xff] %vm166, %v162
  %180 = vst.msk [vmem:[%s3 + $0x68] sm:$0xff] %vm166, %v163
  %181 = vst.msk [vmem:[%s3 + $0x70] sm:$0xff] %vm166, %v164
  %182 = vst.msk [vmem:[%s3 + $0x78] sm:$0xff] %vm166, %v165
  // Predicated region
  $region14: #{_lambda_.8} parent=0 // pred_check
    _
  $region15: #{_lambda_.8} parent=0 // pred_check_branch
    %184 = sbr.rel (0) target = $region17
  $region16: #{_lambda_.8} parent=0 // pred_region
    _
  $region17: #{_lambda_.8} parent=0 // pred_fallthru
    _
  // Predicated region
  $region18: #{_lambda_.8} parent=0 // pred_check
    _
  $region19: #{_lambda_.8} parent=0 // pred_check_branch
    %186 = sbr.rel (0) target = $region21
  $region20: #{_lambda_.8} parent=0 // pred_region
    _
  $region21: #{_lambda_.8} parent=0 // pred_fallthru
    _

// kernel: _lambda_.6
$region0: #{_lambda_.6}
  #allocation0 [shape = 'u32[]', space=smem, size = 0x4, offset = 0x4, fixed_abs, tag = 'smem constant byte address 0x4 - core index']
  #allocation1 [shape = 'u32[72,128]{1,0:T(1,128)}', space=vmem, size = 0x9000, scoped, tag = 'internal scratch']
  %s0 = inlined_call_operand.vmem [shape: f32[128,27], index: 0, kind: input, shape index: {}]
  %s1 = inlined_call_operand.vmem [shape: f32[27,16], index: 1, kind: input, shape index: {}]
  %s2 = inlined_call_operand.vmem [shape: f32[1,16], index: 2, kind: input, shape index: {}]
  %s3 = inlined_call_operand.vmem [shape: f32[128,16], index: 3, kind: output, shape index: {}]
  %s4 = sld [smem:[#allocation0]]
  $region22: #{_lambda_.6} parent=0
    _
  %s6 = ssub.s32 1, %s4
  %s7 = scalar_select 0, %s6, %s4
  // Predicated region
  $region2: #{_lambda_.6} parent=0 // pred_check
    _
  $region3: #{_lambda_.6} parent=0 // pred_check_branch
    %9 = sbr.rel (0) target = $region5
  $region4: #{_lambda_.6} parent=0 // pred_region
    _
  $region5: #{_lambda_.6} parent=0 // pred_fallthru
    _
  // Predicated region
  $region6: #{_lambda_.6} parent=0 // pred_check
    _
  $region7: #{_lambda_.6} parent=0 // pred_check_branch
    %11 = sbr.rel (0) target = $region9
  $region8: #{_lambda_.6} parent=0 // pred_region
    _
  $region9: #{_lambda_.6} parent=0 // pred_fallthru
    _
  // Predicated region
  $region10: #{_lambda_.6} parent=0 // pred_check
    _
  $region11: #{_lambda_.6} parent=0 // pred_check_branch
    %13 = sbr.rel (0) target = $region13
  $region12: #{_lambda_.6} parent=0 // pred_region
    _
  $region13: #{_lambda_.6} parent=0 // pred_fallthru
    _
  %v14 = vld [vmem:[%s0] sm:$0xff]
  %v15 = vld [vmem:[%s0 + $0x8] sm:$0xff]
  %v16 = vld [vmem:[%s0 + $0x10] sm:$0xff]
  %v17 = vld [vmem:[%s0 + $0x18] sm:$0xff]
  %v18 = vld [vmem:[%s0 + $0x20] sm:$0xff]
  %v19 = vld [vmem:[%s0 + $0x28] sm:$0xff]
  %v20 = vld [vmem:[%s0 + $0x30] sm:$0xff]
  %v21 = vld [vmem:[%s0 + $0x38] sm:$0xff]
  %v22 = vld [vmem:[%s0 + $0x40] sm:$0xff]
  %v23 = vld [vmem:[%s0 + $0x48] sm:$0xff]
  %v24 = vld [vmem:[%s0 + $0x50] sm:$0xff]
  %v25 = vld [vmem:[%s0 + $0x58] sm:$0xff]
  %v26 = vld [vmem:[%s0 + $0x60] sm:$0xff]
  %v27 = vld [vmem:[%s0 + $0x68] sm:$0xff]
  %v28 = vld [vmem:[%s0 + $0x70] sm:$0xff]
  %v29 = vld [vmem:[%s0 + $0x78] sm:$0xff]
  %v30 = vld [vmem:[%s1] sm:$0xff]
  %v31 = vld [vmem:[%s1 + $0x8] sm:$0xff]
  %v32 = vld [vmem:[%s1 + $0x10] sm:$0xff]
  %v33 = vld [vmem:[%s1 + $0x18] sm:$0x7]
  %v34 = vld [vmem:[%s2] sm:$0x1]
  %v36 = vperm.slane %v34, 0
  %vm38 = vcmask 220160
  %v40 = vsel %vm38, %v14, 0
  %v43 = vsel %vm38, %v15, 0
  %v46 = vsel %vm38, %v16, 0
  %v49 = vsel %vm38, %v17, 0
  %v52 = vsel %vm38, %v18, 0
  %v55 = vsel %vm38, %v19, 0
  %v58 = vsel %vm38, %v20, 0
  %v61 = vsel %vm38, %v21, 0
  %v64 = vsel %vm38, %v22, 0
  %v67 = vsel %vm38, %v23, 0
  %v70 = vsel %vm38, %v24, 0
  %v73 = vsel %vm38, %v25, 0
  %v76 = vsel %vm38, %v26, 0
  %v79 = vsel %vm38, %v27, 0
  %v82 = vsel %vm38, %v28, 0
  %v85 = vsel %vm38, %v29, 0
  %vm87 = vcmask 1042432
  %v89 = vsel %vm87, %v33, 0
  %91 = vmatpush.msra.mxu0 0.0
  %92 = vmatpush.msra.mxu0 0.0
  %93 = vmatpush.msra.mxu0 0.0
  %94 = vmatpush.msra.mxu0 0.0
  %95 = vmatpush.msra.mxu0 0.0
  %96 = vmatpush.msra.mxu0 0.0
  %97 = vmatpush.msra.mxu0 0.0
  %98 = vmatpush.msra.mxu0 0.0
  %99 = vmatpush.msra.mxu0 0.0
  %100 = vmatpush.msra.mxu0 0.0
  %101 = vmatpush.msra.mxu0 0.0
  %102 = vmatpush.msra.mxu0 0.0
  %103 = vmatpush.msra.mxu0 %v89
  %104 = vmatpush.msra.mxu0 %v32
  %105 = vmatpush.msra.mxu0 %v31
  %106 = vmatpush.msra.mxu0 %v30
  %107 = vmatmul.f32.gmra.mxu0 %v40
  %v108 = vpop.f32.mrf.mxu0
  %v109 = vadd.f32 %v36, %v108
  %110 = vmatmul.f32.gmra.mxu0 %v43
  %v111 = vpop.f32.mrf.mxu0
  %v112 = vadd.f32 %v36, %v111
  %113 = vmatmul.f32.gmra.mxu0 %v46
  %v114 = vpop.f32.mrf.mxu0
  %v115 = vadd.f32 %v36, %v114
  %116 = vmatmul.f32.gmra.mxu0 %v49
  %v117 = vpop.f32.mrf.mxu0
  %v118 = vadd.f32 %v36, %v117
  %119 = vmatmul.f32.gmra.mxu0 %v52
  %v120 = vpop.f32.mrf.mxu0
  %v121 = vadd.f32 %v36, %v120
  %122 = vmatmul.f32.gmra.mxu0 %v55
  %v123 = vpop.f32.mrf.mxu0
  %v124 = vadd.f32 %v36, %v123
  %125 = vmatmul.f32.gmra.mxu0 %v58
  %v126 = vpop.f32.mrf.mxu0
  %v127 = vadd.f32 %v36, %v126
  %128 = vmatmul.f32.gmra.mxu0 %v61
  %v129 = vpop.f32.mrf.mxu0
  %v130 = vadd.f32 %v36, %v129
  %131 = vmatmul.f32.gmra.mxu0 %v64
  %v132 = vpop.f32.mrf.mxu0
  %v133 = vadd.f32 %v36, %v132
  %134 = vmatmul.f32.gmra.mxu0 %v67
  %v135 = vpop.f32.mrf.mxu0
  %v136 = vadd.f32 %v36, %v135
  %137 = vmatmul.f32.gmra.mxu0 %v70
  %v138 = vpop.f32.mrf.mxu0
  %v139 = vadd.f32 %v36, %v138
  %140 = vmatmul.f32.gmra.mxu0 %v73
  %v141 = vpop.f32.mrf.mxu0
  %v142 = vadd.f32 %v36, %v141
  %143 = vmatmul.f32.gmra.mxu0 %v76
  %v144 = vpop.f32.mrf.mxu0
  %v145 = vadd.f32 %v36, %v144
  %146 = vmatmul.f32.gmra.mxu0 %v79
  %v147 = vpop.f32.mrf.mxu0
  %v148 = vadd.f32 %v36, %v147
  %149 = vmatmul.f32.gmra.mxu0 %v82
  %v150 = vpop.f32.mrf.mxu0
  %v151 = vadd.f32 %v36, %v150
  %152 = vmatmul.f32.gmra.mxu0 %v85
  %v153 = vpop.f32.mrf.mxu0
  %v154 = vadd.f32 %v36, %v153
  %155 = vdwg.mxu0
  %v156 = vmax.f32 %v109, 0.0
  %v157 = vmax.f32 %v112, 0.0
  %v158 = vmax.f32 %v115, 0.0
  %v159 = vmax.f32 %v118, 0.0
  %v160 = vmax.f32 %v121, 0.0
  %v161 = vmax.f32 %v124, 0.0
  %v162 = vmax.f32 %v127, 0.0
  %v163 = vmax.f32 %v130, 0.0
  %v164 = vmax.f32 %v133, 0.0
  %v165 = vmax.f32 %v136, 0.0
  %v166 = vmax.f32 %v139, 0.0
  %v167 = vmax.f32 %v142, 0.0
  %v168 = vmax.f32 %v145, 0.0
  %v169 = vmax.f32 %v148, 0.0
  %v170 = vmax.f32 %v151, 0.0
  %v171 = vmax.f32 %v154, 0.0
  %vm172 = vcmask 130048
  %173 = vst.msk [vmem:[%s3] sm:$0xff] %vm172, %v156
  %174 = vst.msk [vmem:[%s3 + $0x8] sm:$0xff] %vm172, %v157
  %175 = vst.msk [vmem:[%s3 + $0x10] sm:$0xff] %vm172, %v158
  %176 = vst.msk [vmem:[%s3 + $0x18] sm:$0xff] %vm172, %v159
  %177 = vst.msk [vmem:[%s3 + $0x20] sm:$0xff] %vm172, %v160
  %178 = vst.msk [vmem:[%s3 + $0x28] sm:$0xff] %vm172, %v161
  %179 = vst.msk [vmem:[%s3 + $0x30] sm:$0xff] %vm172, %v162
  %180 = vst.msk [vmem:[%s3 + $0x38] sm:$0xff] %vm172, %v163
  %181 = vst.msk [vmem:[%s3 + $0x40] sm:$0xff] %vm172, %v164
  %182 = vst.msk [vmem:[%s3 + $0x48] sm:$0xff] %vm172, %v165
  %183 = vst.msk [vmem:[%s3 + $0x50] sm:$0xff] %vm172, %v166
  %184 = vst.msk [vmem:[%s3 + $0x58] sm:$0xff] %vm172, %v167
  %185 = vst.msk [vmem:[%s3 + $0x60] sm:$0xff] %vm172, %v168
  %186 = vst.msk [vmem:[%s3 + $0x68] sm:$0xff] %vm172, %v169
  %187 = vst.msk [vmem:[%s3 + $0x70] sm:$0xff] %vm172, %v170
  %188 = vst.msk [vmem:[%s3 + $0x78] sm:$0xff] %vm172, %v171
  // Predicated region
  $region14: #{_lambda_.6} parent=0 // pred_check
    _
  $region15: #{_lambda_.6} parent=0 // pred_check_branch
    %190 = sbr.rel (0) target = $region17
  $region16: #{_lambda_.6} parent=0 // pred_region
    _
  $region17: #{_lambda_.6} parent=0 // pred_fallthru
    _
  // Predicated region
  $region18: #{_lambda_.6} parent=0 // pred_check
    _
  $region19: #{_lambda_.6} parent=0 // pred_check_branch
    %192 = sbr.rel (0) target = $region21
  $region20: #{_lambda_.6} parent=0 // pred_region
    _
  $region21: #{_lambda_.6} parent=0 // pred_fallthru
    _

// kernel: _lambda_.7
$region0: #{_lambda_.7}
  #allocation0 [shape = 'u32[]', space=smem, size = 0x4, offset = 0x4, fixed_abs, tag = 'smem constant byte address 0x4 - core index']
  #allocation1 [shape = 'u32[72,128]{1,0:T(1,128)}', space=vmem, size = 0x9000, scoped, tag = 'internal scratch']
  #allocation2 [shape = 'f32[10,24,16]{2,1,0:T(8,128)}', space=vmem, size = 0x1e000, scoped, tag = 'scratch operand']
  %s0 = inlined_call_operand.vmem [shape: f32[2,8,8,16], index: 0, kind: input, shape index: {}]
  %s1 = inlined_call_operand.vmem [shape: f32[9,16], index: 1, kind: input, shape index: {}]
  %s2 = inlined_call_operand.vmem [shape: f32[1,16], index: 2, kind: input, shape index: {}]
  %s3 = inlined_call_operand.vmem [shape: f32[16,4], index: 3, kind: input, shape index: {}]
  %s4 = inlined_call_operand.vmem [shape: f32[1,4], index: 4, kind: input, shape index: {}]
  %s5 = inlined_call_operand.vmem [shape: f32[4,16], index: 5, kind: input, shape index: {}]
  %s6 = inlined_call_operand.vmem [shape: f32[1,16], index: 6, kind: input, shape index: {}]
  %s7 = inlined_call_operand.vmem [shape: f32[16,16], index: 7, kind: input, shape index: {}]
  %s8 = inlined_call_operand.vmem [shape: f32[1,16], index: 8, kind: input, shape index: {}]
  %s9 = inlined_call_operand.vmem [shape: f32[2,8,8,16], index: 9, kind: output, shape index: {}]
  %s10 = sld [smem:[#allocation0]]
  $region69: #{_lambda_.7} parent=0
    _
  %s12 = ssub.s32 1, %s10
  %s13 = scalar_select 0, %s12, %s10
  loop: start=0, step=1, limit=4
  $region2: #{_lambda_.7} parent=0 // loop_pre_header
    _
  $region3: #{_lambda_.7} parent=0 // loop_header
    %s15 = sphi 0, %s19
    %p16 = scmp.ge.s32.totalorder %s15, 4
    %s25 = sphi 0, %s27
    %s28 = sphi 0, %s25
    %s29 = sphi 0, %s28
    %s45 = sphi 0, %s29
    %s49 = sphi 0, %s49
    %s51 = sphi 0, %s49
    %s52 = sphi 0, %s51
    %s66 = sphi 0, %s52
    %s70 = sphi 0, %s70
    %s72 = sphi 0, %s70
    %s73 = sphi 0, %s72
    %s87 = sphi 0, %s73
    %s91 = sphi 0, %s91
    %s93 = sphi 0, %s91
    %s94 = sphi 0, %s93
    %s108 = sphi 0, %s94
    %s112 = sphi 0, %s112
    %s114 = sphi 0, %s112
    %s115 = sphi 0, %s114
    %s129 = sphi 0, %s115
    %s133 = sphi 0, %s133
    %s135 = sphi 0, %s133
    %s136 = sphi 0, %s135
    %s150 = sphi 0, %s136
    %s154 = sphi 0, %s154
    %s156 = sphi 0, %s154
    %s157 = sphi 0, %s156
    %s171 = sphi 0, %s157
    %s175 = sphi 0, %s175
    %s177 = sphi 0, %s175
    %s178 = sphi 0, %s177
    %s192 = sphi 0, %s178
    %s196 = sphi 0, %s196
    %s198 = sphi 0, %s196
    %s199 = sphi 0, %s198
    %s213 = sphi 0, %s199
    %s219 = sphi 0, %s221
    %s222 = sphi 0, %s219
    %s223 = sphi 0, %s222
    %s239 = sphi 0, %s223
  $region4: #{_lambda_.7} parent=0 // loop_header_branch
    %18 = sbr.rel (%p16) target = $region8
  $region5: #{_lambda_.7} parent=0 // loop_body
    %s20 = ssub.s32 %s15, 1
    %s21 = ssub.s32 %s15, 2
    %s22 = sadd.s32 %s15, 1
    %s23 = ssub.s32 %s15, %s22
    %p24 = scmp.eq.s32.totalorder %s23, 0
    %s26 = sadd.s32 %s25, 1
    %s27 = scalar_select %p24, %s25, %s26
    %p30 = pneg %p24
    %p31 = scmp.eq.s32.totalorder %s15, 1
    %p32 = por %p30, %p31
    %p33 = scmp.ne.s32.totalorder %s25, %s28
    %p34 = scmp.eq.s32.totalorder %s15, 0
    %p35 = por %p33, %p34
    %p36 = scmp.ne.s32.totalorder %s25, %s28
    %p37 = scmp.eq.s32.totalorder %s20, 1
    %p38 = por %p36, %p37
    %p39 = scmp.ne.s32.totalorder %s28, %s29
    %p40 = scmp.eq.s32.totalorder %s20, 0
    %p41 = por %p39, %p40
    %p42 = scmp.ne.s32.totalorder %s28, %s29
    %p43 = scmp.eq.s32.totalorder %s21, 1
    %p44 = por %p42, %p43
    %p46 = scmp.ne.s32.totalorder %s29, %s45
    %p47 = scmp.eq.s32.totalorder %s21, 0
    %p48 = por %p46, %p47
    %s50 = sadd.s32 %s49, 1
    %p53 = scmp.eq.s32.totalorder %s15, 1
    %p54 = scmp.ne.s32.totalorder %s49, %s51
    %p55 = scmp.eq.s32.totalorder %s15, 0
    %p56 = por %p54, %p55
    %p57 = scmp.ne.s32.totalorder %s49, %s51
    %p58 = scmp.eq.s32.totalorder %s20, 1
    %p59 = por %p57, %p58
    %p60 = scmp.ne.s32.totalorder %s51, %s52
    %p61 = scmp.eq.s32.totalorder %s20, 0
    %p62 = por %p60, %p61
    %p63 = scmp.ne.s32.totalorder %s51, %s52
    %p64 = scmp.eq.s32.totalorder %s21, 1
    %p65 = por %p63, %p64
    %p67 = scmp.ne.s32.totalorder %s52, %s66
    %p68 = scmp.eq.s32.totalorder %s21, 0
    %p69 = por %p67, %p68
    %s71 = sadd.s32 %s70, 1
    %p74 = scmp.eq.s32.totalorder %s15, 1
    %p75 = scmp.ne.s32.totalorder %s70, %s72
    %p76 = scmp.eq.s32.totalorder %s15, 0
    %p77 = por %p75, %p76
    %p78 = scmp.ne.s32.totalorder %s70, %s72
    %p79 = scmp.eq.s32.totalorder %s20, 1
    %p80 = por %p78, %p79
    %p81 = scmp.ne.s32.totalorder %s72, %s73
    %p82 = scmp.eq.s32.totalorder %s20, 0
    %p83 = por %p81, %p82
    %p84 = scmp.ne.s32.totalorder %s72, %s73
    %p85 = scmp.eq.s32.totalorder %s21, 1
    %p86 = por %p84, %p85
    %p88 = scmp.ne.s32.totalorder %s73, %s87
    %p89 = scmp.eq.s32.totalorder %s21, 0
    %p90 = por %p88, %p89
    %s92 = sadd.s32 %s91, 1
    %p95 = scmp.eq.s32.totalorder %s15, 1
    %p96 = scmp.ne.s32.totalorder %s91, %s93
    %p97 = scmp.eq.s32.totalorder %s15, 0
    %p98 = por %p96, %p97
    %p99 = scmp.ne.s32.totalorder %s91, %s93
    %p100 = scmp.eq.s32.totalorder %s20, 1
    %p101 = por %p99, %p100
    %p102 = scmp.ne.s32.totalorder %s93, %s94
    %p103 = scmp.eq.s32.totalorder %s20, 0
    %p104 = por %p102, %p103
    %p105 = scmp.ne.s32.totalorder %s93, %s94
    %p106 = scmp.eq.s32.totalorder %s21, 1
    %p107 = por %p105, %p106
    %p109 = scmp.ne.s32.totalorder %s94, %s108
    %p110 = scmp.eq.s32.totalorder %s21, 0
    %p111 = por %p109, %p110
    %s113 = sadd.s32 %s112, 1
    %p116 = scmp.eq.s32.totalorder %s15, 1
    %p117 = scmp.ne.s32.totalorder %s112, %s114
    %p118 = scmp.eq.s32.totalorder %s15, 0
    %p119 = por %p117, %p118
    %p120 = scmp.ne.s32.totalorder %s112, %s114
    %p121 = scmp.eq.s32.totalorder %s20, 1
    %p122 = por %p120, %p121
    %p123 = scmp.ne.s32.totalorder %s114, %s115
    %p124 = scmp.eq.s32.totalorder %s20, 0
    %p125 = por %p123, %p124
    %p126 = scmp.ne.s32.totalorder %s114, %s115
    %p127 = scmp.eq.s32.totalorder %s21, 1
    %p128 = por %p126, %p127
    %p130 = scmp.ne.s32.totalorder %s115, %s129
    %p131 = scmp.eq.s32.totalorder %s21, 0
    %p132 = por %p130, %p131
    %s134 = sadd.s32 %s133, 1
    %p137 = scmp.eq.s32.totalorder %s15, 1
    %p138 = scmp.ne.s32.totalorder %s133, %s135
    %p139 = scmp.eq.s32.totalorder %s15, 0
    %p140 = por %p138, %p139
    %p141 = scmp.ne.s32.totalorder %s133, %s135
    %p142 = scmp.eq.s32.totalorder %s20, 1
    %p143 = por %p141, %p142
    %p144 = scmp.ne.s32.totalorder %s135, %s136
    %p145 = scmp.eq.s32.totalorder %s20, 0
    %p146 = por %p144, %p145
    %p147 = scmp.ne.s32.totalorder %s135, %s136
    %p148 = scmp.eq.s32.totalorder %s21, 1
    %p149 = por %p147, %p148
    %p151 = scmp.ne.s32.totalorder %s136, %s150
    %p152 = scmp.eq.s32.totalorder %s21, 0
    %p153 = por %p151, %p152
    %s155 = sadd.s32 %s154, 1
    %p158 = scmp.eq.s32.totalorder %s15, 1
    %p159 = scmp.ne.s32.totalorder %s154, %s156
    %p160 = scmp.eq.s32.totalorder %s15, 0
    %p161 = por %p159, %p160
    %p162 = scmp.ne.s32.totalorder %s154, %s156
    %p163 = scmp.eq.s32.totalorder %s20, 1
    %p164 = por %p162, %p163
    %p165 = scmp.ne.s32.totalorder %s156, %s157
    %p166 = scmp.eq.s32.totalorder %s20, 0
    %p167 = por %p165, %p166
    %p168 = scmp.ne.s32.totalorder %s156, %s157
    %p169 = scmp.eq.s32.totalorder %s21, 1
    %p170 = por %p168, %p169
    %p172 = scmp.ne.s32.totalorder %s157, %s171
    %p173 = scmp.eq.s32.totalorder %s21, 0
    %p174 = por %p172, %p173
    %s176 = sadd.s32 %s175, 1
    %p179 = scmp.eq.s32.totalorder %s15, 1
    %p180 = scmp.ne.s32.totalorder %s175, %s177
    %p181 = scmp.eq.s32.totalorder %s15, 0
    %p182 = por %p180, %p181
    %p183 = scmp.ne.s32.totalorder %s175, %s177
    %p184 = scmp.eq.s32.totalorder %s20, 1
    %p185 = por %p183, %p184
    %p186 = scmp.ne.s32.totalorder %s177, %s178
    %p187 = scmp.eq.s32.totalorder %s20, 0
    %p188 = por %p186, %p187
    %p189 = scmp.ne.s32.totalorder %s177, %s178
    %p190 = scmp.eq.s32.totalorder %s21, 1
    %p191 = por %p189, %p190
    %p193 = scmp.ne.s32.totalorder %s178, %s192
    %p194 = scmp.eq.s32.totalorder %s21, 0
    %p195 = por %p193, %p194
    %s197 = sadd.s32 %s196, 1
    %p200 = scmp.eq.s32.totalorder %s15, 1
    %p201 = scmp.ne.s32.totalorder %s196, %s198
    %p202 = scmp.eq.s32.totalorder %s15, 0
    %p203 = por %p201, %p202
    %p204 = scmp.ne.s32.totalorder %s196, %s198
    %p205 = scmp.eq.s32.totalorder %s20, 1
    %p206 = por %p204, %p205
    %p207 = scmp.ne.s32.totalorder %s198, %s199
    %p208 = scmp.eq.s32.totalorder %s20, 0
    %p209 = por %p207, %p208
    %p210 = scmp.ne.s32.totalorder %s198, %s199
    %p211 = scmp.eq.s32.totalorder %s21, 1
    %p212 = por %p210, %p211
    %p214 = scmp.ne.s32.totalorder %s199, %s213
    %p215 = scmp.eq.s32.totalorder %s21, 0
    %p216 = por %p214, %p215
    %s217 = ssub.s32 %s15, %s22
    %p218 = scmp.eq.s32.totalorder %s217, 0
    %s220 = sadd.s32 %s219, 1
    %s221 = scalar_select %p218, %s219, %s220
    %p224 = pneg %p218
    %p225 = scmp.eq.s32.totalorder %s15, 1
    %p226 = por %p224, %p225
    %p227 = scmp.ne.s32.totalorder %s219, %s222
    %p228 = scmp.eq.s32.totalorder %s15, 0
    %p229 = por %p227, %p228
    %p230 = scmp.ne.s32.totalorder %s219, %s222
    %p231 = scmp.eq.s32.totalorder %s20, 1
    %p232 = por %p230, %p231
    %p233 = scmp.ne.s32.totalorder %s222, %s223
    %p234 = scmp.eq.s32.totalorder %s20, 0
    %p235 = por %p233, %p234
    %p236 = scmp.ne.s32.totalorder %s222, %s223
    %p237 = scmp.eq.s32.totalorder %s21, 1
    %p238 = por %p236, %p237
    %p240 = scmp.ne.s32.totalorder %s223, %s239
    %p241 = scmp.eq.s32.totalorder %s21, 0
    %p242 = por %p240, %p241
    %p243 = scmp.le.s32.totalorder 1, %s15
    %p244 = scmp.lt.s32.totalorder %s15, 3
    %p245 = pnand %p243, %p244
    %p246 = pneg %p245
    // Predicated region
    $region9: #{_lambda_.7} parent=5 // pred_check
      _
    $region10: #{_lambda_.7} parent=5 // pred_check_branch
      %248 = sbr.rel (%p245) target = $region12
    $region11: #{_lambda_.7} parent=5 // pred_region
      %s249 = ssub.s32 %s15, 1
      // Predicated region
      $region13: #{_lambda_.7} parent=11 // pred_check
        %p250 = pneg %p62
      $region14: #{_lambda_.7} parent=11 // pred_check_branch
        %252 = sbr.rel (%p250) target = $region16
      $region15: #{_lambda_.7} parent=11 // pred_region
        _
      $region16: #{_lambda_.7} parent=11 // pred_fallthru
        _
      // Predicated region
      $region17: #{_lambda_.7} parent=11 // pred_check
        %p253 = pneg %p83
      $region18: #{_lambda_.7} parent=11 // pred_check_branch
        %255 = sbr.rel (%p253) target = $region20
      $region19: #{_lambda_.7} parent=11 // pred_region
        _
      $region20: #{_lambda_.7} parent=11 // pred_fallthru
        _
      // Predicated region
      $region21: #{_lambda_.7} parent=11 // pred_check
        %p256 = pneg %p104
      $region22: #{_lambda_.7} parent=11 // pred_check_branch
        %258 = sbr.rel (%p256) target = $region24
      $region23: #{_lambda_.7} parent=11 // pred_region
        _
      $region24: #{_lambda_.7} parent=11 // pred_fallthru
        _
      // Predicated region
      $region25: #{_lambda_.7} parent=11 // pred_check
        %p259 = pneg %p125
      $region26: #{_lambda_.7} parent=11 // pred_check_branch
        %261 = sbr.rel (%p259) target = $region28
      $region27: #{_lambda_.7} parent=11 // pred_region
        _
      $region28: #{_lambda_.7} parent=11 // pred_fallthru
        _
      // Predicated region
      $region29: #{_lambda_.7} parent=11 // pred_check
        %p262 = pneg %p146
      $region30: #{_lambda_.7} parent=11 // pred_check_branch
        %264 = sbr.rel (%p262) target = $region32
      $region31: #{_lambda_.7} parent=11 // pred_region
        _
      $region32: #{_lambda_.7} parent=11 // pred_fallthru
        _
      // Predicated region
      $region33: #{_lambda_.7} parent=11 // pred_check
        %p265 = pneg %p167
      $region34: #{_lambda_.7} parent=11 // pred_check_branch
        %267 = sbr.rel (%p265) target = $region36
      $region35: #{_lambda_.7} parent=11 // pred_region
        _
      $region36: #{_lambda_.7} parent=11 // pred_fallthru
        _
      // Predicated region
      $region37: #{_lambda_.7} parent=11 // pred_check
        %p268 = pneg %p188
      $region38: #{_lambda_.7} parent=11 // pred_check_branch
        %270 = sbr.rel (%p268) target = $region40
      $region39: #{_lambda_.7} parent=11 // pred_region
        _
      $region40: #{_lambda_.7} parent=11 // pred_fallthru
        _
      // Predicated region
      $region41: #{_lambda_.7} parent=11 // pred_check
        %p271 = pneg %p209
      $region42: #{_lambda_.7} parent=11 // pred_check_branch
        %273 = sbr.rel (%p271) target = $region44
      $region43: #{_lambda_.7} parent=11 // pred_region
        _
      $region44: #{_lambda_.7} parent=11 // pred_fallthru
        _
    $region12: #{_lambda_.7} parent=5 // pred_fallthru
      _
    %p274 = scmp.lt.s32.totalorder %s15, 2
    // Predicated region
    $region45: #{_lambda_.7} parent=5 // pred_check
      %p275 = pneg %p274
    $region46: #{_lambda_.7} parent=5 // pred_check_branch
      %277 = sbr.rel (%p275) target = $region48
    $region47: #{_lambda_.7} parent=5 // pred_region
      // Predicated region
      $region49: #{_lambda_.7} parent=47 // pred_check
        %p278 = pneg %p35
      $region50: #{_lambda_.7} parent=47 // pred_check_branch
        %280 = sbr.rel (%p278) target = $region52
      $region51: #{_lambda_.7} parent=47 // pred_region
        %p281 = scmp.lt.s32.totalorder %s15, 1
        %s282 = scalar_select %p281, %s15, 1
        %s283 = smul.addr %s282, 8
        %s284 = smul.addr %s283, 8
        %s285 = scalar_lea.vmem %s0, %s284
      $region52: #{_lambda_.7} parent=47 // pred_fallthru
        _
    $region48: #{_lambda_.7} parent=5 // pred_fallthru
      _
    %p286 = scmp.le.s32.totalorder 1, %s15
    %p287 = scmp.lt.s32.totalorder %s15, 3
    %p288 = pnand %p286, %p287
    %p289 = pneg %p288
    // Predicated region
    $region53: #{_lambda_.7} parent=5 // pred_check
      _
    $region54: #{_lambda_.7} parent=5 // pred_check_branch
      %291 = sbr.rel (%p288) target = $region56
    $region55: #{_lambda_.7} parent=5 // pred_region
      %s292 = ssub.s32 %s15, 1
      %p293 = scmp.lt.s32.totalorder %s20, 1
      %s294 = scalar_select %p293, %s20, 1
      %s295 = smul.addr %s294, 8
      %s296 = smul.addr %s295, 8
      %s297 = scalar_lea.vmem %s0, %s296
      %p298 = pneg %p41
      %p299 = pneg %p38
      %p300 = pneg %p62
      %p301 = pneg %p59
      %p302 = pneg %p83
      %p303 = pneg %p80
      %p304 = pneg %p104
      %p305 = pneg %p101
      %p306 = pneg %p125
      %p307 = pneg %p122
      %p308 = pneg %p146
      %p309 = pneg %p143
      %p310 = pneg %p167
      %p311 = pneg %p164
      %p312 = pneg %p188
      %p313 = pneg %p185
      %p314 = pneg %p209
      %p315 = pneg %p206
      %p316 = pneg %p235
      %p317 = pneg %p232
      %p318 = scmp.lt.s32.totalorder %s20, 1
      %s319 = scalar_select %p318, %s20, 1
      %s320 = smul.addr %s319, 8
      %s321 = smul.addr %s320, 8
      %s322 = scalar_lea.vmem %s9, %s321
      %p323 = scmp.lt.s32.totalorder %s20, 1
      %s324 = scalar_select %p323, %s20, 1
      %s325 = smul.addr %s324, 8
      %s326 = smul.addr %s325, 8
      %s327 = scalar_lea.vmem %s0, %s326
      %p328 = scmp.lt.s32.totalorder %s20, 1
      %s329 = scalar_select %p328, %s20, 1
      %s330 = smul.addr %s329, 8
      %s331 = smul.addr %s330, 8
      %s332 = scalar_lea.vmem %s9, %s331
      %v333 = vld [vmem:[%s327] sm:$0xff]
      %v334 = vld [vmem:[%s327 + $0x8] sm:$0xff]
      %v335 = vld [vmem:[%s327 + $0x10] sm:$0xff]
      %v336 = vld [vmem:[%s327 + $0x18] sm:$0xff]
      %v337 = vld [vmem:[%s327 + $0x20] sm:$0xff]
      %v338 = vld [vmem:[%s327 + $0x28] sm:$0xff]
      %v339 = vld [vmem:[%s327 + $0x30] sm:$0xff]
      %v340 = vld [vmem:[%s327 + $0x38] sm:$0xff]
      %vm341 = vcmask 130048
      %342 = vst.msk [vmem:[#allocation2] sm:$0xff] %vm341, 0.0
      %343 = vst.msk [vmem:[#allocation2 + $0x8] sm:$0xff] %vm341, 0.0
      %344 = vst.msk [vmem:[#allocation2 + $0x10] sm:$0xff] %vm341, 0.0
      %345 = vst.msk [vmem:[#allocation2 + $0x18] sm:$0xff] %vm341, 0.0
      %346 = vst.msk [vmem:[#allocation2 + $0x20] sm:$0xff] %vm341, 0.0
      %347 = vst.msk [vmem:[#allocation2 + $0x28] sm:$0xff] %vm341, 0.0
      %348 = vst.msk [vmem:[#allocation2 + $0x30] sm:$0xff] %vm341, 0.0
      %349 = vst.msk [vmem:[#allocation2 + $0x38] sm:$0xff] %vm341, 0.0
      %350 = vst.msk [vmem:[#allocation2 + $0x40] sm:$0xff] %vm341, 0.0
      %351 = vst.msk [vmem:[#allocation2 + $0x48] sm:$0xff] %vm341, 0.0
      %352 = vst.msk [vmem:[#allocation2 + $0x50] sm:$0xff] %vm341, 0.0
      %353 = vst.msk [vmem:[#allocation2 + $0x58] sm:$0xff] %vm341, 0.0
      %354 = vst.msk [vmem:[#allocation2 + $0x60] sm:$0xff] %vm341, 0.0
      %355 = vst.msk [vmem:[#allocation2 + $0x68] sm:$0xff] %vm341, 0.0
      %356 = vst.msk [vmem:[#allocation2 + $0x70] sm:$0xff] %vm341, 0.0
      %357 = vst.msk [vmem:[#allocation2 + $0x78] sm:$0xff] %vm341, 0.0
      %358 = vst.msk [vmem:[#allocation2 + $0x80] sm:$0xff] %vm341, 0.0
      %359 = vst.msk [vmem:[#allocation2 + $0x88] sm:$0xff] %vm341, 0.0
      %360 = vst.msk [vmem:[#allocation2 + $0x90] sm:$0xff] %vm341, 0.0
      %361 = vst.msk [vmem:[#allocation2 + $0x98] sm:$0xff] %vm341, 0.0
      %362 = vst.msk [vmem:[#allocation2 + $0xa0] sm:$0xff] %vm341, 0.0
      %363 = vst.msk [vmem:[#allocation2 + $0xa8] sm:$0xff] %vm341, 0.0
      %364 = vst.msk [vmem:[#allocation2 + $0xb0] sm:$0xff] %vm341, 0.0
      %365 = vst.msk [vmem:[#allocation2 + $0xb8] sm:$0xff] %vm341, 0.0
      %366 = vst.msk [vmem:[#allocation2 + $0xc0] sm:$0xff] %vm341, 0.0
      %367 = vst.msk [vmem:[#allocation2 + $0xc8] sm:$0xff] %vm341, 0.0
      %368 = vst.msk [vmem:[#allocation2 + $0xd0] sm:$0xff] %vm341, 0.0
      %369 = vst.msk [vmem:[#allocation2 + $0xd8] sm:$0xff] %vm341, 0.0
      %370 = vst.msk [vmem:[#allocation2 + $0xe0] sm:$0xff] %vm341, 0.0
      %371 = vst.msk [vmem:[#allocation2 + $0xe8] sm:$0xff] %vm341, 0.0
      %s372 = scalar_lea.vmem [#allocation2], 24
      %373 = vst.msk [vmem:[%s372 + $0x8] sm:$0xff] %vm341, %v333
      %374 = vst.msk [vmem:[%s372 + $0x20] sm:$0xff] %vm341, %v334
      %375 = vst.msk [vmem:[%s372 + $0x38] sm:$0xff] %vm341, %v335
      %376 = vst.msk [vmem:[%s372 + $0x50] sm:$0xff] %vm341, %v336
      %377 = vst.msk [vmem:[%s372 + $0x68] sm:$0xff] %vm341, %v337
      %378 = vst.msk [vmem:[%s372 + $0x80] sm:$0xff] %vm341, %v338
      %379 = vst.msk [vmem:[%s372 + $0x98] sm:$0xff] %vm341, %v339
      %380 = vst.msk [vmem:[%s372 + $0xb0] sm:$0xff] %vm341, %v340
      %v381 = vld [vmem:[%s1] sm:$0xff]
      %v382 = vld [vmem:[%s1 + $0x8] sm:$0x1]
      %v383 = vld [vmem:[#allocation2 + $0x7] sm:$0xff]
      %v384 = vld [vmem:[#allocation2 + $0x1f] sm:$0xff]
      %v385 = vld [vmem:[#allocation2 + $0x37] sm:$0xff]
      %v386 = vld [vmem:[#allocation2 + $0x4f] sm:$0xff]
      %v387 = vld [vmem:[#allocation2 + $0x67] sm:$0xff]
      %v388 = vld [vmem:[#allocation2 + $0x7f] sm:$0xff]
      %v389 = vld [vmem:[#allocation2 + $0x97] sm:$0xff]
      %v390 = vld [vmem:[#allocation2 + $0xaf] sm:$0xff]
      %v391 = vperm.slane %v381, 0
      %v392 = vmul.f32 %v383, %v391
      %v393 = vmul.f32 %v384, %v391
      %v394 = vmul.f32 %v385, %v391
      %v395 = vmul.f32 %v386, %v391
      %v396 = vmul.f32 %v387, %v391
      %v397 = vmul.f32 %v388, %v391
      %v398 = vmul.f32 %v389, %v391
      %v399 = vmul.f32 %v390, %v391
      %v400 = vld [vmem:[#allocation2 + $0x8] sm:$0xff]
      %v401 = vld [vmem:[#allocation2 + $0x20] sm:$0xff]
      %v402 = vld [vmem:[#allocation2 + $0x38] sm:$0xff]
      %v403 = vld [vmem:[#allocation2 + $0x50] sm:$0xff]
      %v404 = vld [vmem:[#allocation2 + $0x68] sm:$0xff]
      %v405 = vld [vmem:[#allocation2 + $0x80] sm:$0xff]
      %v406 = vld [vmem:[#allocation2 + $0x98] sm:$0xff]
      %v407 = vld [vmem:[#allocation2 + $0xb0] sm:$0xff]
      %v408 = vperm.slane %v381, 1
      %v409 = vmul.f32 %v400, %v408
      %v410 = vmul.f32 %v401, %v408
      %v411 = vmul.f32 %v402, %v408
      %v412 = vmul.f32 %v403, %v408
      %v413 = vmul.f32 %v404, %v408
      %v414 = vmul.f32 %v405, %v408
      %v415 = vmul.f32 %v406, %v408
      %v416 = vmul.f32 %v407, %v408
      %v417 = vadd.f32 %v392, %v409
      %v418 = vadd.f32 %v393, %v410
      %v419 = vadd.f32 %v394, %v411
      %v420 = vadd.f32 %v395, %v412
      %v421 = vadd.f32 %v396, %v413
      %v422 = vadd.f32 %v397, %v414
      %v423 = vadd.f32 %v398, %v415
      %v424 = vadd.f32 %v399, %v416
      %v425 = vld [vmem:[#allocation2 + $0x9] sm:$0xff]
      %v426 = vld [vmem:[#allocation2 + $0x21] sm:$0xff]
      %v427 = vld [vmem:[#allocation2 + $0x39] sm:$0xff]
      %v428 = vld [vmem:[#allocation2 + $0x51] sm:$0xff]
      %v429 = vld [vmem:[#allocation2 + $0x69] sm:$0xff]
      %v430 = vld [vmem:[#allocation2 + $0x81] sm:$0xff]
      %v431 = vld [vmem:[#allocation2 + $0x99] sm:$0xff]
      %v432 = vld [vmem:[#allocation2 + $0xb1] sm:$0xff]
      %v433 = vperm.slane %v381, 2
      %v434 = vmul.f32 %v425, %v433
      %v435 = vmul.f32 %v426, %v433
      %v436 = vmul.f32 %v427, %v433
      %v437 = vmul.f32 %v428, %v433
      %v438 = vmul.f32 %v429, %v433
      %v439 = vmul.f32 %v430, %v433
      %v440 = vmul.f32 %v431, %v433
      %v441 = vmul.f32 %v432, %v433
      %v442 = vadd.f32 %v417, %v434
      %v443 = vadd.f32 %v418, %v435
      %v444 = vadd.f32 %v419, %v436
      %v445 = vadd.f32 %v420, %v437
      %v446 = vadd.f32 %v421, %v438
      %v447 = vadd.f32 %v422, %v439
      %v448 = vadd.f32 %v423, %v440
      %v449 = vadd.f32 %v424, %v441
      %v450 = vld [vmem:[%s372 + $0x7] sm:$0xff]
      %v451 = vld [vmem:[%s372 + $0x1f] sm:$0xff]
      %v452 = vld [vmem:[%s372 + $0x37] sm:$0xff]
      %v453 = vld [vmem:[%s372 + $0x4f] sm:$0xff]
      %v454 = vld [vmem:[%s372 + $0x67] sm:$0xff]
      %v455 = vld [vmem:[%s372 + $0x7f] sm:$0xff]
      %v456 = vld [vmem:[%s372 + $0x97] sm:$0xff]
      %v457 = vld [vmem:[%s372 + $0xaf] sm:$0xff]
      %v458 = vperm.slane %v381, 3
      %v459 = vmul.f32 %v450, %v458
      %v460 = vmul.f32 %v451, %v458
      %v461 = vmul.f32 %v452, %v458
      %v462 = vmul.f32 %v453, %v458
      %v463 = vmul.f32 %v454, %v458
      %v464 = vmul.f32 %v455, %v458
      %v465 = vmul.f32 %v456, %v458
      %v466 = vmul.f32 %v457, %v458
      %v467 = vadd.f32 %v442, %v459
      %v468 = vadd.f32 %v443, %v460
      %v469 = vadd.f32 %v444, %v461
      %v470 = vadd.f32 %v445, %v462
      %v471 = vadd.f32 %v446, %v463
      %v472 = vadd.f32 %v447, %v464
      %v473 = vadd.f32 %v448, %v465
      %v474 = vadd.f32 %v449, %v466
      %v475 = vld [vmem:[%s372 + $0x8] sm:$0xff]
      %v476 = vld [vmem:[%s372 + $0x20] sm:$0xff]
      %v477 = vld [vmem:[%s372 + $0x38] sm:$0xff]
      %v478 = vld [vmem:[%s372 + $0x50] sm:$0xff]
      %v479 = vld [vmem:[%s372 + $0x68] sm:$0xff]
      %v480 = vld [vmem:[%s372 + $0x80] sm:$0xff]
      %v481 = vld [vmem:[%s372 + $0x98] sm:$0xff]
      %v482 = vld [vmem:[%s372 + $0xb0] sm:$0xff]
      %v483 = vperm.slane %v381, 4
      %v484 = vmul.f32 %v475, %v483
      %v485 = vmul.f32 %v476, %v483
      %v486 = vmul.f32 %v477, %v483
      %v487 = vmul.f32 %v478, %v483
      %v488 = vmul.f32 %v479, %v483
      %v489 = vmul.f32 %v480, %v483
      %v490 = vmul.f32 %v481, %v483
      %v491 = vmul.f32 %v482, %v483
      %v492 = vadd.f32 %v467, %v484
      %v493 = vadd.f32 %v468, %v485
      %v494 = vadd.f32 %v469, %v486
      %v495 = vadd.f32 %v470, %v487
      %v496 = vadd.f32 %v471, %v488
      %v497 = vadd.f32 %v472, %v489
      %v498 = vadd.f32 %v473, %v490
      %v499 = vadd.f32 %v474, %v491
      %v500 = vld [vmem:[%s372 + $0x9] sm:$0xff]
      %v501 = vld [vmem:[%s372 + $0x21] sm:$0xff]
      %v502 = vld [vmem:[%s372 + $0x39] sm:$0xff]
      %v503 = vld [vmem:[%s372 + $0x51] sm:$0xff]
      %v504 = vld [vmem:[%s372 + $0x69] sm:$0xff]
      %v505 = vld [vmem:[%s372 + $0x81] sm:$0xff]
      %v506 = vld [vmem:[%s372 + $0x99] sm:$0xff]
      %v507 = vld [vmem:[%s372 + $0xb1] sm:$0xff]
      %v508 = vperm.slane %v381, 5
      %v509 = vmul.f32 %v500, %v508
      %v510 = vmul.f32 %v501, %v508
      %v511 = vmul.f32 %v502, %v508
      %v512 = vmul.f32 %v503, %v508
      %v513 = vmul.f32 %v504, %v508
      %v514 = vmul.f32 %v505, %v508
      %v515 = vmul.f32 %v506, %v508
      %v516 = vmul.f32 %v507, %v508
      %v517 = vadd.f32 %v492, %v509
      %v518 = vadd.f32 %v493, %v510
      %v519 = vadd.f32 %v494, %v511
      %v520 = vadd.f32 %v495, %v512
      %v521 = vadd.f32 %v496, %v513
      %v522 = vadd.f32 %v497, %v514
      %v523 = vadd.f32 %v498, %v515
      %v524 = vadd.f32 %v499, %v516
      %s525 = scalar_lea.vmem [#allocation2], 48
      %v526 = vld [vmem:[%s525 + $0x7] sm:$0xff]
      %v527 = vld [vmem:[%s525 + $0x1f] sm:$0xff]
      %v528 = vld [vmem:[%s525 + $0x37] sm:$0xff]
      %v529 = vld [vmem:[%s525 + $0x4f] sm:$0xff]
      %v530 = vld [vmem:[%s525 + $0x67] sm:$0xff]
      %v531 = vld [vmem:[%s525 + $0x7f] sm:$0xff]
      %v532 = vld [vmem:[%s525 + $0x97] sm:$0xff]
      %v533 = vld [vmem:[%s525 + $0xaf] sm:$0xff]
      %v534 = vperm.slane %v381, 6
      %v535 = vmul.f32 %v526, %v534
      %v536 = vmul.f32 %v527, %v534
      %v537 = vmul.f32 %v528, %v534
      %v538 = vmul.f32 %v529, %v534
      %v539 = vmul.f32 %v530, %v534
      %v540 = vmul.f32 %v531, %v534
      %v541 = vmul.f32 %v532, %v534
      %v542 = vmul.f32 %v533, %v534
      %v543 = vadd.f32 %v517, %v535
      %v544 = vadd.f32 %v518, %v536
      %v545 = vadd.f32 %v519, %v537
      %v546 = vadd.f32 %v520, %v538
      %v547 = vadd.f32 %v521, %v539
      %v548 = vadd.f32 %v522, %v540
      %v549 = vadd.f32 %v523, %v541
      %v550 = vadd.f32 %v524, %v542
      %v551 = vld [vmem:[%s525 + $0x8] sm:$0xff]
      %v552 = vld [vmem:[%s525 + $0x20] sm:$0xff]
      %v553 = vld [vmem:[%s525 + $0x38] sm:$0xff]
      %v554 = vld [vmem:[%s525 + $0x50] sm:$0xff]
      %v555 = vld [vmem:[%s525 + $0x68] sm:$0xff]
      %v556 = vld [vmem:[%s525 + $0x80] sm:$0xff]
      %v557 = vld [vmem:[%s525 + $0x98] sm:$0xff]
      %v558 = vld [vmem:[%s525 + $0xb0] sm:$0xff]
      %v559 = vperm.slane %v381, 7
      %v560 = vmul.f32 %v551, %v559
      %v561 = vmul.f32 %v552, %v559
      %v562 = vmul.f32 %v553, %v559
      %v563 = vmul.f32 %v554, %v559
      %v564 = vmul.f32 %v555, %v559
      %v565 = vmul.f32 %v556, %v559
      %v566 = vmul.f32 %v557, %v559
      %v567 = vmul.f32 %v558, %v559
      %v568 = vadd.f32 %v543, %v560
      %v569 = vadd.f32 %v544, %v561
      %v570 = vadd.f32 %v545, %v562
      %v571 = vadd.f32 %v546, %v563
      %v572 = vadd.f32 %v547, %v564
      %v573 = vadd.f32 %v548, %v565
      %v574 = vadd.f32 %v549, %v566
      %v575 = vadd.f32 %v550, %v567
      %v576 = vld [vmem:[%s525 + $0x9] sm:$0xff]
      %v577 = vld [vmem:[%s525 + $0x21] sm:$0xff]
      %v578 = vld [vmem:[%s525 + $0x39] sm:$0xff]
      %v579 = vld [vmem:[%s525 + $0x51] sm:$0xff]
      %v580 = vld [vmem:[%s525 + $0x69] sm:$0xff]
      %v581 = vld [vmem:[%s525 + $0x81] sm:$0xff]
      %v582 = vld [vmem:[%s525 + $0x99] sm:$0xff]
      %v583 = vld [vmem:[%s525 + $0xb1] sm:$0xff]
      %v584 = vperm.slane %v382, 0
      %v585 = vmul.f32 %v576, %v584
      %v586 = vmul.f32 %v577, %v584
      %v587 = vmul.f32 %v578, %v584
      %v588 = vmul.f32 %v579, %v584
      %v589 = vmul.f32 %v580, %v584
      %v590 = vmul.f32 %v581, %v584
      %v591 = vmul.f32 %v582, %v584
      %v592 = vmul.f32 %v583, %v584
      %v593 = vadd.f32 %v568, %v585
      %v594 = vadd.f32 %v569, %v586
      %v595 = vadd.f32 %v570, %v587
      %v596 = vadd.f32 %v571, %v588
      %v597 = vadd.f32 %v572, %v589
      %v598 = vadd.f32 %v573, %v590
      %v599 = vadd.f32 %v574, %v591
      %v600 = vadd.f32 %v575, %v592
      %v601 = vld [vmem:[%s2] sm:$0x1]
      %v603 = vperm.slane %v601, 0
      %v605 = vadd.f32 %v593, %v603
      %v606 = vadd.f32 %v594, %v603
      %v607 = vadd.f32 %v595, %v603
      %v608 = vadd.f32 %v596, %v603
      %v609 = vadd.f32 %v597, %v603
      %v610 = vadd.f32 %v598, %v603
      %v611 = vadd.f32 %v599, %v603
      %v612 = vadd.f32 %v600, %v603
      %v613 = vmax.f32 %v605, 0.0
      %v614 = vmax.f32 %v606, 0.0
      %v615 = vmax.f32 %v607, 0.0
      %v616 = vmax.f32 %v608, 0.0
      %v617 = vmax.f32 %v609, 0.0
      %v618 = vmax.f32 %v610, 0.0
      %v619 = vmax.f32 %v611, 0.0
      %v620 = vmax.f32 %v612, 0.0
      %v621 = vld [vmem:[%s3] sm:$0xff]
      %v622 = vld [vmem:[%s3 + $0x8] sm:$0xff]
      %v623 = vld [vmem:[%s4] sm:$0x1]
      %v624 = vld [vmem:[%s5] sm:$0xf]
      %v625 = vld [vmem:[%s6] sm:$0x1]
      %v626 = vld [vmem:[%s7] sm:$0xff]
      %v627 = vld [vmem:[%s7 + $0x8] sm:$0xff]
      %v628 = vld [vmem:[%s8] sm:$0x1]
      %v629 = vsel %vm341, %v613, 0.0
      %v630 = vsel %vm341, %v614, 0.0
      %v631 = vadd.f32 %v629, %v630
      %v632 = vsel %vm341, %v615, 0.0
      %v633 = vadd.f32 %v631, %v632
      %v634 = vsel %vm341, %v616, 0.0
      %v635 = vadd.f32 %v633, %v634
      %v636 = vsel %vm341, %v617, 0.0
      %v637 = vadd.f32 %v635, %v636
      %v638 = vsel %vm341, %v618, 0.0
      %v639 = vadd.f32 %v637, %v638
      %v640 = vsel %vm341, %v619, 0.0
      %v641 = vadd.f32 %v639, %v640
      %v642 = vsel %vm341, %v620, 0.0
      %v643 = vadd.f32 %v641, %v642
      %v644 = vsel %vm341, %v643, 0.0
      %v645 = vrot.slane %v644, 4
      %v646 = vadd.f32 %v644, %v645
      %v647 = vrot.slane %v646, 2
      %v648 = vadd.f32 %v646, %v647
      %v649 = vrot.slane %v648, 1
      %v650 = vadd.f32 %v648, %v649
      %v651 = vmul.f32 %v650, 0.015625
      %v653 = vsel %vm341, %v651, 0
      %655 = vmatpush.msra.mxu0 0.0
      %656 = vmatpush.msra.mxu0 0.0
      %657 = vmatpush.msra.mxu0 0.0
      %658 = vmatpush.msra.mxu0 0.0
      %659 = vmatpush.msra.mxu0 0.0
      %660 = vmatpush.msra.mxu0 0.0
      %661 = vmatpush.msra.mxu0 0.0
      %662 = vmatpush.msra.mxu0 0.0
      %663 = vmatpush.msra.mxu0 0.0
      %664 = vmatpush.msra.mxu0 0.0
      %665 = vmatpush.msra.mxu0 0.0
      %666 = vmatpush.msra.mxu0 0.0
      %667 = vmatpush.msra.mxu0 0.0
      %668 = vmatpush.msra.mxu0 0.0
      %669 = vmatpush.msra.mxu0 %v622
      %670 = vmatpush.msra.mxu0 %v621
      %671 = vmatmul.f32.gmra.mxu0 %v653
      %v672 = vpop.f32.mrf.mxu0
      %v673 = vadd.f32 %v623, %v672
      %674 = vdwg.mxu0
      %v675 = vmax.f32 %v673, 0.0
      %vm676 = vcmask 31744
      %v678 = vsel %vm676, %v675, 0
      %vm680 = vcmask 1043456
      %v682 = vsel %vm680, %v624, 0
      %684 = vmatpush.msra.mxu0 0.0
      %685 = vmatpush.msra.mxu0 0.0
      %686 = vmatpush.msra.mxu0 0.0
      %687 = vmatpush.msra.mxu0 0.0
      %688 = vmatpush.msra.mxu0 0.0
      %689 = vmatpush.msra.mxu0 0.0
      %690 = vmatpush.msra.mxu0 0.0
      %691 = vmatpush.msra.mxu0 0.0
      %692 = vmatpush.msra.mxu0 0.0
      %693 = vmatpush.msra.mxu0 0.0
      %694 = vmatpush.msra.mxu0 0.0
      %695 = vmatpush.msra.mxu0 0.0
      %696 = vmatpush.msra.mxu0 0.0
      %697 = vmatpush.msra.mxu0 0.0
      %698 = vmatpush.msra.mxu0 0.0
      %699 = vmatpush.msra.mxu0 %v682
      %700 = vmatmul.f32.gmra.mxu0 %v678
      %v701 = vpop.f32.mrf.mxu0
      %v702 = vadd.f32 %v625, %v701
      %703 = vdwg.mxu0
      %v704 = vxor.u32 %v702, 2147483648
      %v705 = vmul.f32 %v704, 1.442695
      %v706 = vpow.pop %v705
      %v707 = vadd.f32 %v706, 1.0
      %v708 = vrcp.pop %v707
      %v709 = vmul.f32 %v707, %v708
      %v710 = vsub.f32 1.0, %v709
      %v711 = vmul.f32 %v708, %v710
      %v712 = vadd.f32 %v708, %v711
      %vm713 = vweird.f32 %v707
      %vm714 = vweird.f32 %v708
      %vm715 = vmor %vm713, %vm714
      %v716 = vsel %vm715, %v708, %v712
      %v717 = vand.u32 2147483647, %v707
      %vm718 = vcmp.eq.f32.partialorder %v717, 8.507059e+37
      %v719 = vand.u32 %v707, 2147483648
      %v720 = vor.u32 1.1754944e-38, %v719
      %v721 = vsel %vm718, %v720, %v716
      %v722 = vmul.f32 1.0, %v721
      %v723 = vperm.slane %v722, 0
      %v724 = vmul.f32 %v613, %v723
      %v725 = vmul.f32 %v614, %v723
      %v726 = vmul.f32 %v615, %v723
      %v727 = vmul.f32 %v616, %v723
      %v728 = vmul.f32 %v617, %v723
      %v729 = vmul.f32 %v618, %v723
      %v730 = vmul.f32 %v619, %v723
      %v731 = vmul.f32 %v620, %v723
      %v733 = vperm.slane %v628, 0
      %v736 = vsel %vm341, %v724, 0
      %738 = vmatpush.msra.mxu0 0.0
      %739 = vmatpush.msra.mxu0 0.0
      %740 = vmatpush.msra.mxu0 0.0
      %741 = vmatpush.msra.mxu0 0.0
      %742 = vmatpush.msra.mxu0 0.0
      %743 = vmatpush.msra.mxu0 0.0
      %744 = vmatpush.msra.mxu0 0.0
      %745 = vmatpush.msra.mxu0 0.0
      %746 = vmatpush.msra.mxu0 0.0
      %747 = vmatpush.msra.mxu0 0.0
      %748 = vmatpush.msra.mxu0 0.0
      %749 = vmatpush.msra.mxu0 0.0
      %750 = vmatpush.msra.mxu0 0.0
      %751 = vmatpush.msra.mxu0 0.0
      %752 = vmatpush.msra.mxu0 %v627
      %753 = vmatpush.msra.mxu0 %v626
      %754 = vmatmul.f32.gmra.mxu0 %v736
      %v755 = vpop.f32.mrf.mxu0
      %v756 = vadd.f32 %v733, %v755
      %757 = vdwg.mxu0
      %v759 = vsel %vm341, %v725, 0
      %761 = vmatpush.msra.mxu0 0.0
      %762 = vmatpush.msra.mxu0 0.0
      %763 = vmatpush.msra.mxu0 0.0
      %764 = vmatpush.msra.mxu0 0.0
      %765 = vmatpush.msra.mxu0 0.0
      %766 = vmatpush.msra.mxu0 0.0
      %767 = vmatpush.msra.mxu0 0.0
      %768 = vmatpush.msra.mxu0 0.0
      %769 = vmatpush.msra.mxu0 0.0
      %770 = vmatpush.msra.mxu0 0.0
      %771 = vmatpush.msra.mxu0 0.0
      %772 = vmatpush.msra.mxu0 0.0
      %773 = vmatpush.msra.mxu0 0.0
      %774 = vmatpush.msra.mxu0 0.0
      %775 = vmatpush.msra.mxu0 %v627
      %776 = vmatpush.msra.mxu0 %v626
      %777 = vmatmul.f32.gmra.mxu0 %v759
      %v778 = vpop.f32.mrf.mxu0
      %v779 = vadd.f32 %v733, %v778
      %780 = vdwg.mxu0
      %v782 = vsel %vm341, %v726, 0
      %784 = vmatpush.msra.mxu0 0.0
      %785 = vmatpush.msra.mxu0 0.0
      %786 = vmatpush.msra.mxu0 0.0
      %787 = vmatpush.msra.mxu0 0.0
      %788 = vmatpush.msra.mxu0 0.0
      %789 = vmatpush.msra.mxu0 0.0
      %790 = vmatpush.msra.mxu0 0.0
      %791 = vmatpush.msra.mxu0 0.0
      %792 = vmatpush.msra.mxu0 0.0
      %793 = vmatpush.msra.mxu0 0.0
      %794 = vmatpush.msra.mxu0 0.0
      %795 = vmatpush.msra.mxu0 0.0
      %796 = vmatpush.msra.mxu0 0.0
      %797 = vmatpush.msra.mxu0 0.0
      %798 = vmatpush.msra.mxu0 %v627
      %799 = vmatpush.msra.mxu0 %v626
      %800 = vmatmul.f32.gmra.mxu0 %v782
      %v801 = vpop.f32.mrf.mxu0
      %v802 = vadd.f32 %v733, %v801
      %803 = vdwg.mxu0
      %v805 = vsel %vm341, %v727, 0
      %807 = vmatpush.msra.mxu0 0.0
      %808 = vmatpush.msra.mxu0 0.0
      %809 = vmatpush.msra.mxu0 0.0
      %810 = vmatpush.msra.mxu0 0.0
      %811 = vmatpush.msra.mxu0 0.0
      %812 = vmatpush.msra.mxu0 0.0
      %813 = vmatpush.msra.mxu0 0.0
      %814 = vmatpush.msra.mxu0 0.0
      %815 = vmatpush.msra.mxu0 0.0
      %816 = vmatpush.msra.mxu0 0.0
      %817 = vmatpush.msra.mxu0 0.0
      %818 = vmatpush.msra.mxu0 0.0
      %819 = vmatpush.msra.mxu0 0.0
      %820 = vmatpush.msra.mxu0 0.0
      %821 = vmatpush.msra.mxu0 %v627
      %822 = vmatpush.msra.mxu0 %v626
      %823 = vmatmul.f32.gmra.mxu0 %v805
      %v824 = vpop.f32.mrf.mxu0
      %v825 = vadd.f32 %v733, %v824
      %826 = vdwg.mxu0
      %v828 = vsel %vm341, %v728, 0
      %830 = vmatpush.msra.mxu0 0.0
      %831 = vmatpush.msra.mxu0 0.0
      %832 = vmatpush.msra.mxu0 0.0
      %833 = vmatpush.msra.mxu0 0.0
      %834 = vmatpush.msra.mxu0 0.0
      %835 = vmatpush.msra.mxu0 0.0
      %836 = vmatpush.msra.mxu0 0.0
      %837 = vmatpush.msra.mxu0 0.0
      %838 = vmatpush.msra.mxu0 0.0
      %839 = vmatpush.msra.mxu0 0.0
      %840 = vmatpush.msra.mxu0 0.0
      %841 = vmatpush.msra.mxu0 0.0
      %842 = vmatpush.msra.mxu0 0.0
      %843 = vmatpush.msra.mxu0 0.0
      %844 = vmatpush.msra.mxu0 %v627
      %845 = vmatpush.msra.mxu0 %v626
      %846 = vmatmul.f32.gmra.mxu0 %v828
      %v847 = vpop.f32.mrf.mxu0
      %v848 = vadd.f32 %v733, %v847
      %849 = vdwg.mxu0
      %v851 = vsel %vm341, %v729, 0
      %853 = vmatpush.msra.mxu0 0.0
      %854 = vmatpush.msra.mxu0 0.0
      %855 = vmatpush.msra.mxu0 0.0
      %856 = vmatpush.msra.mxu0 0.0
      %857 = vmatpush.msra.mxu0 0.0
      %858 = vmatpush.msra.mxu0 0.0
      %859 = vmatpush.msra.mxu0 0.0
      %860 = vmatpush.msra.mxu0 0.0
      %861 = vmatpush.msra.mxu0 0.0
      %862 = vmatpush.msra.mxu0 0.0
      %863 = vmatpush.msra.mxu0 0.0
      %864 = vmatpush.msra.mxu0 0.0
      %865 = vmatpush.msra.mxu0 0.0
      %866 = vmatpush.msra.mxu0 0.0
      %867 = vmatpush.msra.mxu0 %v627
      %868 = vmatpush.msra.mxu0 %v626
      %869 = vmatmul.f32.gmra.mxu0 %v851
      %v870 = vpop.f32.mrf.mxu0
      %v871 = vadd.f32 %v733, %v870
      %872 = vdwg.mxu0
      %v874 = vsel %vm341, %v730, 0
      %876 = vmatpush.msra.mxu0 0.0
      %877 = vmatpush.msra.mxu0 0.0
      %878 = vmatpush.msra.mxu0 0.0
      %879 = vmatpush.msra.mxu0 0.0
      %880 = vmatpush.msra.mxu0 0.0
      %881 = vmatpush.msra.mxu0 0.0
      %882 = vmatpush.msra.mxu0 0.0
      %883 = vmatpush.msra.mxu0 0.0
      %884 = vmatpush.msra.mxu0 0.0
      %885 = vmatpush.msra.mxu0 0.0
      %886 = vmatpush.msra.mxu0 0.0
      %887 = vmatpush.msra.mxu0 0.0
      %888 = vmatpush.msra.mxu0 0.0
      %889 = vmatpush.msra.mxu0 0.0
      %890 = vmatpush.msra.mxu0 %v627
      %891 = vmatpush.msra.mxu0 %v626
      %892 = vmatmul.f32.gmra.mxu0 %v874
      %v893 = vpop.f32.mrf.mxu0
      %v894 = vadd.f32 %v733, %v893
      %895 = vdwg.mxu0
      %v897 = vsel %vm341, %v731, 0
      %899 = vmatpush.msra.mxu0 0.0
      %900 = vmatpush.msra.mxu0 0.0
      %901 = vmatpush.msra.mxu0 0.0
      %902 = vmatpush.msra.mxu0 0.0
      %903 = vmatpush.msra.mxu0 0.0
      %904 = vmatpush.msra.mxu0 0.0
      %905 = vmatpush.msra.mxu0 0.0
      %906 = vmatpush.msra.mxu0 0.0
      %907 = vmatpush.msra.mxu0 0.0
      %908 = vmatpush.msra.mxu0 0.0
      %909 = vmatpush.msra.mxu0 0.0
      %910 = vmatpush.msra.mxu0 0.0
      %911 = vmatpush.msra.mxu0 0.0
      %912 = vmatpush.msra.mxu0 0.0
      %913 = vmatpush.msra.mxu0 %v627
      %914 = vmatpush.msra.mxu0 %v626
      %915 = vmatmul.f32.gmra.mxu0 %v897
      %v916 = vpop.f32.mrf.mxu0
      %v917 = vadd.f32 %v733, %v916
      %918 = vdwg.mxu0
      %v919 = vadd.f32 %v756, %v333
      %v920 = vadd.f32 %v779, %v334
      %v921 = vadd.f32 %v802, %v335
      %v922 = vadd.f32 %v825, %v336
      %v923 = vadd.f32 %v848, %v337
      %v924 = vadd.f32 %v871, %v338
      %v925 = vadd.f32 %v894, %v339
      %v926 = vadd.f32 %v917, %v340
      %927 = vst.msk [vmem:[%s332] sm:$0xff] %vm341, %v919
      %928 = vst.msk [vmem:[%s332 + $0x8] sm:$0xff] %vm341, %v920
      %929 = vst.msk [vmem:[%s332 + $0x10] sm:$0xff] %vm341, %v921
      %930 = vst.msk [vmem:[%s332 + $0x18] sm:$0xff] %vm341, %v922
      %931 = vst.msk [vmem:[%s332 + $0x20] sm:$0xff] %vm341, %v923
      %932 = vst.msk [vmem:[%s332 + $0x28] sm:$0xff] %vm341, %v924
      %933 = vst.msk [vmem:[%s332 + $0x30] sm:$0xff] %vm341, %v925
      %934 = vst.msk [vmem:[%s332 + $0x38] sm:$0xff] %vm341, %v926
      %p935 = scmp.lt.s32.totalorder %s20, 1
      %s936 = scalar_select %p935, %s20, 1
      %s937 = smul.addr %s936, 8
      %s938 = smul.addr %s937, 8
      %s939 = scalar_lea.vmem %s9, %s938
      // Predicated region
      $region57: #{_lambda_.7} parent=55 // pred_check
        %p940 = pneg %p232
      $region58: #{_lambda_.7} parent=55 // pred_check_branch
        %942 = sbr.rel (%p940) target = $region60
      $region59: #{_lambda_.7} parent=55 // pred_region
        _
      $region60: #{_lambda_.7} parent=55 // pred_fallthru
        _
    $region56: #{_lambda_.7} parent=5 // pred_fallthru
      _
    %p943 = scmp.le.s32.totalorder 2, %s15
    // Predicated region
    $region61: #{_lambda_.7} parent=5 // pred_check
      %p944 = pneg %p943
    $region62: #{_lambda_.7} parent=5 // pred_check_branch
      %946 = sbr.rel (%p944) target = $region64
    $region63: #{_lambda_.7} parent=5 // pred_region
      %s947 = ssub.s32 %s15, 2
      // Predicated region
      $region65: #{_lambda_.7} parent=63 // pred_check
        %p948 = pneg %p238
      $region66: #{_lambda_.7} parent=63 // pred_check_branch
        %950 = sbr.rel (%p948) target = $region68
      $region67: #{_lambda_.7} parent=63 // pred_region
        %p951 = scmp.lt.s32.totalorder %s21, 1
        %s952 = scalar_select %p951, %s21, 1
        %s953 = smul.addr %s952, 8
        %s954 = smul.addr %s953, 8
        %s955 = scalar_lea.vmem %s9, %s954
      $region68: #{_lambda_.7} parent=63 // pred_fallthru
        _
    $region64: #{_lambda_.7} parent=5 // pred_fallthru
      _
  $region6: #{_lambda_.7} parent=0 // loop_footer
    %s19 = sadd.s32 1, %s15
  $region7: #{_lambda_.7} parent=0 // loop_footer_branch
    %14 = sbr.rel target = $region3
  $region8: #{_lambda_.7} parent=0 // loop_exit
    _

// kernel: _lambda_.11
$region0: #{_lambda_.11}
  #allocation0 [shape = 'u32[]', space=smem, size = 0x4, offset = 0x4, fixed_abs, tag = 'smem constant byte address 0x4 - core index']
  #allocation1 [shape = 'u32[72,128]{1,0:T(1,128)}', space=vmem, size = 0x9000, scoped, tag = 'internal scratch']
  %s0 = inlined_call_operand.vmem [shape: f32[2,4,4,24], index: 0, kind: input, shape index: {}]
  %s1 = inlined_call_operand.vmem [shape: f32[24,64], index: 1, kind: input, shape index: {}]
  %s2 = inlined_call_operand.vmem [shape: f32[1,64], index: 2, kind: input, shape index: {}]
  %s3 = inlined_call_operand.vmem [shape: f32[64,10], index: 3, kind: input, shape index: {}]
  %s4 = inlined_call_operand.vmem [shape: f32[1,10], index: 4, kind: input, shape index: {}]
  %s5 = inlined_call_operand.hbm [shape: f32[2,10], index: 5, kind: output, shape index: {}]
  %s6 = sld [smem:[#allocation0]]
  $region30: #{_lambda_.11} parent=0
    _
  %s8 = ssub.s32 1, %s6
  %s9 = scalar_select 0, %s8, %s6
  $region1: #{_lambda_.11} parent=0
    #allocation2 [shape = 'u8[1024]{0}', space=vmem, size = 0x400, scoped, tag = 'output window, operand 0, single buffered']
    #allocation3 [shape = 's32[1]{0}', space=sflag, size = 0x4, scoped, tag = 'scoped memory for _lambda_.11']
    %10 = vsyncpa [#allocation3], 0
    // Predicated region
    $region2: #{_lambda_.11} parent=1 // pred_check
      _
    $region3: #{_lambda_.11} parent=1 // pred_check_branch
      %12 = sbr.rel (0) target = $region5
    $region4: #{_lambda_.11} parent=1 // pred_region
      _
    $region5: #{_lambda_.11} parent=1 // pred_fallthru
      _
    // Predicated region
    $region6: #{_lambda_.11} parent=1 // pred_check
      _
    $region7: #{_lambda_.11} parent=1 // pred_check_branch
      %14 = sbr.rel (0) target = $region9
    $region8: #{_lambda_.11} parent=1 // pred_region
      _
    $region9: #{_lambda_.11} parent=1 // pred_fallthru
      _
    // Predicated region
    $region10: #{_lambda_.11} parent=1 // pred_check
      _
    $region11: #{_lambda_.11} parent=1 // pred_check_branch
      %16 = sbr.rel (0) target = $region13
    $region12: #{_lambda_.11} parent=1 // pred_region
      _
    $region13: #{_lambda_.11} parent=1 // pred_fallthru
      _
    // Predicated region
    $region14: #{_lambda_.11} parent=1 // pred_check
      _
    $region15: #{_lambda_.11} parent=1 // pred_check_branch
      %18 = sbr.rel (0) target = $region17
    $region16: #{_lambda_.11} parent=1 // pred_region
      _
    $region17: #{_lambda_.11} parent=1 // pred_fallthru
      _
    // Predicated region
    $region18: #{_lambda_.11} parent=1 // pred_check
      _
    $region19: #{_lambda_.11} parent=1 // pred_check_branch
      %20 = sbr.rel (0) target = $region21
    $region20: #{_lambda_.11} parent=1 // pred_region
      _
    $region21: #{_lambda_.11} parent=1 // pred_fallthru
      _
    %v21 = vld [vmem:[%s0] sm:$0xf]
    %v22 = vld [vmem:[%s0 + $0x4] sm:$0xf]
    %v23 = vld [vmem:[%s0 + $0x8] sm:$0xf]
    %v24 = vld [vmem:[%s0 + $0xc] sm:$0xf]
    %v25 = vld [vmem:[%s0 + $0x10] sm:$0xf]
    %v26 = vld [vmem:[%s0 + $0x14] sm:$0xf]
    %v27 = vld [vmem:[%s0 + $0x18] sm:$0xf]
    %v28 = vld [vmem:[%s0 + $0x1c] sm:$0xf]
    %vm29 = vcmask 191488
    %v30 = vsel %vm29, %v21, 0.0
    %v31 = vsel %vm29, %v22, 0.0
    %v32 = vadd.f32 %v30, %v31
    %v33 = vsel %vm29, %v23, 0.0
    %v34 = vadd.f32 %v32, %v33
    %v35 = vsel %vm29, %v24, 0.0
    %v36 = vadd.f32 %v34, %v35
    %v37 = vsel %vm29, %v25, 0.0
    %v38 = vsel %vm29, %v26, 0.0
    %v39 = vadd.f32 %v37, %v38
    %v40 = vsel %vm29, %v27, 0.0
    %v41 = vadd.f32 %v39, %v40
    %v42 = vsel %vm29, %v28, 0.0
    %v43 = vadd.f32 %v41, %v42
    %v44 = vsel %vm29, %v36, 0.0
    %v45 = vrot.slane %v44, 4
    %v46 = vadd.f32 %v44, %v45
    %v47 = vrot.slane %v46, 2
    %v48 = vadd.f32 %v46, %v47
    %v49 = vrot.slane %v48, 1
    %v50 = vadd.f32 %v48, %v49
    %v51 = vsel %vm29, %v43, 0.0
    %v52 = vrot.slane %v51, 4
    %v53 = vadd.f32 %v51, %v52
    %v54 = vrot.slane %v53, 2
    %v55 = vadd.f32 %v53, %v54
    %v56 = vrot.slane %v55, 1
    %v57 = vadd.f32 %v55, %v56
    %v58 = vmul.f32 %v50, 0.0625
    %v59 = vmul.f32 %v57, 0.0625
    %v60 = vld [vmem:[%s1] sm:$0xff]
    %v61 = vld [vmem:[%s1 + $0x8] sm:$0xff]
    %v62 = vld [vmem:[%s1 + $0x10] sm:$0xff]
    %v63 = vld [vmem:[%s2] sm:$0x1]
    %v65 = vperm.slane %v63, 0
    %vm69 = vcmask 1041409
    %v70 = vsel %vm69, %v59, %v58
    %vm71 = vcmask 195584
    %v72 = vsel %vm71, %v70, 0
    %74 = vmatpush.msra.mxu0 0.0
    %75 = vmatpush.msra.mxu0 0.0
    %76 = vmatpush.msra.mxu0 0.0
    %77 = vmatpush.msra.mxu0 0.0
    %78 = vmatpush.msra.mxu0 0.0
    %79 = vmatpush.msra.mxu0 0.0
    %80 = vmatpush.msra.mxu0 0.0
    %81 = vmatpush.msra.mxu0 0.0
    %82 = vmatpush.msra.mxu0 0.0
    %83 = vmatpush.msra.mxu0 0.0
    %84 = vmatpush.msra.mxu0 0.0
    %85 = vmatpush.msra.mxu0 0.0
    %86 = vmatpush.msra.mxu0 0.0
    %87 = vmatpush.msra.mxu0 %v62
    %88 = vmatpush.msra.mxu0 %v61
    %89 = vmatpush.msra.mxu0 %v60
    %90 = vmatmul.f32.gmra.mxu0 %v72
    %v91 = vpop.f32.mrf.mxu0
    %v92 = vadd.f32 %v65, %v91
    %93 = vdwg.mxu0
    %v94 = vmax.f32 %v92, 0.0
    %v95 = vld [vmem:[%s3] sm:$0xff]
    %v96 = vld [vmem:[%s3 + $0x8] sm:$0xff]
    %v97 = vld [vmem:[%s3 + $0x10] sm:$0xff]
    %v98 = vld [vmem:[%s3 + $0x18] sm:$0xff]
    %v99 = vld [vmem:[%s3 + $0x20] sm:$0xff]
    %v100 = vld [vmem:[%s3 + $0x28] sm:$0xff]
    %v101 = vld [vmem:[%s3 + $0x30] sm:$0xff]
    %v102 = vld [vmem:[%s3 + $0x38] sm:$0xff]
    %v103 = vld [vmem:[%s4] sm:$0x1]
    %v105 = vperm.slane %v103, 0
    %vm107 = vcmask 523264
    %v109 = vsel %vm107, %v94, 0
    %111 = vmatpush.msra.mxu0 0.0
    %112 = vmatpush.msra.mxu0 0.0
    %113 = vmatpush.msra.mxu0 0.0
    %114 = vmatpush.msra.mxu0 0.0
    %115 = vmatpush.msra.mxu0 0.0
    %116 = vmatpush.msra.mxu0 0.0
    %117 = vmatpush.msra.mxu0 0.0
    %118 = vmatpush.msra.mxu0 0.0
    %119 = vmatpush.msra.mxu0 %v102
    %120 = vmatpush.msra.mxu0 %v101
    %121 = vmatpush.msra.mxu0 %v100
    %122 = vmatpush.msra.mxu0 %v99
    %123 = vmatpush.msra.mxu0 %v98
    %124 = vmatpush.msra.mxu0 %v97
    %125 = vmatpush.msra.mxu0 %v96
    %126 = vmatpush.msra.mxu0 %v95
    %127 = vmatmul.f32.gmra.mxu0 %v109
    %v128 = vpop.f32.mrf.mxu0
    %v129 = vadd.f32 %v105, %v128
    %130 = vdwg.mxu0
    %vm131 = vcmask 74752
    %132 = vst.msk [vmem:[#allocation2] sm:$0x3] %vm131, %v129
    // Predicated region
    $region22: #{_lambda_.11} parent=1 // pred_check
      _
    $region23: #{_lambda_.11} parent=1 // pred_check_branch
      %134 = sbr.rel (0) target = $region25
    $region24: #{_lambda_.11} parent=1 // pred_region
      %136 = vsyncadd [#allocation3], 0
      %s138 = sshll.u32 [#allocation2], 4
      %s139 = int_to_ptr.vmem [resolvable:$true] %s138
      %s140 = sshll.u32 %s5, 4
      %s141 = int_to_ptr.hbm [resolvable:$true] %s140
      %143 = dma.vmem_to_hbm [thread:$0]  %s139, 32, %s141, [#allocation3]
    $region25: #{_lambda_.11} parent=1 // pred_fallthru
      _
    // Predicated region
    $region26: #{_lambda_.11} parent=1 // pred_check
      _
    $region27: #{_lambda_.11} parent=1 // pred_check_branch
      %145 = sbr.rel (0) target = $region29
    $region28: #{_lambda_.11} parent=1 // pred_region
      %147 = dma.done [#allocation3], 32
    $region29: #{_lambda_.11} parent=1 // pred_fallthru
      _
    %148 = vsyncpa [#allocation3], 1

// kernel: _lambda_.9
$region0: #{_lambda_.9}
  #allocation0 [shape = 'u32[]', space=smem, size = 0x4, offset = 0x4, fixed_abs, tag = 'smem constant byte address 0x4 - core index']
  #allocation1 [shape = 'u32[72,128]{1,0:T(1,128)}', space=vmem, size = 0x9000, scoped, tag = 'internal scratch']
  %s0 = inlined_call_operand.vmem [shape: f32[2,5,5,48], index: 0, kind: input, shape index: {}]
  %s1 = inlined_call_operand.vmem [shape: f32[2,5,5,48], index: 1, kind: input, shape index: {}]
  %s2 = inlined_call_operand.vmem [shape: f32[2,5,5,48], index: 2, kind: input, shape index: {}]
  %s3 = inlined_call_operand.vmem [shape: f32[2,5,5,48], index: 3, kind: input, shape index: {}]
  %s4 = inlined_call_operand.vmem [shape: f32[9,48], index: 4, kind: input, shape index: {}]
  %s5 = inlined_call_operand.vmem [shape: f32[1,48], index: 5, kind: input, shape index: {}]
  %s6 = inlined_call_operand.vmem [shape: f32[48,12], index: 6, kind: input, shape index: {}]
  %s7 = inlined_call_operand.vmem [shape: f32[1,12], index: 7, kind: input, shape index: {}]
  %s8 = inlined_call_operand.vmem [shape: f32[12,48], index: 8, kind: input, shape index: {}]
  %s9 = inlined_call_operand.vmem [shape: f32[1,48], index: 9, kind: input, shape index: {}]
  %s10 = inlined_call_operand.vmem [shape: f32[48,24], index: 10, kind: input, shape index: {}]
  %s11 = inlined_call_operand.vmem [shape: f32[1,24], index: 11, kind: input, shape index: {}]
  %s12 = inlined_call_operand.vmem [shape: f32[2,4,4,24], index: 12, kind: output, shape index: {}]
  %s13 = sld [smem:[#allocation0]]
  $region81: #{_lambda_.9} parent=0
    _
  %s15 = ssub.s32 1, %s13
  %s16 = scalar_select 0, %s15, %s13
  loop: start=0, step=1, limit=4
  $region2: #{_lambda_.9} parent=0 // loop_pre_header
    _
  $region3: #{_lambda_.9} parent=0 // loop_header
    %s18 = sphi 0, %s22
    %p19 = scmp.ge.s32.totalorder %s18, 4
    %s28 = sphi 0, %s30
    %s31 = sphi 0, %s28
    %s32 = sphi 0, %s31
    %s48 = sphi 0, %s32
    %s54 = sphi 0, %s56
    %s57 = sphi 0, %s54
    %s58 = sphi 0, %s57
    %s74 = sphi 0, %s58
    %s80 = sphi 0, %s82
    %s83 = sphi 0, %s80
    %s84 = sphi 0, %s83
    %s100 = sphi 0, %s84
    %s106 = sphi 0, %s108
    %s109 = sphi 0, %s106
    %s110 = sphi 0, %s109
    %s126 = sphi 0, %s110
    %s130 = sphi 0, %s130
    %s132 = sphi 0, %s130
    %s133 = sphi 0, %s132
    %s147 = sphi 0, %s133
    %s151 = sphi 0, %s151
    %s153 = sphi 0, %s151
    %s154 = sphi 0, %s153
    %s168 = sphi 0, %s154
    %s172 = sphi 0, %s172
    %s174 = sphi 0, %s172
    %s175 = sphi 0, %s174
    %s189 = sphi 0, %s175
    %s193 = sphi 0, %s193
    %s195 = sphi 0, %s193
    %s196 = sphi 0, %s195
    %s210 = sphi 0, %s196
    %s214 = sphi 0, %s214
    %s216 = sphi 0, %s214
    %s217 = sphi 0, %s216
    %s231 = sphi 0, %s217
    %s235 = sphi 0, %s235
    %s237 = sphi 0, %s235
    %s238 = sphi 0, %s237
    %s252 = sphi 0, %s238
    %s256 = sphi 0, %s256
    %s258 = sphi 0, %s256
    %s259 = sphi 0, %s258
    %s273 = sphi 0, %s259
    %s277 = sphi 0, %s277
    %s279 = sphi 0, %s277
    %s280 = sphi 0, %s279
    %s294 = sphi 0, %s280
    %s300 = sphi 0, %s302
    %s303 = sphi 0, %s300
    %s304 = sphi 0, %s303
    %s320 = sphi 0, %s304
  $region4: #{_lambda_.9} parent=0 // loop_header_branch
    %21 = sbr.rel (%p19) target = $region8
  $region5: #{_lambda_.9} parent=0 // loop_body
    %s23 = ssub.s32 %s18, 1
    %s24 = ssub.s32 %s18, 2
    %s25 = sadd.s32 %s18, 1
    %s26 = ssub.s32 %s18, %s25
    %p27 = scmp.eq.s32.totalorder %s26, 0
    %s29 = sadd.s32 %s28, 1
    %s30 = scalar_select %p27, %s28, %s29
    %p33 = pneg %p27
    %p34 = scmp.eq.s32.totalorder %s18, 1
    %p35 = por %p33, %p34
    %p36 = scmp.ne.s32.totalorder %s28, %s31
    %p37 = scmp.eq.s32.totalorder %s18, 0
    %p38 = por %p36, %p37
    %p39 = scmp.ne.s32.totalorder %s28, %s31
    %p40 = scmp.eq.s32.totalorder %s23, 1
    %p41 = por %p39, %p40
    %p42 = scmp.ne.s32.totalorder %s31, %s32
    %p43 = scmp.eq.s32.totalorder %s23, 0
    %p44 = por %p42, %p43
    %p45 = scmp.ne.s32.totalorder %s31, %s32
    %p46 = scmp.eq.s32.totalorder %s24, 1
    %p47 = por %p45, %p46
    %p49 = scmp.ne.s32.totalorder %s32, %s48
    %p50 = scmp.eq.s32.totalorder %s24, 0
    %p51 = por %p49, %p50
    %s52 = ssub.s32 %s18, %s25
    %p53 = scmp.eq.s32.totalorder %s52, 0
    %s55 = sadd.s32 %s54, 1
    %s56 = scalar_select %p53, %s54, %s55
    %p59 = pneg %p53
    %p60 = scmp.eq.s32.totalorder %s18, 1
    %p61 = por %p59, %p60
    %p62 = scmp.ne.s32.totalorder %s54, %s57
    %p63 = scmp.eq.s32.totalorder %s18, 0
    %p64 = por %p62, %p63
    %p65 = scmp.ne.s32.totalorder %s54, %s57
    %p66 = scmp.eq.s32.totalorder %s23, 1
    %p67 = por %p65, %p66
    %p68 = scmp.ne.s32.totalorder %s57, %s58
    %p69 = scmp.eq.s32.totalorder %s23, 0
    %p70 = por %p68, %p69
    %p71 = scmp.ne.s32.totalorder %s57, %s58
    %p72 = scmp.eq.s32.totalorder %s24, 1
    %p73 = por %p71, %p72
    %p75 = scmp.ne.s32.totalorder %s58, %s74
    %p76 = scmp.eq.s32.totalorder %s24, 0
    %p77 = por %p75, %p76
    %s78 = ssub.s32 %s18, %s25
    %p79 = scmp.eq.s32.totalorder %s78, 0
    %s81 = sadd.s32 %s80, 1
    %s82 = scalar_select %p79, %s80, %s81
    %p85 = pneg %p79
    %p86 = scmp.eq.s32.totalorder %s18, 1
    %p87 = por %p85, %p86
    %p88 = scmp.ne.s32.totalorder %s80, %s83
    %p89 = scmp.eq.s32.totalorder %s18, 0
    %p90 = por %p88, %p89
    %p91 = scmp.ne.s32.totalorder %s80, %s83
    %p92 = scmp.eq.s32.totalorder %s23, 1
    %p93 = por %p91, %p92
    %p94 = scmp.ne.s32.totalorder %s83, %s84
    %p95 = scmp.eq.s32.totalorder %s23, 0
    %p96 = por %p94, %p95
    %p97 = scmp.ne.s32.totalorder %s83, %s84
    %p98 = scmp.eq.s32.totalorder %s24, 1
    %p99 = por %p97, %p98
    %p101 = scmp.ne.s32.totalorder %s84, %s100
    %p102 = scmp.eq.s32.totalorder %s24, 0
    %p103 = por %p101, %p102
    %s104 = ssub.s32 %s18, %s25
    %p105 = scmp.eq.s32.totalorder %s104, 0
    %s107 = sadd.s32 %s106, 1
    %s108 = scalar_select %p105, %s106, %s107
    %p111 = pneg %p105
    %p112 = scmp.eq.s32.totalorder %s18, 1
    %p113 = por %p111, %p112
    %p114 = scmp.ne.s32.totalorder %s106, %s109
    %p115 = scmp.eq.s32.totalorder %s18, 0
    %p116 = por %p114, %p115
    %p117 = scmp.ne.s32.totalorder %s106, %s109
    %p118 = scmp.eq.s32.totalorder %s23, 1
    %p119 = por %p117, %p118
    %p120 = scmp.ne.s32.totalorder %s109, %s110
    %p121 = scmp.eq.s32.totalorder %s23, 0
    %p122 = por %p120, %p121
    %p123 = scmp.ne.s32.totalorder %s109, %s110
    %p124 = scmp.eq.s32.totalorder %s24, 1
    %p125 = por %p123, %p124
    %p127 = scmp.ne.s32.totalorder %s110, %s126
    %p128 = scmp.eq.s32.totalorder %s24, 0
    %p129 = por %p127, %p128
    %s131 = sadd.s32 %s130, 1
    %p134 = scmp.eq.s32.totalorder %s18, 1
    %p135 = scmp.ne.s32.totalorder %s130, %s132
    %p136 = scmp.eq.s32.totalorder %s18, 0
    %p137 = por %p135, %p136
    %p138 = scmp.ne.s32.totalorder %s130, %s132
    %p139 = scmp.eq.s32.totalorder %s23, 1
    %p140 = por %p138, %p139
    %p141 = scmp.ne.s32.totalorder %s132, %s133
    %p142 = scmp.eq.s32.totalorder %s23, 0
    %p143 = por %p141, %p142
    %p144 = scmp.ne.s32.totalorder %s132, %s133
    %p145 = scmp.eq.s32.totalorder %s24, 1
    %p146 = por %p144, %p145
    %p148 = scmp.ne.s32.totalorder %s133, %s147
    %p149 = scmp.eq.s32.totalorder %s24, 0
    %p150 = por %p148, %p149
    %s152 = sadd.s32 %s151, 1
    %p155 = scmp.eq.s32.totalorder %s18, 1
    %p156 = scmp.ne.s32.totalorder %s151, %s153
    %p157 = scmp.eq.s32.totalorder %s18, 0
    %p158 = por %p156, %p157
    %p159 = scmp.ne.s32.totalorder %s151, %s153
    %p160 = scmp.eq.s32.totalorder %s23, 1
    %p161 = por %p159, %p160
    %p162 = scmp.ne.s32.totalorder %s153, %s154
    %p163 = scmp.eq.s32.totalorder %s23, 0
    %p164 = por %p162, %p163
    %p165 = scmp.ne.s32.totalorder %s153, %s154
    %p166 = scmp.eq.s32.totalorder %s24, 1
    %p167 = por %p165, %p166
    %p169 = scmp.ne.s32.totalorder %s154, %s168
    %p170 = scmp.eq.s32.totalorder %s24, 0
    %p171 = por %p169, %p170
    %s173 = sadd.s32 %s172, 1
    %p176 = scmp.eq.s32.totalorder %s18, 1
    %p177 = scmp.ne.s32.totalorder %s172, %s174
    %p178 = scmp.eq.s32.totalorder %s18, 0
    %p179 = por %p177, %p178
    %p180 = scmp.ne.s32.totalorder %s172, %s174
    %p181 = scmp.eq.s32.totalorder %s23, 1
    %p182 = por %p180, %p181
    %p183 = scmp.ne.s32.totalorder %s174, %s175
    %p184 = scmp.eq.s32.totalorder %s23, 0
    %p185 = por %p183, %p184
    %p186 = scmp.ne.s32.totalorder %s174, %s175
    %p187 = scmp.eq.s32.totalorder %s24, 1
    %p188 = por %p186, %p187
    %p190 = scmp.ne.s32.totalorder %s175, %s189
    %p191 = scmp.eq.s32.totalorder %s24, 0
    %p192 = por %p190, %p191
    %s194 = sadd.s32 %s193, 1
    %p197 = scmp.eq.s32.totalorder %s18, 1
    %p198 = scmp.ne.s32.totalorder %s193, %s195
    %p199 = scmp.eq.s32.totalorder %s18, 0
    %p200 = por %p198, %p199
    %p201 = scmp.ne.s32.totalorder %s193, %s195
    %p202 = scmp.eq.s32.totalorder %s23, 1
    %p203 = por %p201, %p202
    %p204 = scmp.ne.s32.totalorder %s195, %s196
    %p205 = scmp.eq.s32.totalorder %s23, 0
    %p206 = por %p204, %p205
    %p207 = scmp.ne.s32.totalorder %s195, %s196
    %p208 = scmp.eq.s32.totalorder %s24, 1
    %p209 = por %p207, %p208
    %p211 = scmp.ne.s32.totalorder %s196, %s210
    %p212 = scmp.eq.s32.totalorder %s24, 0
    %p213 = por %p211, %p212
    %s215 = sadd.s32 %s214, 1
    %p218 = scmp.eq.s32.totalorder %s18, 1
    %p219 = scmp.ne.s32.totalorder %s214, %s216
    %p220 = scmp.eq.s32.totalorder %s18, 0
    %p221 = por %p219, %p220
    %p222 = scmp.ne.s32.totalorder %s214, %s216
    %p223 = scmp.eq.s32.totalorder %s23, 1
    %p224 = por %p222, %p223
    %p225 = scmp.ne.s32.totalorder %s216, %s217
    %p226 = scmp.eq.s32.totalorder %s23, 0
    %p227 = por %p225, %p226
    %p228 = scmp.ne.s32.totalorder %s216, %s217
    %p229 = scmp.eq.s32.totalorder %s24, 1
    %p230 = por %p228, %p229
    %p232 = scmp.ne.s32.totalorder %s217, %s231
    %p233 = scmp.eq.s32.totalorder %s24, 0
    %p234 = por %p232, %p233
    %s236 = sadd.s32 %s235, 1
    %p239 = scmp.eq.s32.totalorder %s18, 1
    %p240 = scmp.ne.s32.totalorder %s235, %s237
    %p241 = scmp.eq.s32.totalorder %s18, 0
    %p242 = por %p240, %p241
    %p243 = scmp.ne.s32.totalorder %s235, %s237
    %p244 = scmp.eq.s32.totalorder %s23, 1
    %p245 = por %p243, %p244
    %p246 = scmp.ne.s32.totalorder %s237, %s238
    %p247 = scmp.eq.s32.totalorder %s23, 0
    %p248 = por %p246, %p247
    %p249 = scmp.ne.s32.totalorder %s237, %s238
    %p250 = scmp.eq.s32.totalorder %s24, 1
    %p251 = por %p249, %p250
    %p253 = scmp.ne.s32.totalorder %s238, %s252
    %p254 = scmp.eq.s32.totalorder %s24, 0
    %p255 = por %p253, %p254
    %s257 = sadd.s32 %s256, 1
    %p260 = scmp.eq.s32.totalorder %s18, 1
    %p261 = scmp.ne.s32.totalorder %s256, %s258
    %p262 = scmp.eq.s32.totalorder %s18, 0
    %p263 = por %p261, %p262
    %p264 = scmp.ne.s32.totalorder %s256, %s258
    %p265 = scmp.eq.s32.totalorder %s23, 1
    %p266 = por %p264, %p265
    %p267 = scmp.ne.s32.totalorder %s258, %s259
    %p268 = scmp.eq.s32.totalorder %s23, 0
    %p269 = por %p267, %p268
    %p270 = scmp.ne.s32.totalorder %s258, %s259
    %p271 = scmp.eq.s32.totalorder %s24, 1
    %p272 = por %p270, %p271
    %p274 = scmp.ne.s32.totalorder %s259, %s273
    %p275 = scmp.eq.s32.totalorder %s24, 0
    %p276 = por %p274, %p275
    %s278 = sadd.s32 %s277, 1
    %p281 = scmp.eq.s32.totalorder %s18, 1
    %p282 = scmp.ne.s32.totalorder %s277, %s279
    %p283 = scmp.eq.s32.totalorder %s18, 0
    %p284 = por %p282, %p283
    %p285 = scmp.ne.s32.totalorder %s277, %s279
    %p286 = scmp.eq.s32.totalorder %s23, 1
    %p287 = por %p285, %p286
    %p288 = scmp.ne.s32.totalorder %s279, %s280
    %p289 = scmp.eq.s32.totalorder %s23, 0
    %p290 = por %p288, %p289
    %p291 = scmp.ne.s32.totalorder %s279, %s280
    %p292 = scmp.eq.s32.totalorder %s24, 1
    %p293 = por %p291, %p292
    %p295 = scmp.ne.s32.totalorder %s280, %s294
    %p296 = scmp.eq.s32.totalorder %s24, 0
    %p297 = por %p295, %p296
    %s298 = ssub.s32 %s18, %s25
    %p299 = scmp.eq.s32.totalorder %s298, 0
    %s301 = sadd.s32 %s300, 1
    %s302 = scalar_select %p299, %s300, %s301
    %p305 = pneg %p299
    %p306 = scmp.eq.s32.totalorder %s18, 1
    %p307 = por %p305, %p306
    %p308 = scmp.ne.s32.totalorder %s300, %s303
    %p309 = scmp.eq.s32.totalorder %s18, 0
    %p310 = por %p308, %p309
    %p311 = scmp.ne.s32.totalorder %s300, %s303
    %p312 = scmp.eq.s32.totalorder %s23, 1
    %p313 = por %p311, %p312
    %p314 = scmp.ne.s32.totalorder %s303, %s304
    %p315 = scmp.eq.s32.totalorder %s23, 0
    %p316 = por %p314, %p315
    %p317 = scmp.ne.s32.totalorder %s303, %s304
    %p318 = scmp.eq.s32.totalorder %s24, 1
    %p319 = por %p317, %p318
    %p321 = scmp.ne.s32.totalorder %s304, %s320
    %p322 = scmp.eq.s32.totalorder %s24, 0
    %p323 = por %p321, %p322
    %p324 = scmp.le.s32.totalorder 1, %s18
    %p325 = scmp.lt.s32.totalorder %s18, 3
    %p326 = pnand %p324, %p325
    %p327 = pneg %p326
    // Predicated region
    $region9: #{_lambda_.9} parent=5 // pred_check
      _
    $region10: #{_lambda_.9} parent=5 // pred_check_branch
      %329 = sbr.rel (%p326) target = $region12
    $region11: #{_lambda_.9} parent=5 // pred_region
      %s330 = ssub.s32 %s18, 1
      // Predicated region
      $region13: #{_lambda_.9} parent=11 // pred_check
        %p331 = pneg %p143
      $region14: #{_lambda_.9} parent=11 // pred_check_branch
        %333 = sbr.rel (%p331) target = $region16
      $region15: #{_lambda_.9} parent=11 // pred_region
        _
      $region16: #{_lambda_.9} parent=11 // pred_fallthru
        _
      // Predicated region
      $region17: #{_lambda_.9} parent=11 // pred_check
        %p334 = pneg %p164
      $region18: #{_lambda_.9} parent=11 // pred_check_branch
        %336 = sbr.rel (%p334) target = $region20
      $region19: #{_lambda_.9} parent=11 // pred_region
        _
      $region20: #{_lambda_.9} parent=11 // pred_fallthru
        _
      // Predicated region
      $region21: #{_lambda_.9} parent=11 // pred_check
        %p337 = pneg %p185
      $region22: #{_lambda_.9} parent=11 // pred_check_branch
        %339 = sbr.rel (%p337) target = $region24
      $region23: #{_lambda_.9} parent=11 // pred_region
        _
      $region24: #{_lambda_.9} parent=11 // pred_fallthru
        _
      // Predicated region
      $region25: #{_lambda_.9} parent=11 // pred_check
        %p340 = pneg %p206
      $region26: #{_lambda_.9} parent=11 // pred_check_branch
        %342 = sbr.rel (%p340) target = $region28
      $region27: #{_lambda_.9} parent=11 // pred_region
        _
      $region28: #{_lambda_.9} parent=11 // pred_fallthru
        _
      // Predicated region
      $region29: #{_lambda_.9} parent=11 // pred_check
        %p343 = pneg %p227
      $region30: #{_lambda_.9} parent=11 // pred_check_branch
        %345 = sbr.rel (%p343) target = $region32
      $region31: #{_lambda_.9} parent=11 // pred_region
        _
      $region32: #{_lambda_.9} parent=11 // pred_fallthru
        _
      // Predicated region
      $region33: #{_lambda_.9} parent=11 // pred_check
        %p346 = pneg %p248
      $region34: #{_lambda_.9} parent=11 // pred_check_branch
        %348 = sbr.rel (%p346) target = $region36
      $region35: #{_lambda_.9} parent=11 // pred_region
        _
      $region36: #{_lambda_.9} parent=11 // pred_fallthru
        _
      // Predicated region
      $region37: #{_lambda_.9} parent=11 // pred_check
        %p349 = pneg %p269
      $region38: #{_lambda_.9} parent=11 // pred_check_branch
        %351 = sbr.rel (%p349) target = $region40
      $region39: #{_lambda_.9} parent=11 // pred_region
        _
      $region40: #{_lambda_.9} parent=11 // pred_fallthru
        _
      // Predicated region
      $region41: #{_lambda_.9} parent=11 // pred_check
        %p352 = pneg %p290
      $region42: #{_lambda_.9} parent=11 // pred_check_branch
        %354 = sbr.rel (%p352) target = $region44
      $region43: #{_lambda_.9} parent=11 // pred_region
        _
      $region44: #{_lambda_.9} parent=11 // pred_fallthru
        _
    $region12: #{_lambda_.9} parent=5 // pred_fallthru
      _
    %p355 = scmp.lt.s32.totalorder %s18, 2
    // Predicated region
    $region45: #{_lambda_.9} parent=5 // pred_check
      %p356 = pneg %p355
    $region46: #{_lambda_.9} parent=5 // pred_check_branch
      %358 = sbr.rel (%p356) target = $region48
    $region47: #{_lambda_.9} parent=5 // pred_region
      // Predicated region
      $region49: #{_lambda_.9} parent=47 // pred_check
        %p359 = pneg %p38
      $region50: #{_lambda_.9} parent=47 // pred_check_branch
        %361 = sbr.rel (%p359) target = $region52
      $region51: #{_lambda_.9} parent=47 // pred_region
        %p362 = scmp.lt.s32.totalorder %s18, 1
        %s363 = scalar_select %p362, %s18, 1
        %s364 = smul.addr %s363, 5
        %s365 = smul.addr %s364, 8
        %s366 = scalar_lea.vmem %s0, %s365
      $region52: #{_lambda_.9} parent=47 // pred_fallthru
        _
      // Predicated region
      $region53: #{_lambda_.9} parent=47 // pred_check
        %p367 = pneg %p64
      $region54: #{_lambda_.9} parent=47 // pred_check_branch
        %369 = sbr.rel (%p367) target = $region56
      $region55: #{_lambda_.9} parent=47 // pred_region
        %p370 = scmp.lt.s32.totalorder %s18, 1
        %s371 = scalar_select %p370, %s18, 1
        %s372 = smul.addr %s371, 5
        %s373 = smul.addr %s372, 8
        %s374 = scalar_lea.vmem %s1, %s373
      $region56: #{_lambda_.9} parent=47 // pred_fallthru
        _
      // Predicated region
      $region57: #{_lambda_.9} parent=47 // pred_check
        %p375 = pneg %p90
      $region58: #{_lambda_.9} parent=47 // pred_check_branch
        %377 = sbr.rel (%p375) target = $region60
      $region59: #{_lambda_.9} parent=47 // pred_region
        %p378 = scmp.lt.s32.totalorder %s18, 1
        %s379 = scalar_select %p378, %s18, 1
        %s380 = smul.addr %s379, 5
        %s381 = smul.addr %s380, 8
        %s382 = scalar_lea.vmem %s2, %s381
      $region60: #{_lambda_.9} parent=47 // pred_fallthru
        _
      // Predicated region
      $region61: #{_lambda_.9} parent=47 // pred_check
        %p383 = pneg %p116
      $region62: #{_lambda_.9} parent=47 // pred_check_branch
        %385 = sbr.rel (%p383) target = $region64
      $region63: #{_lambda_.9} parent=47 // pred_region
        %p386 = scmp.lt.s32.totalorder %s18, 1
        %s387 = scalar_select %p386, %s18, 1
        %s388 = smul.addr %s387, 5
        %s389 = smul.addr %s388, 8
        %s390 = scalar_lea.vmem %s3, %s389
      $region64: #{_lambda_.9} parent=47 // pred_fallthru
        _
    $region48: #{_lambda_.9} parent=5 // pred_fallthru
      _
    %p391 = scmp.le.s32.totalorder 1, %s18
    %p392 = scmp.lt.s32.totalorder %s18, 3
    %p393 = pnand %p391, %p392
    %p394 = pneg %p393
    // Predicated region
    $region65: #{_lambda_.9} parent=5 // pred_check
      _
    $region66: #{_lambda_.9} parent=5 // pred_check_branch
      %396 = sbr.rel (%p393) target = $region68
    $region67: #{_lambda_.9} parent=5 // pred_region
      %s397 = ssub.s32 %s18, 1
      %p398 = scmp.lt.s32.totalorder %s23, 1
      %s399 = scalar_select %p398, %s23, 1
      %s400 = smul.addr %s399, 5
      %s401 = smul.addr %s400, 8
      %s402 = scalar_lea.vmem %s0, %s401
      %p403 = pneg %p44
      %p404 = pneg %p41
      %p405 = scmp.lt.s32.totalorder %s23, 1
      %s406 = scalar_select %p405, %s23, 1
      %s407 = smul.addr %s406, 5
      %s408 = smul.addr %s407, 8
      %s409 = scalar_lea.vmem %s1, %s408
      %p410 = pneg %p70
      %p411 = pneg %p67
      %p412 = scmp.lt.s32.totalorder %s23, 1
      %s413 = scalar_select %p412, %s23, 1
      %s414 = smul.addr %s413, 5
      %s415 = smul.addr %s414, 8
      %s416 = scalar_lea.vmem %s2, %s415
      %p417 = pneg %p96
      %p418 = pneg %p93
      %p419 = scmp.lt.s32.totalorder %s23, 1
      %s420 = scalar_select %p419, %s23, 1
      %s421 = smul.addr %s420, 5
      %s422 = smul.addr %s421, 8
      %s423 = scalar_lea.vmem %s3, %s422
      %p424 = pneg %p122
      %p425 = pneg %p119
      %p426 = pneg %p143
      %p427 = pneg %p140
      %p428 = pneg %p164
      %p429 = pneg %p161
      %p430 = pneg %p185
      %p431 = pneg %p182
      %p432 = pneg %p206
      %p433 = pneg %p203
      %p434 = pneg %p227
      %p435 = pneg %p224
      %p436 = pneg %p248
      %p437 = pneg %p245
      %p438 = pneg %p269
      %p439 = pneg %p266
      %p440 = pneg %p290
      %p441 = pneg %p287
      %p442 = pneg %p316
      %p443 = pneg %p313
      %p444 = scmp.lt.s32.totalorder %s23, 1
      %s445 = scalar_select %p444, %s23, 1
      %s446 = smul.addr %s445, 4
      %s447 = smul.addr %s446, 4
      %s448 = scalar_lea.vmem %s12, %s447
      %p449 = scmp.lt.s32.totalorder %s23, 1
      %s450 = scalar_select %p449, %s23, 1
      %s451 = smul.addr %s450, 5
      %s452 = smul.addr %s451, 8
      %s453 = scalar_lea.vmem %s0, %s452
      %p454 = scmp.lt.s32.totalorder %s23, 1
      %s455 = scalar_select %p454, %s23, 1
      %s456 = smul.addr %s455, 5
      %s457 = smul.addr %s456, 8
      %s458 = scalar_lea.vmem %s1, %s457
      %p459 = scmp.lt.s32.totalorder %s23, 1
      %s460 = scalar_select %p459, %s23, 1
      %s461 = smul.addr %s460, 5
      %s462 = smul.addr %s461, 8
      %s463 = scalar_lea.vmem %s2, %s462
      %p464 = scmp.lt.s32.totalorder %s23, 1
      %s465 = scalar_select %p464, %s23, 1
      %s466 = smul.addr %s465, 5
      %s467 = smul.addr %s466, 8
      %s468 = scalar_lea.vmem %s3, %s467
      %p469 = scmp.lt.s32.totalorder %s23, 1
      %s470 = scalar_select %p469, %s23, 1
      %s471 = smul.addr %s470, 4
      %s472 = smul.addr %s471, 4
      %s473 = scalar_lea.vmem %s12, %s472
      %v474 = vld [vmem:[%s4] sm:$0xff]
      %v475 = vld [vmem:[%s4 + $0x8] sm:$0x1]
      %v476 = vld [vmem:[%s453] sm:$0xf]
      %v477 = vld [vmem:[%s453 + $0x8] sm:$0xf]
      %v478 = vld [vmem:[%s453 + $0x10] sm:$0xf]
      %v479 = vld [vmem:[%s453 + $0x18] sm:$0xf]
      %v480 = vperm.slane %v474, 0
      %v481 = vmul.f32 %v476, %v480
      %v482 = vmul.f32 %v477, %v480
      %v483 = vmul.f32 %v478, %v480
      %v484 = vmul.f32 %v479, %v480
      %v485 = vld [vmem:[%s458] sm:$0xf]
      %v486 = vld [vmem:[%s458 + $0x8] sm:$0xf]
      %v487 = vld [vmem:[%s458 + $0x10] sm:$0xf]
      %v488 = vld [vmem:[%s458 + $0x18] sm:$0xf]
      %v489 = vperm.slane %v474, 1
      %v490 = vmul.f32 %v485, %v489
      %v491 = vmul.f32 %v486, %v489
      %v492 = vmul.f32 %v487, %v489
      %v493 = vmul.f32 %v488, %v489
      %v494 = vadd.f32 %v481, %v490
      %v495 = vadd.f32 %v482, %v491
      %v496 = vadd.f32 %v483, %v492
      %v497 = vadd.f32 %v484, %v493
      %v498 = vld [vmem:[%s453 + $0x1] sm:$0xf]
      %v499 = vld [vmem:[%s453 + $0x9] sm:$0xf]
      %v500 = vld [vmem:[%s453 + $0x11] sm:$0xf]
      %v501 = vld [vmem:[%s453 + $0x19] sm:$0xf]
      %v502 = vperm.slane %v474, 2
      %v503 = vmul.f32 %v498, %v502
      %v504 = vmul.f32 %v499, %v502
      %v505 = vmul.f32 %v500, %v502
      %v506 = vmul.f32 %v501, %v502
      %v507 = vadd.f32 %v494, %v503
      %v508 = vadd.f32 %v495, %v504
      %v509 = vadd.f32 %v496, %v505
      %v510 = vadd.f32 %v497, %v506
      %v511 = vld [vmem:[%s463] sm:$0xf]
      %v512 = vld [vmem:[%s463 + $0x8] sm:$0xf]
      %v513 = vld [vmem:[%s463 + $0x10] sm:$0xf]
      %v514 = vld [vmem:[%s463 + $0x18] sm:$0xf]
      %v515 = vperm.slane %v474, 3
      %v516 = vmul.f32 %v511, %v515
      %v517 = vmul.f32 %v512, %v515
      %v518 = vmul.f32 %v513, %v515
      %v519 = vmul.f32 %v514, %v515
      %v520 = vadd.f32 %v507, %v516
      %v521 = vadd.f32 %v508, %v517
      %v522 = vadd.f32 %v509, %v518
      %v523 = vadd.f32 %v510, %v519
      %v524 = vld [vmem:[%s468] sm:$0xf]
      %v525 = vld [vmem:[%s468 + $0x8] sm:$0xf]
      %v526 = vld [vmem:[%s468 + $0x10] sm:$0xf]
      %v527 = vld [vmem:[%s468 + $0x18] sm:$0xf]
      %v528 = vperm.slane %v474, 4
      %v529 = vmul.f32 %v524, %v528
      %v530 = vmul.f32 %v525, %v528
      %v531 = vmul.f32 %v526, %v528
      %v532 = vmul.f32 %v527, %v528
      %v533 = vadd.f32 %v520, %v529
      %v534 = vadd.f32 %v521, %v530
      %v535 = vadd.f32 %v522, %v531
      %v536 = vadd.f32 %v523, %v532
      %v537 = vld [vmem:[%s463 + $0x1] sm:$0xf]
      %v538 = vld [vmem:[%s463 + $0x9] sm:$0xf]
      %v539 = vld [vmem:[%s463 + $0x11] sm:$0xf]
      %v540 = vld [vmem:[%s463 + $0x19] sm:$0xf]
      %v541 = vperm.slane %v474, 5
      %v542 = vmul.f32 %v537, %v541
      %v543 = vmul.f32 %v538, %v541
      %v544 = vmul.f32 %v539, %v541
      %v545 = vmul.f32 %v540, %v541
      %v546 = vadd.f32 %v533, %v542
      %v547 = vadd.f32 %v534, %v543
      %v548 = vadd.f32 %v535, %v544
      %v549 = vadd.f32 %v536, %v545
      %s550 = scalar_lea.vmem %s453, 8
      %v551 = vld [vmem:[%s550] sm:$0xf]
      %v552 = vld [vmem:[%s550 + $0x8] sm:$0xf]
      %v553 = vld [vmem:[%s550 + $0x10] sm:$0xf]
      %v554 = vld [vmem:[%s550 + $0x18] sm:$0xf]
      %v555 = vperm.slane %v474, 6
      %v556 = vmul.f32 %v551, %v555
      %v557 = vmul.f32 %v552, %v555
      %v558 = vmul.f32 %v553, %v555
      %v559 = vmul.f32 %v554, %v555
      %v560 = vadd.f32 %v546, %v556
      %v561 = vadd.f32 %v547, %v557
      %v562 = vadd.f32 %v548, %v558
      %v563 = vadd.f32 %v549, %v559
      %s564 = scalar_lea.vmem %s458, 8
      %v565 = vld [vmem:[%s564] sm:$0xf]
      %v566 = vld [vmem:[%s564 + $0x8] sm:$0xf]
      %v567 = vld [vmem:[%s564 + $0x10] sm:$0xf]
      %v568 = vld [vmem:[%s564 + $0x18] sm:$0xf]
      %v569 = vperm.slane %v474, 7
      %v570 = vmul.f32 %v565, %v569
      %v571 = vmul.f32 %v566, %v569
      %v572 = vmul.f32 %v567, %v569
      %v573 = vmul.f32 %v568, %v569
      %v574 = vadd.f32 %v560, %v570
      %v575 = vadd.f32 %v561, %v571
      %v576 = vadd.f32 %v562, %v572
      %v577 = vadd.f32 %v563, %v573
      %v578 = vld [vmem:[%s550 + $0x1] sm:$0xf]
      %v579 = vld [vmem:[%s550 + $0x9] sm:$0xf]
      %v580 = vld [vmem:[%s550 + $0x11] sm:$0xf]
      %v581 = vld [vmem:[%s550 + $0x19] sm:$0xf]
      %v582 = vperm.slane %v475, 0
      %v583 = vmul.f32 %v578, %v582
      %v584 = vmul.f32 %v579, %v582
      %v585 = vmul.f32 %v580, %v582
      %v586 = vmul.f32 %v581, %v582
      %v587 = vadd.f32 %v574, %v583
      %v588 = vadd.f32 %v575, %v584
      %v589 = vadd.f32 %v576, %v585
      %v590 = vadd.f32 %v577, %v586
      %v591 = vld [vmem:[%s5] sm:$0x1]
      %v593 = vperm.slane %v591, 0
      %v595 = vadd.f32 %v587, %v593
      %v596 = vadd.f32 %v588, %v593
      %v597 = vadd.f32 %v589, %v593
      %v598 = vadd.f32 %v590, %v593
      %v599 = vmax.f32 %v595, 0.0
      %v600 = vmax.f32 %v596, 0.0
      %v601 = vmax.f32 %v597, 0.0
      %v602 = vmax.f32 %v598, 0.0
      %v603 = vld [vmem:[%s6] sm:$0xff]
      %v604 = vld [vmem:[%s6 + $0x8] sm:$0xff]
      %v605 = vld [vmem:[%s6 + $0x10] sm:$0xff]
      %v606 = vld [vmem:[%s6 + $0x18] sm:$0xff]
      %v607 = vld [vmem:[%s6 + $0x20] sm:$0xff]
      %v608 = vld [vmem:[%s6 + $0x28] sm:$0xff]
      %v609 = vld [vmem:[%s7] sm:$0x1]
      %v610 = vld [vmem:[%s8] sm:$0xff]
      %v611 = vld [vmem:[%s8 + $0x8] sm:$0xf]
      %v612 = vld [vmem:[%s9] sm:$0x1]
      %v613 = vld [vmem:[%s10] sm:$0xff]
      %v614 = vld [vmem:[%s10 + $0x8] sm:$0xff]
      %v615 = vld [vmem:[%s10 + $0x10] sm:$0xff]
      %v616 = vld [vmem:[%s10 + $0x18] sm:$0xff]
      %v617 = vld [vmem:[%s10 + $0x20] sm:$0xff]
      %v618 = vld [vmem:[%s10 + $0x28] sm:$0xff]
      %v619 = vld [vmem:[%s11] sm:$0x1]
      %vm620 = vcmask 388096
      %v621 = vsel %vm620, %v599, 0.0
      %v622 = vsel %vm620, %v600, 0.0
      %v623 = vadd.f32 %v621, %v622
      %v624 = vsel %vm620, %v601, 0.0
      %v625 = vadd.f32 %v623, %v624
      %v626 = vsel %vm620, %v602, 0.0
      %v627 = vadd.f32 %v625, %v626
      %v628 = vsel %vm620, %v627, 0.0
      %v629 = vrot.slane %v628, 4
      %v630 = vadd.f32 %v628, %v629
      %v631 = vrot.slane %v630, 2
      %v632 = vadd.f32 %v630, %v631
      %v633 = vrot.slane %v632, 1
      %v634 = vadd.f32 %v632, %v633
      %v635 = vmul.f32 %v634, 0.0625
      %vm636 = vcmask 392192
      %v638 = vsel %vm636, %v635, 0
      %640 = vmatpush.msra.mxu0 0.0
      %641 = vmatpush.msra.mxu0 0.0
      %642 = vmatpush.msra.mxu0 0.0
      %643 = vmatpush.msra.mxu0 0.0
      %644 = vmatpush.msra.mxu0 0.0
      %645 = vmatpush.msra.mxu0 0.0
      %646 = vmatpush.msra.mxu0 0.0
      %647 = vmatpush.msra.mxu0 0.0
      %648 = vmatpush.msra.mxu0 0.0
      %649 = vmatpush.msra.mxu0 0.0
      %650 = vmatpush.msra.mxu0 %v608
      %651 = vmatpush.msra.mxu0 %v607
      %652 = vmatpush.msra.mxu0 %v606
      %653 = vmatpush.msra.mxu0 %v605
      %654 = vmatpush.msra.mxu0 %v604
      %655 = vmatpush.msra.mxu0 %v603
      %656 = vmatmul.f32.gmra.mxu0 %v638
      %v657 = vpop.f32.mrf.mxu0
      %v658 = vadd.f32 %v609, %v657
      %659 = vdwg.mxu0
      %v660 = vmax.f32 %v658, 0.0
      %vm661 = vcmask 97280
      %v663 = vsel %vm661, %v660, 0
      %vm665 = vcmask 1043456
      %v667 = vsel %vm665, %v611, 0
      %669 = vmatpush.msra.mxu0 0.0
      %670 = vmatpush.msra.mxu0 0.0
      %671 = vmatpush.msra.mxu0 0.0
      %672 = vmatpush.msra.mxu0 0.0
      %673 = vmatpush.msra.mxu0 0.0
      %674 = vmatpush.msra.mxu0 0.0
      %675 = vmatpush.msra.mxu0 0.0
      %676 = vmatpush.msra.mxu0 0.0
      %677 = vmatpush.msra.mxu0 0.0
      %678 = vmatpush.msra.mxu0 0.0
      %679 = vmatpush.msra.mxu0 0.0
      %680 = vmatpush.msra.mxu0 0.0
      %681 = vmatpush.msra.mxu0 0.0
      %682 = vmatpush.msra.mxu0 0.0
      %683 = vmatpush.msra.mxu0 %v667
      %684 = vmatpush.msra.mxu0 %v610
      %685 = vmatmul.f32.gmra.mxu0 %v663
      %v686 = vpop.f32.mrf.mxu0
      %v687 = vadd.f32 %v612, %v686
      %688 = vdwg.mxu0
      %v689 = vxor.u32 %v687, 2147483648
      %v690 = vmul.f32 %v689, 1.442695
      %v691 = vpow.pop %v690
      %v692 = vadd.f32 %v691, 1.0
      %v693 = vrcp.pop %v692
      %v694 = vmul.f32 %v692, %v693
      %v695 = vsub.f32 1.0, %v694
      %v696 = vmul.f32 %v693, %v695
      %v697 = vadd.f32 %v693, %v696
      %vm698 = vweird.f32 %v692
      %vm699 = vweird.f32 %v693
      %vm700 = vmor %vm698, %vm699
      %v701 = vsel %vm700, %v693, %v697
      %v702 = vand.u32 2147483647, %v692
      %vm703 = vcmp.eq.f32.partialorder %v702, 8.507059e+37
      %v704 = vand.u32 %v692, 2147483648
      %v705 = vor.u32 1.1754944e-38, %v704
      %v706 = vsel %vm703, %v705, %v701
      %v707 = vmul.f32 1.0, %v706
      %v708 = vperm.slane %v707, 0
      %v709 = vmul.f32 %v599, %v708
      %v710 = vmul.f32 %v600, %v708
      %v711 = vmul.f32 %v601, %v708
      %v712 = vmul.f32 %v602, %v708
      %v714 = vperm.slane %v619, 0
      %v717 = vsel %vm636, %v709, 0
      %719 = vmatpush.msra.mxu0 0.0
      %720 = vmatpush.msra.mxu0 0.0
      %721 = vmatpush.msra.mxu0 0.0
      %722 = vmatpush.msra.mxu0 0.0
      %723 = vmatpush.msra.mxu0 0.0
      %724 = vmatpush.msra.mxu0 0.0
      %725 = vmatpush.msra.mxu0 0.0
      %726 = vmatpush.msra.mxu0 0.0
      %727 = vmatpush.msra.mxu0 0.0
      %728 = vmatpush.msra.mxu0 0.0
      %729 = vmatpush.msra.mxu0 %v618
      %730 = vmatpush.msra.mxu0 %v617
      %731 = vmatpush.msra.mxu0 %v616
      %732 = vmatpush.msra.mxu0 %v615
      %733 = vmatpush.msra.mxu0 %v614
      %734 = vmatpush.msra.mxu0 %v613
      %735 = vmatmul.f32.gmra.mxu0 %v717
      %v736 = vpop.f32.mrf.mxu0
      %v737 = vadd.f32 %v714, %v736
      %738 = vdwg.mxu0
      %v740 = vsel %vm636, %v710, 0
      %742 = vmatpush.msra.mxu0 0.0
      %743 = vmatpush.msra.mxu0 0.0
      %744 = vmatpush.msra.mxu0 0.0
      %745 = vmatpush.msra.mxu0 0.0
      %746 = vmatpush.msra.mxu0 0.0
      %747 = vmatpush.msra.mxu0 0.0
      %748 = vmatpush.msra.mxu0 0.0
      %749 = vmatpush.msra.mxu0 0.0
      %750 = vmatpush.msra.mxu0 0.0
      %751 = vmatpush.msra.mxu0 0.0
      %752 = vmatpush.msra.mxu0 %v618
      %753 = vmatpush.msra.mxu0 %v617
      %754 = vmatpush.msra.mxu0 %v616
      %755 = vmatpush.msra.mxu0 %v615
      %756 = vmatpush.msra.mxu0 %v614
      %757 = vmatpush.msra.mxu0 %v613
      %758 = vmatmul.f32.gmra.mxu0 %v740
      %v759 = vpop.f32.mrf.mxu0
      %v760 = vadd.f32 %v714, %v759
      %761 = vdwg.mxu0
      %v763 = vsel %vm636, %v711, 0
      %765 = vmatpush.msra.mxu0 0.0
      %766 = vmatpush.msra.mxu0 0.0
      %767 = vmatpush.msra.mxu0 0.0
      %768 = vmatpush.msra.mxu0 0.0
      %769 = vmatpush.msra.mxu0 0.0
      %770 = vmatpush.msra.mxu0 0.0
      %771 = vmatpush.msra.mxu0 0.0
      %772 = vmatpush.msra.mxu0 0.0
      %773 = vmatpush.msra.mxu0 0.0
      %774 = vmatpush.msra.mxu0 0.0
      %775 = vmatpush.msra.mxu0 %v618
      %776 = vmatpush.msra.mxu0 %v617
      %777 = vmatpush.msra.mxu0 %v616
      %778 = vmatpush.msra.mxu0 %v615
      %779 = vmatpush.msra.mxu0 %v614
      %780 = vmatpush.msra.mxu0 %v613
      %781 = vmatmul.f32.gmra.mxu0 %v763
      %v782 = vpop.f32.mrf.mxu0
      %v783 = vadd.f32 %v714, %v782
      %784 = vdwg.mxu0
      %v786 = vsel %vm636, %v712, 0
      %788 = vmatpush.msra.mxu0 0.0
      %789 = vmatpush.msra.mxu0 0.0
      %790 = vmatpush.msra.mxu0 0.0
      %791 = vmatpush.msra.mxu0 0.0
      %792 = vmatpush.msra.mxu0 0.0
      %793 = vmatpush.msra.mxu0 0.0
      %794 = vmatpush.msra.mxu0 0.0
      %795 = vmatpush.msra.mxu0 0.0
      %796 = vmatpush.msra.mxu0 0.0
      %797 = vmatpush.msra.mxu0 0.0
      %798 = vmatpush.msra.mxu0 %v618
      %799 = vmatpush.msra.mxu0 %v617
      %800 = vmatpush.msra.mxu0 %v616
      %801 = vmatpush.msra.mxu0 %v615
      %802 = vmatpush.msra.mxu0 %v614
      %803 = vmatpush.msra.mxu0 %v613
      %804 = vmatmul.f32.gmra.mxu0 %v786
      %v805 = vpop.f32.mrf.mxu0
      %v806 = vadd.f32 %v714, %v805
      %807 = vdwg.mxu0
      %vm808 = vcmask 191488
      %809 = vst.msk [vmem:[%s473] sm:$0xf] %vm808, %v737
      %810 = vst.msk [vmem:[%s473 + $0x4] sm:$0xf] %vm808, %v760
      %811 = vst.msk [vmem:[%s473 + $0x8] sm:$0xf] %vm808, %v783
      %812 = vst.msk [vmem:[%s473 + $0xc] sm:$0xf] %vm808, %v806
      %p813 = scmp.lt.s32.totalorder %s23, 1
      %s814 = scalar_select %p813, %s23, 1
      %s815 = smul.addr %s814, 4
      %s816 = smul.addr %s815, 4
      %s817 = scalar_lea.vmem %s12, %s816
      // Predicated region
      $region69: #{_lambda_.9} parent=67 // pred_check
        %p818 = pneg %p313
      $region70: #{_lambda_.9} parent=67 // pred_check_branch
        %820 = sbr.rel (%p818) target = $region72
      $region71: #{_lambda_.9} parent=67 // pred_region
        _
      $region72: #{_lambda_.9} parent=67 // pred_fallthru
        _
    $region68: #{_lambda_.9} parent=5 // pred_fallthru
      _
    %p821 = scmp.le.s32.totalorder 2, %s18
    // Predicated region
    $region73: #{_lambda_.9} parent=5 // pred_check
      %p822 = pneg %p821
    $region74: #{_lambda_.9} parent=5 // pred_check_branch
      %824 = sbr.rel (%p822) target = $region76
    $region75: #{_lambda_.9} parent=5 // pred_region
      %s825 = ssub.s32 %s18, 2
      // Predicated region
      $region77: #{_lambda_.9} parent=75 // pred_check
        %p826 = pneg %p319
      $region78: #{_lambda_.9} parent=75 // pred_check_branch
        %828 = sbr.rel (%p826) target = $region80
      $region79: #{_lambda_.9} parent=75 // pred_region
        %p829 = scmp.lt.s32.totalorder %s24, 1
        %s830 = scalar_select %p829, %s24, 1
        %s831 = smul.addr %s830, 4
        %s832 = smul.addr %s831, 4
        %s833 = scalar_lea.vmem %s12, %s832
      $region80: #{_lambda_.9} parent=75 // pred_fallthru
        _
    $region76: #{_lambda_.9} parent=5 // pred_fallthru
      _
  $region6: #{_lambda_.9} parent=0 // loop_footer
    %s22 = sadd.s32 1, %s18
  $region7: #{_lambda_.9} parent=0 // loop_footer_branch
    %17 = sbr.rel target = $region3
  $region8: #{_lambda_.9} parent=0 // loop_exit
    _

// kernel: _lambda_.10
$region0: #{_lambda_.10}
  #allocation0 [shape = 'u32[]', space=smem, size = 0x4, offset = 0x4, fixed_abs, tag = 'smem constant byte address 0x4 - core index']
  #allocation1 [shape = 'u32[72,128]{1,0:T(1,128)}', space=vmem, size = 0x9000, scoped, tag = 'internal scratch']
  #allocation2 [shape = 'f32[6,20,72]{2,1,0:T(8,128)}', space=vmem, size = 0x12000, scoped, tag = 'scratch operand']
  %s0 = inlined_call_operand.vmem [shape: f32[2,4,4,24], index: 0, kind: input, shape index: {}]
  %s1 = inlined_call_operand.vmem [shape: f32[24,72], index: 1, kind: input, shape index: {}]
  %s2 = inlined_call_operand.vmem [shape: f32[1,72], index: 2, kind: input, shape index: {}]
  %s3 = inlined_call_operand.vmem [shape: f32[9,72], index: 3, kind: input, shape index: {}]
  %s4 = inlined_call_operand.vmem [shape: f32[1,72], index: 4, kind: input, shape index: {}]
  %s5 = inlined_call_operand.vmem [shape: f32[72,18], index: 5, kind: input, shape index: {}]
  %s6 = inlined_call_operand.vmem [shape: f32[1,18], index: 6, kind: input, shape index: {}]
  %s7 = inlined_call_operand.vmem [shape: f32[18,72], index: 7, kind: input, shape index: {}]
  %s8 = inlined_call_operand.vmem [shape: f32[1,72], index: 8, kind: input, shape index: {}]
  %s9 = inlined_call_operand.vmem [shape: f32[72,24], index: 9, kind: input, shape index: {}]
  %s10 = inlined_call_operand.vmem [shape: f32[1,24], index: 10, kind: input, shape index: {}]
  %s11 = inlined_call_operand.vmem [shape: f32[2,4,4,24], index: 11, kind: output, shape index: {}]
  %s12 = sld [smem:[#allocation0]]
  $region77: #{_lambda_.10} parent=0
    _
  %s14 = ssub.s32 1, %s12
  %s15 = scalar_select 0, %s14, %s12
  loop: start=0, step=1, limit=4
  $region2: #{_lambda_.10} parent=0 // loop_pre_header
    _
  $region3: #{_lambda_.10} parent=0 // loop_header
    %s17 = sphi 0, %s21
    %p18 = scmp.ge.s32.totalorder %s17, 4
    %s27 = sphi 0, %s29
    %s30 = sphi 0, %s27
    %s31 = sphi 0, %s30
    %s47 = sphi 0, %s31
    %s51 = sphi 0, %s51
    %s53 = sphi 0, %s51
    %s54 = sphi 0, %s53
    %s68 = sphi 0, %s54
    %s72 = sphi 0, %s72
    %s74 = sphi 0, %s72
    %s75 = sphi 0, %s74
    %s89 = sphi 0, %s75
    %s93 = sphi 0, %s93
    %s95 = sphi 0, %s93
    %s96 = sphi 0, %s95
    %s110 = sphi 0, %s96
    %s114 = sphi 0, %s114
    %s116 = sphi 0, %s114
    %s117 = sphi 0, %s116
    %s131 = sphi 0, %s117
    %s135 = sphi 0, %s135
    %s137 = sphi 0, %s135
    %s138 = sphi 0, %s137
    %s152 = sphi 0, %s138
    %s156 = sphi 0, %s156
    %s158 = sphi 0, %s156
    %s159 = sphi 0, %s158
    %s173 = sphi 0, %s159
    %s177 = sphi 0, %s177
    %s179 = sphi 0, %s177
    %s180 = sphi 0, %s179
    %s194 = sphi 0, %s180
    %s198 = sphi 0, %s198
    %s200 = sphi 0, %s198
    %s201 = sphi 0, %s200
    %s215 = sphi 0, %s201
    %s219 = sphi 0, %s219
    %s221 = sphi 0, %s219
    %s222 = sphi 0, %s221
    %s236 = sphi 0, %s222
    %s240 = sphi 0, %s240
    %s242 = sphi 0, %s240
    %s243 = sphi 0, %s242
    %s257 = sphi 0, %s243
    %s263 = sphi 0, %s265
    %s266 = sphi 0, %s263
    %s267 = sphi 0, %s266
    %s283 = sphi 0, %s267
  $region4: #{_lambda_.10} parent=0 // loop_header_branch
    %20 = sbr.rel (%p18) target = $region8
  $region5: #{_lambda_.10} parent=0 // loop_body
    %s22 = ssub.s32 %s17, 1
    %s23 = ssub.s32 %s17, 2
    %s24 = sadd.s32 %s17, 1
    %s25 = ssub.s32 %s17, %s24
    %p26 = scmp.eq.s32.totalorder %s25, 0
    %s28 = sadd.s32 %s27, 1
    %s29 = scalar_select %p26, %s27, %s28
    %p32 = pneg %p26
    %p33 = scmp.eq.s32.totalorder %s17, 1
    %p34 = por %p32, %p33
    %p35 = scmp.ne.s32.totalorder %s27, %s30
    %p36 = scmp.eq.s32.totalorder %s17, 0
    %p37 = por %p35, %p36
    %p38 = scmp.ne.s32.totalorder %s27, %s30
    %p39 = scmp.eq.s32.totalorder %s22, 1
    %p40 = por %p38, %p39
    %p41 = scmp.ne.s32.totalorder %s30, %s31
    %p42 = scmp.eq.s32.totalorder %s22, 0
    %p43 = por %p41, %p42
    %p44 = scmp.ne.s32.totalorder %s30, %s31
    %p45 = scmp.eq.s32.totalorder %s23, 1
    %p46 = por %p44, %p45
    %p48 = scmp.ne.s32.totalorder %s31, %s47
    %p49 = scmp.eq.s32.totalorder %s23, 0
    %p50 = por %p48, %p49
    %s52 = sadd.s32 %s51, 1
    %p55 = scmp.eq.s32.totalorder %s17, 1
    %p56 = scmp.ne.s32.totalorder %s51, %s53
    %p57 = scmp.eq.s32.totalorder %s17, 0
    %p58 = por %p56, %p57
    %p59 = scmp.ne.s32.totalorder %s51, %s53
    %p60 = scmp.eq.s32.totalorder %s22, 1
    %p61 = por %p59, %p60
    %p62 = scmp.ne.s32.totalorder %s53, %s54
    %p63 = scmp.eq.s32.totalorder %s22, 0
    %p64 = por %p62, %p63
    %p65 = scmp.ne.s32.totalorder %s53, %s54
    %p66 = scmp.eq.s32.totalorder %s23, 1
    %p67 = por %p65, %p66
    %p69 = scmp.ne.s32.totalorder %s54, %s68
    %p70 = scmp.eq.s32.totalorder %s23, 0
    %p71 = por %p69, %p70
    %s73 = sadd.s32 %s72, 1
    %p76 = scmp.eq.s32.totalorder %s17, 1
    %p77 = scmp.ne.s32.totalorder %s72, %s74
    %p78 = scmp.eq.s32.totalorder %s17, 0
    %p79 = por %p77, %p78
    %p80 = scmp.ne.s32.totalorder %s72, %s74
    %p81 = scmp.eq.s32.totalorder %s22, 1
    %p82 = por %p80, %p81
    %p83 = scmp.ne.s32.totalorder %s74, %s75
    %p84 = scmp.eq.s32.totalorder %s22, 0
    %p85 = por %p83, %p84
    %p86 = scmp.ne.s32.totalorder %s74, %s75
    %p87 = scmp.eq.s32.totalorder %s23, 1
    %p88 = por %p86, %p87
    %p90 = scmp.ne.s32.totalorder %s75, %s89
    %p91 = scmp.eq.s32.totalorder %s23, 0
    %p92 = por %p90, %p91
    %s94 = sadd.s32 %s93, 1
    %p97 = scmp.eq.s32.totalorder %s17, 1
    %p98 = scmp.ne.s32.totalorder %s93, %s95
    %p99 = scmp.eq.s32.totalorder %s17, 0
    %p100 = por %p98, %p99
    %p101 = scmp.ne.s32.totalorder %s93, %s95
    %p102 = scmp.eq.s32.totalorder %s22, 1
    %p103 = por %p101, %p102
    %p104 = scmp.ne.s32.totalorder %s95, %s96
    %p105 = scmp.eq.s32.totalorder %s22, 0
    %p106 = por %p104, %p105
    %p107 = scmp.ne.s32.totalorder %s95, %s96
    %p108 = scmp.eq.s32.totalorder %s23, 1
    %p109 = por %p107, %p108
    %p111 = scmp.ne.s32.totalorder %s96, %s110
    %p112 = scmp.eq.s32.totalorder %s23, 0
    %p113 = por %p111, %p112
    %s115 = sadd.s32 %s114, 1
    %p118 = scmp.eq.s32.totalorder %s17, 1
    %p119 = scmp.ne.s32.totalorder %s114, %s116
    %p120 = scmp.eq.s32.totalorder %s17, 0
    %p121 = por %p119, %p120
    %p122 = scmp.ne.s32.totalorder %s114, %s116
    %p123 = scmp.eq.s32.totalorder %s22, 1
    %p124 = por %p122, %p123
    %p125 = scmp.ne.s32.totalorder %s116, %s117
    %p126 = scmp.eq.s32.totalorder %s22, 0
    %p127 = por %p125, %p126
    %p128 = scmp.ne.s32.totalorder %s116, %s117
    %p129 = scmp.eq.s32.totalorder %s23, 1
    %p130 = por %p128, %p129
    %p132 = scmp.ne.s32.totalorder %s117, %s131
    %p133 = scmp.eq.s32.totalorder %s23, 0
    %p134 = por %p132, %p133
    %s136 = sadd.s32 %s135, 1
    %p139 = scmp.eq.s32.totalorder %s17, 1
    %p140 = scmp.ne.s32.totalorder %s135, %s137
    %p141 = scmp.eq.s32.totalorder %s17, 0
    %p142 = por %p140, %p141
    %p143 = scmp.ne.s32.totalorder %s135, %s137
    %p144 = scmp.eq.s32.totalorder %s22, 1
    %p145 = por %p143, %p144
    %p146 = scmp.ne.s32.totalorder %s137, %s138
    %p147 = scmp.eq.s32.totalorder %s22, 0
    %p148 = por %p146, %p147
    %p149 = scmp.ne.s32.totalorder %s137, %s138
    %p150 = scmp.eq.s32.totalorder %s23, 1
    %p151 = por %p149, %p150
    %p153 = scmp.ne.s32.totalorder %s138, %s152
    %p154 = scmp.eq.s32.totalorder %s23, 0
    %p155 = por %p153, %p154
    %s157 = sadd.s32 %s156, 1
    %p160 = scmp.eq.s32.totalorder %s17, 1
    %p161 = scmp.ne.s32.totalorder %s156, %s158
    %p162 = scmp.eq.s32.totalorder %s17, 0
    %p163 = por %p161, %p162
    %p164 = scmp.ne.s32.totalorder %s156, %s158
    %p165 = scmp.eq.s32.totalorder %s22, 1
    %p166 = por %p164, %p165
    %p167 = scmp.ne.s32.totalorder %s158, %s159
    %p168 = scmp.eq.s32.totalorder %s22, 0
    %p169 = por %p167, %p168
    %p170 = scmp.ne.s32.totalorder %s158, %s159
    %p171 = scmp.eq.s32.totalorder %s23, 1
    %p172 = por %p170, %p171
    %p174 = scmp.ne.s32.totalorder %s159, %s173
    %p175 = scmp.eq.s32.totalorder %s23, 0
    %p176 = por %p174, %p175
    %s178 = sadd.s32 %s177, 1
    %p181 = scmp.eq.s32.totalorder %s17, 1
    %p182 = scmp.ne.s32.totalorder %s177, %s179
    %p183 = scmp.eq.s32.totalorder %s17, 0
    %p184 = por %p182, %p183
    %p185 = scmp.ne.s32.totalorder %s177, %s179
    %p186 = scmp.eq.s32.totalorder %s22, 1
    %p187 = por %p185, %p186
    %p188 = scmp.ne.s32.totalorder %s179, %s180
    %p189 = scmp.eq.s32.totalorder %s22, 0
    %p190 = por %p188, %p189
    %p191 = scmp.ne.s32.totalorder %s179, %s180
    %p192 = scmp.eq.s32.totalorder %s23, 1
    %p193 = por %p191, %p192
    %p195 = scmp.ne.s32.totalorder %s180, %s194
    %p196 = scmp.eq.s32.totalorder %s23, 0
    %p197 = por %p195, %p196
    %s199 = sadd.s32 %s198, 1
    %p202 = scmp.eq.s32.totalorder %s17, 1
    %p203 = scmp.ne.s32.totalorder %s198, %s200
    %p204 = scmp.eq.s32.totalorder %s17, 0
    %p205 = por %p203, %p204
    %p206 = scmp.ne.s32.totalorder %s198, %s200
    %p207 = scmp.eq.s32.totalorder %s22, 1
    %p208 = por %p206, %p207
    %p209 = scmp.ne.s32.totalorder %s200, %s201
    %p210 = scmp.eq.s32.totalorder %s22, 0
    %p211 = por %p209, %p210
    %p212 = scmp.ne.s32.totalorder %s200, %s201
    %p213 = scmp.eq.s32.totalorder %s23, 1
    %p214 = por %p212, %p213
    %p216 = scmp.ne.s32.totalorder %s201, %s215
    %p217 = scmp.eq.s32.totalorder %s23, 0
    %p218 = por %p216, %p217
    %s220 = sadd.s32 %s219, 1
    %p223 = scmp.eq.s32.totalorder %s17, 1
    %p224 = scmp.ne.s32.totalorder %s219, %s221
    %p225 = scmp.eq.s32.totalorder %s17, 0
    %p226 = por %p224, %p225
    %p227 = scmp.ne.s32.totalorder %s219, %s221
    %p228 = scmp.eq.s32.totalorder %s22, 1
    %p229 = por %p227, %p228
    %p230 = scmp.ne.s32.totalorder %s221, %s222
    %p231 = scmp.eq.s32.totalorder %s22, 0
    %p232 = por %p230, %p231
    %p233 = scmp.ne.s32.totalorder %s221, %s222
    %p234 = scmp.eq.s32.totalorder %s23, 1
    %p235 = por %p233, %p234
    %p237 = scmp.ne.s32.totalorder %s222, %s236
    %p238 = scmp.eq.s32.totalorder %s23, 0
    %p239 = por %p237, %p238
    %s241 = sadd.s32 %s240, 1
    %p244 = scmp.eq.s32.totalorder %s17, 1
    %p245 = scmp.ne.s32.totalorder %s240, %s242
    %p246 = scmp.eq.s32.totalorder %s17, 0
    %p247 = por %p245, %p246
    %p248 = scmp.ne.s32.totalorder %s240, %s242
    %p249 = scmp.eq.s32.totalorder %s22, 1
    %p250 = por %p248, %p249
    %p251 = scmp.ne.s32.totalorder %s242, %s243
    %p252 = scmp.eq.s32.totalorder %s22, 0
    %p253 = por %p251, %p252
    %p254 = scmp.ne.s32.totalorder %s242, %s243
    %p255 = scmp.eq.s32.totalorder %s23, 1
    %p256 = por %p254, %p255
    %p258 = scmp.ne.s32.totalorder %s243, %s257
    %p259 = scmp.eq.s32.totalorder %s23, 0
    %p260 = por %p258, %p259
    %s261 = ssub.s32 %s17, %s24
    %p262 = scmp.eq.s32.totalorder %s261, 0
    %s264 = sadd.s32 %s263, 1
    %s265 = scalar_select %p262, %s263, %s264
    %p268 = pneg %p262
    %p269 = scmp.eq.s32.totalorder %s17, 1
    %p270 = por %p268, %p269
    %p271 = scmp.ne.s32.totalorder %s263, %s266
    %p272 = scmp.eq.s32.totalorder %s17, 0
    %p273 = por %p271, %p272
    %p274 = scmp.ne.s32.totalorder %s263, %s266
    %p275 = scmp.eq.s32.totalorder %s22, 1
    %p276 = por %p274, %p275
    %p277 = scmp.ne.s32.totalorder %s266, %s267
    %p278 = scmp.eq.s32.totalorder %s22, 0
    %p279 = por %p277, %p278
    %p280 = scmp.ne.s32.totalorder %s266, %s267
    %p281 = scmp.eq.s32.totalorder %s23, 1
    %p282 = por %p280, %p281
    %p284 = scmp.ne.s32.totalorder %s267, %s283
    %p285 = scmp.eq.s32.totalorder %s23, 0
    %p286 = por %p284, %p285
    %p287 = scmp.le.s32.totalorder 1, %s17
    %p288 = scmp.lt.s32.totalorder %s17, 3
    %p289 = pnand %p287, %p288
    %p290 = pneg %p289
    // Predicated region
    $region9: #{_lambda_.10} parent=5 // pred_check
      _
    $region10: #{_lambda_.10} parent=5 // pred_check_branch
      %292 = sbr.rel (%p289) target = $region12
    $region11: #{_lambda_.10} parent=5 // pred_region
      %s293 = ssub.s32 %s17, 1
      // Predicated region
      $region13: #{_lambda_.10} parent=11 // pred_check
        %p294 = pneg %p64
      $region14: #{_lambda_.10} parent=11 // pred_check_branch
        %296 = sbr.rel (%p294) target = $region16
      $region15: #{_lambda_.10} parent=11 // pred_region
        _
      $region16: #{_lambda_.10} parent=11 // pred_fallthru
        _
      // Predicated region
      $region17: #{_lambda_.10} parent=11 // pred_check
        %p297 = pneg %p85
      $region18: #{_lambda_.10} parent=11 // pred_check_branch
        %299 = sbr.rel (%p297) target = $region20
      $region19: #{_lambda_.10} parent=11 // pred_region
        _
      $region20: #{_lambda_.10} parent=11 // pred_fallthru
        _
      // Predicated region
      $region21: #{_lambda_.10} parent=11 // pred_check
        %p300 = pneg %p106
      $region22: #{_lambda_.10} parent=11 // pred_check_branch
        %302 = sbr.rel (%p300) target = $region24
      $region23: #{_lambda_.10} parent=11 // pred_region
        _
      $region24: #{_lambda_.10} parent=11 // pred_fallthru
        _
      // Predicated region
      $region25: #{_lambda_.10} parent=11 // pred_check
        %p303 = pneg %p127
      $region26: #{_lambda_.10} parent=11 // pred_check_branch
        %305 = sbr.rel (%p303) target = $region28
      $region27: #{_lambda_.10} parent=11 // pred_region
        _
      $region28: #{_lambda_.10} parent=11 // pred_fallthru
        _
      // Predicated region
      $region29: #{_lambda_.10} parent=11 // pred_check
        %p306 = pneg %p148
      $region30: #{_lambda_.10} parent=11 // pred_check_branch
        %308 = sbr.rel (%p306) target = $region32
      $region31: #{_lambda_.10} parent=11 // pred_region
        _
      $region32: #{_lambda_.10} parent=11 // pred_fallthru
        _
      // Predicated region
      $region33: #{_lambda_.10} parent=11 // pred_check
        %p309 = pneg %p169
      $region34: #{_lambda_.10} parent=11 // pred_check_branch
        %311 = sbr.rel (%p309) target = $region36
      $region35: #{_lambda_.10} parent=11 // pred_region
        _
      $region36: #{_lambda_.10} parent=11 // pred_fallthru
        _
      // Predicated region
      $region37: #{_lambda_.10} parent=11 // pred_check
        %p312 = pneg %p190
      $region38: #{_lambda_.10} parent=11 // pred_check_branch
        %314 = sbr.rel (%p312) target = $region40
      $region39: #{_lambda_.10} parent=11 // pred_region
        _
      $region40: #{_lambda_.10} parent=11 // pred_fallthru
        _
      // Predicated region
      $region41: #{_lambda_.10} parent=11 // pred_check
        %p315 = pneg %p211
      $region42: #{_lambda_.10} parent=11 // pred_check_branch
        %317 = sbr.rel (%p315) target = $region44
      $region43: #{_lambda_.10} parent=11 // pred_region
        _
      $region44: #{_lambda_.10} parent=11 // pred_fallthru
        _
      // Predicated region
      $region45: #{_lambda_.10} parent=11 // pred_check
        %p318 = pneg %p232
      $region46: #{_lambda_.10} parent=11 // pred_check_branch
        %320 = sbr.rel (%p318) target = $region48
      $region47: #{_lambda_.10} parent=11 // pred_region
        _
      $region48: #{_lambda_.10} parent=11 // pred_fallthru
        _
      // Predicated region
      $region49: #{_lambda_.10} parent=11 // pred_check
        %p321 = pneg %p253
      $region50: #{_lambda_.10} parent=11 // pred_check_branch
        %323 = sbr.rel (%p321) target = $region52
      $region51: #{_lambda_.10} parent=11 // pred_region
        _
      $region52: #{_lambda_.10} parent=11 // pred_fallthru
        _
    $region12: #{_lambda_.10} parent=5 // pred_fallthru
      _
    %p324 = scmp.lt.s32.totalorder %s17, 2
    // Predicated region
    $region53: #{_lambda_.10} parent=5 // pred_check
      %p325 = pneg %p324
    $region54: #{_lambda_.10} parent=5 // pred_check_branch
      %327 = sbr.rel (%p325) target = $region56
    $region55: #{_lambda_.10} parent=5 // pred_region
      // Predicated region
      $region57: #{_lambda_.10} parent=55 // pred_check
        %p328 = pneg %p37
      $region58: #{_lambda_.10} parent=55 // pred_check_branch
        %330 = sbr.rel (%p328) target = $region60
      $region59: #{_lambda_.10} parent=55 // pred_region
        %p331 = scmp.lt.s32.totalorder %s17, 1
        %s332 = scalar_select %p331, %s17, 1
        %s333 = smul.addr %s332, 4
        %s334 = smul.addr %s333, 4
        %s335 = scalar_lea.vmem %s0, %s334
      $region60: #{_lambda_.10} parent=55 // pred_fallthru
        _
    $region56: #{_lambda_.10} parent=5 // pred_fallthru
      _
    %p336 = scmp.le.s32.totalorder 1, %s17
    %p337 = scmp.lt.s32.totalorder %s17, 3
    %p338 = pnand %p336, %p337
    %p339 = pneg %p338
    // Predicated region
    $region61: #{_lambda_.10} parent=5 // pred_check
      _
    $region62: #{_lambda_.10} parent=5 // pred_check_branch
      %341 = sbr.rel (%p338) target = $region64
    $region63: #{_lambda_.10} parent=5 // pred_region
      %s342 = ssub.s32 %s17, 1
      %p343 = scmp.lt.s32.totalorder %s22, 1
      %s344 = scalar_select %p343, %s22, 1
      %s345 = smul.addr %s344, 4
      %s346 = smul.addr %s345, 4
      %s347 = scalar_lea.vmem %s0, %s346
      %p348 = pneg %p43
      %p349 = pneg %p40
      %p350 = pneg %p64
      %p351 = pneg %p61
      %p352 = pneg %p85
      %p353 = pneg %p82
      %p354 = pneg %p106
      %p355 = pneg %p103
      %p356 = pneg %p127
      %p357 = pneg %p124
      %p358 = pneg %p148
      %p359 = pneg %p145
      %p360 = pneg %p169
      %p361 = pneg %p166
      %p362 = pneg %p190
      %p363 = pneg %p187
      %p364 = pneg %p211
      %p365 = pneg %p208
      %p366 = pneg %p232
      %p367 = pneg %p229
      %p368 = pneg %p253
      %p369 = pneg %p250
      %p370 = pneg %p279
      %p371 = pneg %p276
      %p372 = scmp.lt.s32.totalorder %s22, 1
      %s373 = scalar_select %p372, %s22, 1
      %s374 = smul.addr %s373, 4
      %s375 = smul.addr %s374, 4
      %s376 = scalar_lea.vmem %s11, %s375
      %p377 = scmp.lt.s32.totalorder %s22, 1
      %s378 = scalar_select %p377, %s22, 1
      %s379 = smul.addr %s378, 4
      %s380 = smul.addr %s379, 4
      %s381 = scalar_lea.vmem %s0, %s380
      %p382 = scmp.lt.s32.totalorder %s22, 1
      %s383 = scalar_select %p382, %s22, 1
      %s384 = smul.addr %s383, 4
      %s385 = smul.addr %s384, 4
      %s386 = scalar_lea.vmem %s11, %s385
      %v387 = vld [vmem:[%s381] sm:$0xf]
      %v388 = vld [vmem:[%s381 + $0x4] sm:$0xf]
      %v389 = vld [vmem:[%s381 + $0x8] sm:$0xf]
      %v390 = vld [vmem:[%s381 + $0xc] sm:$0xf]
      %v391 = vld [vmem:[%s1] sm:$0xff]
      %v392 = vld [vmem:[%s1 + $0x8] sm:$0xff]
      %v393 = vld [vmem:[%s1 + $0x10] sm:$0xff]
      %v394 = vld [vmem:[%s2] sm:$0x1]
      %v396 = vperm.slane %v394, 0
      %vm398 = vcmask 195584
      %v400 = vsel %vm398, %v387, 0
      %402 = vmatpush.msra.mxu0 0.0
      %403 = vmatpush.msra.mxu0 0.0
      %404 = vmatpush.msra.mxu0 0.0
      %405 = vmatpush.msra.mxu0 0.0
      %406 = vmatpush.msra.mxu0 0.0
      %407 = vmatpush.msra.mxu0 0.0
      %408 = vmatpush.msra.mxu0 0.0
      %409 = vmatpush.msra.mxu0 0.0
      %410 = vmatpush.msra.mxu0 0.0
      %411 = vmatpush.msra.mxu0 0.0
      %412 = vmatpush.msra.mxu0 0.0
      %413 = vmatpush.msra.mxu0 0.0
      %414 = vmatpush.msra.mxu0 0.0
      %415 = vmatpush.msra.mxu0 %v393
      %416 = vmatpush.msra.mxu0 %v392
      %417 = vmatpush.msra.mxu0 %v391
      %418 = vmatmul.f32.gmra.mxu0 %v400
      %v419 = vpop.f32.mrf.mxu0
      %v420 = vadd.f32 %v396, %v419
      %421 = vdwg.mxu0
      %v423 = vsel %vm398, %v388, 0
      %425 = vmatpush.msra.mxu0 0.0
      %426 = vmatpush.msra.mxu0 0.0
      %427 = vmatpush.msra.mxu0 0.0
      %428 = vmatpush.msra.mxu0 0.0
      %429 = vmatpush.msra.mxu0 0.0
      %430 = vmatpush.msra.mxu0 0.0
      %431 = vmatpush.msra.mxu0 0.0
      %432 = vmatpush.msra.mxu0 0.0
      %433 = vmatpush.msra.mxu0 0.0
      %434 = vmatpush.msra.mxu0 0.0
      %435 = vmatpush.msra.mxu0 0.0
      %436 = vmatpush.msra.mxu0 0.0
      %437 = vmatpush.msra.mxu0 0.0
      %438 = vmatpush.msra.mxu0 %v393
      %439 = vmatpush.msra.mxu0 %v392
      %440 = vmatpush.msra.mxu0 %v391
      %441 = vmatmul.f32.gmra.mxu0 %v423
      %v442 = vpop.f32.mrf.mxu0
      %v443 = vadd.f32 %v396, %v442
      %444 = vdwg.mxu0
      %v446 = vsel %vm398, %v389, 0
      %448 = vmatpush.msra.mxu0 0.0
      %449 = vmatpush.msra.mxu0 0.0
      %450 = vmatpush.msra.mxu0 0.0
      %451 = vmatpush.msra.mxu0 0.0
      %452 = vmatpush.msra.mxu0 0.0
      %453 = vmatpush.msra.mxu0 0.0
      %454 = vmatpush.msra.mxu0 0.0
      %455 = vmatpush.msra.mxu0 0.0
      %456 = vmatpush.msra.mxu0 0.0
      %457 = vmatpush.msra.mxu0 0.0
      %458 = vmatpush.msra.mxu0 0.0
      %459 = vmatpush.msra.mxu0 0.0
      %460 = vmatpush.msra.mxu0 0.0
      %461 = vmatpush.msra.mxu0 %v393
      %462 = vmatpush.msra.mxu0 %v392
      %463 = vmatpush.msra.mxu0 %v391
      %464 = vmatmul.f32.gmra.mxu0 %v446
      %v465 = vpop.f32.mrf.mxu0
      %v466 = vadd.f32 %v396, %v465
      %467 = vdwg.mxu0
      %v469 = vsel %vm398, %v390, 0
      %471 = vmatpush.msra.mxu0 0.0
      %472 = vmatpush.msra.mxu0 0.0
      %473 = vmatpush.msra.mxu0 0.0
      %474 = vmatpush.msra.mxu0 0.0
      %475 = vmatpush.msra.mxu0 0.0
      %476 = vmatpush.msra.mxu0 0.0
      %477 = vmatpush.msra.mxu0 0.0
      %478 = vmatpush.msra.mxu0 0.0
      %479 = vmatpush.msra.mxu0 0.0
      %480 = vmatpush.msra.mxu0 0.0
      %481 = vmatpush.msra.mxu0 0.0
      %482 = vmatpush.msra.mxu0 0.0
      %483 = vmatpush.msra.mxu0 0.0
      %484 = vmatpush.msra.mxu0 %v393
      %485 = vmatpush.msra.mxu0 %v392
      %486 = vmatpush.msra.mxu0 %v391
      %487 = vmatmul.f32.gmra.mxu0 %v469
      %v488 = vpop.f32.mrf.mxu0
      %v489 = vadd.f32 %v396, %v488
      %490 = vdwg.mxu0
      %v491 = vmax.f32 %v420, 0.0
      %v492 = vmax.f32 %v443, 0.0
      %v493 = vmax.f32 %v466, 0.0
      %v494 = vmax.f32 %v489, 0.0
      %vm495 = vcmask 588800
      %496 = vst.msk [vmem:[#allocation2] sm:$0xff] %vm495, 0.0
      %497 = vst.msk [vmem:[#allocation2 + $0x8] sm:$0xff] %vm495, 0.0
      %vm498 = vcmask 584704
      %499 = vst.msk [vmem:[#allocation2 + $0x10] sm:$0xf] %vm498, 0.0
      %500 = vst.msk [vmem:[#allocation2 + $0x18] sm:$0xff] %vm495, 0.0
      %501 = vst.msk [vmem:[#allocation2 + $0x20] sm:$0xff] %vm495, 0.0
      %502 = vst.msk [vmem:[#allocation2 + $0x28] sm:$0xf] %vm498, 0.0
      %503 = vst.msk [vmem:[#allocation2 + $0x30] sm:$0xff] %vm495, 0.0
      %504 = vst.msk [vmem:[#allocation2 + $0x38] sm:$0xff] %vm495, 0.0
      %505 = vst.msk [vmem:[#allocation2 + $0x40] sm:$0xf] %vm498, 0.0
      %506 = vst.msk [vmem:[#allocation2 + $0x48] sm:$0xff] %vm495, 0.0
      %507 = vst.msk [vmem:[#allocation2 + $0x50] sm:$0xff] %vm495, 0.0
      %508 = vst.msk [vmem:[#allocation2 + $0x58] sm:$0xf] %vm498, 0.0
      %509 = vst.msk [vmem:[#allocation2 + $0x60] sm:$0xff] %vm495, 0.0
      %510 = vst.msk [vmem:[#allocation2 + $0x68] sm:$0xff] %vm495, 0.0
      %511 = vst.msk [vmem:[#allocation2 + $0x70] sm:$0xf] %vm498, 0.0
      %512 = vst.msk [vmem:[#allocation2 + $0x78] sm:$0xff] %vm495, 0.0
      %513 = vst.msk [vmem:[#allocation2 + $0x80] sm:$0xff] %vm495, 0.0
      %514 = vst.msk [vmem:[#allocation2 + $0x88] sm:$0xf] %vm498, 0.0
      %s515 = scalar_lea.vmem [#allocation2], 24
      %516 = vst.msk [vmem:[%s515 + $0x8] sm:$0xf] %vm498, %v491
      %517 = vst.msk [vmem:[%s515 + $0x20] sm:$0xf] %vm498, %v492
      %518 = vst.msk [vmem:[%s515 + $0x38] sm:$0xf] %vm498, %v493
      %519 = vst.msk [vmem:[%s515 + $0x50] sm:$0xf] %vm498, %v494
      %v520 = vld [vmem:[%s3] sm:$0xff]
      %v521 = vld [vmem:[%s3 + $0x8] sm:$0x1]
      %v522 = vld [vmem:[#allocation2 + $0x7] sm:$0xf]
      %v523 = vld [vmem:[#allocation2 + $0x1f] sm:$0xf]
      %v524 = vld [vmem:[#allocation2 + $0x37] sm:$0xf]
      %v525 = vld [vmem:[#allocation2 + $0x4f] sm:$0xf]
      %v526 = vperm.slane %v520, 0
      %v527 = vmul.f32 %v522, %v526
      %v528 = vmul.f32 %v523, %v526
      %v529 = vmul.f32 %v524, %v526
      %v530 = vmul.f32 %v525, %v526
      %v531 = vld [vmem:[#allocation2 + $0x8] sm:$0xf]
      %v532 = vld [vmem:[#allocation2 + $0x20] sm:$0xf]
      %v533 = vld [vmem:[#allocation2 + $0x38] sm:$0xf]
      %v534 = vld [vmem:[#allocation2 + $0x50] sm:$0xf]
      %v535 = vperm.slane %v520, 1
      %v536 = vmul.f32 %v531, %v535
      %v537 = vmul.f32 %v532, %v535
      %v538 = vmul.f32 %v533, %v535
      %v539 = vmul.f32 %v534, %v535
      %v540 = vadd.f32 %v527, %v536
      %v541 = vadd.f32 %v528, %v537
      %v542 = vadd.f32 %v529, %v538
      %v543 = vadd.f32 %v530, %v539
      %v544 = vld [vmem:[#allocation2 + $0x9] sm:$0xf]
      %v545 = vld [vmem:[#allocation2 + $0x21] sm:$0xf]
      %v546 = vld [vmem:[#allocation2 + $0x39] sm:$0xf]
      %v547 = vld [vmem:[#allocation2 + $0x51] sm:$0xf]
      %v548 = vperm.slane %v520, 2
      %v549 = vmul.f32 %v544, %v548
      %v550 = vmul.f32 %v545, %v548
      %v551 = vmul.f32 %v546, %v548
      %v552 = vmul.f32 %v547, %v548
      %v553 = vadd.f32 %v540, %v549
      %v554 = vadd.f32 %v541, %v550
      %v555 = vadd.f32 %v542, %v551
      %v556 = vadd.f32 %v543, %v552
      %v557 = vld [vmem:[%s515 + $0x7] sm:$0xf]
      %v558 = vld [vmem:[%s515 + $0x1f] sm:$0xf]
      %v559 = vld [vmem:[%s515 + $0x37] sm:$0xf]
      %v560 = vld [vmem:[%s515 + $0x4f] sm:$0xf]
      %v561 = vperm.slane %v520, 3
      %v562 = vmul.f32 %v557, %v561
      %v563 = vmul.f32 %v558, %v561
      %v564 = vmul.f32 %v559, %v561
      %v565 = vmul.f32 %v560, %v561
      %v566 = vadd.f32 %v553, %v562
      %v567 = vadd.f32 %v554, %v563
      %v568 = vadd.f32 %v555, %v564
      %v569 = vadd.f32 %v556, %v565
      %v570 = vld [vmem:[%s515 + $0x8] sm:$0xf]
      %v571 = vld [vmem:[%s515 + $0x20] sm:$0xf]
      %v572 = vld [vmem:[%s515 + $0x38] sm:$0xf]
      %v573 = vld [vmem:[%s515 + $0x50] sm:$0xf]
      %v574 = vperm.slane %v520, 4
      %v575 = vmul.f32 %v570, %v574
      %v576 = vmul.f32 %v571, %v574
      %v577 = vmul.f32 %v572, %v574
      %v578 = vmul.f32 %v573, %v574
      %v579 = vadd.f32 %v566, %v575
      %v580 = vadd.f32 %v567, %v576
      %v581 = vadd.f32 %v568, %v577
      %v582 = vadd.f32 %v569, %v578
      %v583 = vld [vmem:[%s515 + $0x9] sm:$0xf]
      %v584 = vld [vmem:[%s515 + $0x21] sm:$0xf]
      %v585 = vld [vmem:[%s515 + $0x39] sm:$0xf]
      %v586 = vld [vmem:[%s515 + $0x51] sm:$0xf]
      %v587 = vperm.slane %v520, 5
      %v588 = vmul.f32 %v583, %v587
      %v589 = vmul.f32 %v584, %v587
      %v590 = vmul.f32 %v585, %v587
      %v591 = vmul.f32 %v586, %v587
      %v592 = vadd.f32 %v579, %v588
      %v593 = vadd.f32 %v580, %v589
      %v594 = vadd.f32 %v581, %v590
      %v595 = vadd.f32 %v582, %v591
      %s596 = scalar_lea.vmem [#allocation2], 48
      %v597 = vld [vmem:[%s596 + $0x7] sm:$0xf]
      %v598 = vld [vmem:[%s596 + $0x1f] sm:$0xf]
      %v599 = vld [vmem:[%s596 + $0x37] sm:$0xf]
      %v600 = vld [vmem:[%s596 + $0x4f] sm:$0xf]
      %v601 = vperm.slane %v520, 6
      %v602 = vmul.f32 %v597, %v601
      %v603 = vmul.f32 %v598, %v601
      %v604 = vmul.f32 %v599, %v601
      %v605 = vmul.f32 %v600, %v601
      %v606 = vadd.f32 %v592, %v602
      %v607 = vadd.f32 %v593, %v603
      %v608 = vadd.f32 %v594, %v604
      %v609 = vadd.f32 %v595, %v605
      %v610 = vld [vmem:[%s596 + $0x8] sm:$0xf]
      %v611 = vld [vmem:[%s596 + $0x20] sm:$0xf]
      %v612 = vld [vmem:[%s596 + $0x38] sm:$0xf]
      %v613 = vld [vmem:[%s596 + $0x50] sm:$0xf]
      %v614 = vperm.slane %v520, 7
      %v615 = vmul.f32 %v610, %v614
      %v616 = vmul.f32 %v611, %v614
      %v617 = vmul.f32 %v612, %v614
      %v618 = vmul.f32 %v613, %v614
      %v619 = vadd.f32 %v606, %v615
      %v620 = vadd.f32 %v607, %v616
      %v621 = vadd.f32 %v608, %v617
      %v622 = vadd.f32 %v609, %v618
      %v623 = vld [vmem:[%s596 + $0x9] sm:$0xf]
      %v624 = vld [vmem:[%s596 + $0x21] sm:$0xf]
      %v625 = vld [vmem:[%s596 + $0x39] sm:$0xf]
      %v626 = vld [vmem:[%s596 + $0x51] sm:$0xf]
      %v627 = vperm.slane %v521, 0
      %v628 = vmul.f32 %v623, %v627
      %v629 = vmul.f32 %v624, %v627
      %v630 = vmul.f32 %v625, %v627
      %v631 = vmul.f32 %v626, %v627
      %v632 = vadd.f32 %v619, %v628
      %v633 = vadd.f32 %v620, %v629
      %v634 = vadd.f32 %v621, %v630
      %v635 = vadd.f32 %v622, %v631
      %v636 = vld [vmem:[%s4] sm:$0x1]
      %v638 = vperm.slane %v636, 0
      %v640 = vadd.f32 %v632, %v638
      %v641 = vadd.f32 %v633, %v638
      %v642 = vadd.f32 %v634, %v638
      %v643 = vadd.f32 %v635, %v638
      %v644 = vmax.f32 %v640, 0.0
      %v645 = vmax.f32 %v641, 0.0
      %v646 = vmax.f32 %v642, 0.0
      %v647 = vmax.f32 %v643, 0.0
      %v648 = vld [vmem:[%s5] sm:$0xff]
      %v649 = vld [vmem:[%s5 + $0x8] sm:$0xff]
      %v650 = vld [vmem:[%s5 + $0x10] sm:$0xff]
      %v651 = vld [vmem:[%s5 + $0x18] sm:$0xff]
      %v652 = vld [vmem:[%s5 + $0x20] sm:$0xff]
      %v653 = vld [vmem:[%s5 + $0x28] sm:$0xff]
      %v654 = vld [vmem:[%s5 + $0x30] sm:$0xff]
      %v655 = vld [vmem:[%s5 + $0x38] sm:$0xff]
      %v656 = vld [vmem:[%s5 + $0x40] sm:$0xff]
      %v657 = vld [vmem:[%s6] sm:$0x1]
      %v658 = vld [vmem:[%s7] sm:$0xff]
      %v659 = vld [vmem:[%s7 + $0x8] sm:$0xff]
      %v660 = vld [vmem:[%s7 + $0x10] sm:$0x3]
      %v661 = vld [vmem:[%s8] sm:$0x1]
      %v662 = vld [vmem:[%s9] sm:$0xff]
      %v663 = vld [vmem:[%s9 + $0x8] sm:$0xff]
      %v664 = vld [vmem:[%s9 + $0x10] sm:$0xff]
      %v665 = vld [vmem:[%s9 + $0x18] sm:$0xff]
      %v666 = vld [vmem:[%s9 + $0x20] sm:$0xff]
      %v667 = vld [vmem:[%s9 + $0x28] sm:$0xff]
      %v668 = vld [vmem:[%s9 + $0x30] sm:$0xff]
      %v669 = vld [vmem:[%s9 + $0x38] sm:$0xff]
      %v670 = vld [vmem:[%s9 + $0x40] sm:$0xff]
      %v671 = vld [vmem:[%s10] sm:$0x1]
      %v672 = vsel %vm498, %v644, 0.0
      %v673 = vsel %vm498, %v645, 0.0
      %v674 = vadd.f32 %v672, %v673
      %v675 = vsel %vm498, %v646, 0.0
      %v676 = vadd.f32 %v674, %v675
      %v677 = vsel %vm498, %v647, 0.0
      %v678 = vadd.f32 %v676, %v677
      %v679 = vsel %vm498, %v678, 0.0
      %v680 = vrot.slane %v679, 4
      %v681 = vadd.f32 %v679, %v680
      %v682 = vrot.slane %v681, 2
      %v683 = vadd.f32 %v681, %v682
      %v684 = vrot.slane %v683, 1
      %v685 = vadd.f32 %v683, %v684
      %v686 = vmul.f32 %v685, 0.0625
      %v688 = vsel %vm495, %v686, 0
      %690 = vmatpush.msra.mxu0 0.0
      %691 = vmatpush.msra.mxu0 0.0
      %692 = vmatpush.msra.mxu0 0.0
      %693 = vmatpush.msra.mxu0 0.0
      %694 = vmatpush.msra.mxu0 0.0
      %695 = vmatpush.msra.mxu0 0.0
      %696 = vmatpush.msra.mxu0 0.0
      %697 = vmatpush.msra.mxu0 %v656
      %698 = vmatpush.msra.mxu0 %v655
      %699 = vmatpush.msra.mxu0 %v654
      %700 = vmatpush.msra.mxu0 %v653
      %701 = vmatpush.msra.mxu0 %v652
      %702 = vmatpush.msra.mxu0 %v651
      %703 = vmatpush.msra.mxu0 %v650
      %704 = vmatpush.msra.mxu0 %v649
      %705 = vmatpush.msra.mxu0 %v648
      %706 = vmatmul.f32.gmra.mxu0 %v688
      %v707 = vpop.f32.mrf.mxu0
      %v708 = vadd.f32 %v657, %v707
      %709 = vdwg.mxu0
      %v710 = vmax.f32 %v708, 0.0
      %vm711 = vcmask 146432
      %v713 = vsel %vm711, %v710, 0
      %vm715 = vcmask 1041408
      %v717 = vsel %vm715, %v660, 0
      %719 = vmatpush.msra.mxu0 0.0
      %720 = vmatpush.msra.mxu0 0.0
      %721 = vmatpush.msra.mxu0 0.0
      %722 = vmatpush.msra.mxu0 0.0
      %723 = vmatpush.msra.mxu0 0.0
      %724 = vmatpush.msra.mxu0 0.0
      %725 = vmatpush.msra.mxu0 0.0
      %726 = vmatpush.msra.mxu0 0.0
      %727 = vmatpush.msra.mxu0 0.0
      %728 = vmatpush.msra.mxu0 0.0
      %729 = vmatpush.msra.mxu0 0.0
      %730 = vmatpush.msra.mxu0 0.0
      %731 = vmatpush.msra.mxu0 0.0
      %732 = vmatpush.msra.mxu0 %v717
      %733 = vmatpush.msra.mxu0 %v659
      %734 = vmatpush.msra.mxu0 %v658
      %735 = vmatmul.f32.gmra.mxu0 %v713
      %v736 = vpop.f32.mrf.mxu0
      %v737 = vadd.f32 %v661, %v736
      %738 = vdwg.mxu0
      %v739 = vxor.u32 %v737, 2147483648
      %v740 = vmul.f32 %v739, 1.442695
      %v741 = vpow.pop %v740
      %v742 = vadd.f32 %v741, 1.0
      %v743 = vrcp.pop %v742
      %v744 = vmul.f32 %v742, %v743
      %v745 = vsub.f32 1.0, %v744
      %v746 = vmul.f32 %v743, %v745
      %v747 = vadd.f32 %v743, %v746
      %vm748 = vweird.f32 %v742
      %vm749 = vweird.f32 %v743
      %vm750 = vmor %vm748, %vm749
      %v751 = vsel %vm750, %v743, %v747
      %v752 = vand.u32 2147483647, %v742
      %vm753 = vcmp.eq.f32.partialorder %v752, 8.507059e+37
      %v754 = vand.u32 %v742, 2147483648
      %v755 = vor.u32 1.1754944e-38, %v754
      %v756 = vsel %vm753, %v755, %v751
      %v757 = vmul.f32 1.0, %v756
      %v758 = vperm.slane %v757, 0
      %v759 = vmul.f32 %v644, %v758
      %v760 = vmul.f32 %v645, %v758
      %v761 = vmul.f32 %v646, %v758
      %v762 = vmul.f32 %v647, %v758
      %v764 = vperm.slane %v671, 0
      %v767 = vsel %vm495, %v759, 0
      %769 = vmatpush.msra.mxu0 0.0
      %770 = vmatpush.msra.mxu0 0.0
      %771 = vmatpush.msra.mxu0 0.0
      %772 = vmatpush.msra.mxu0 0.0
      %773 = vmatpush.msra.mxu0 0.0
      %774 = vmatpush.msra.mxu0 0.0
      %775 = vmatpush.msra.mxu0 0.0
      %776 = vmatpush.msra.mxu0 %v670
      %777 = vmatpush.msra.mxu0 %v669
      %778 = vmatpush.msra.mxu0 %v668
      %779 = vmatpush.msra.mxu0 %v667
      %780 = vmatpush.msra.mxu0 %v666
      %781 = vmatpush.msra.mxu0 %v665
      %782 = vmatpush.msra.mxu0 %v664
      %783 = vmatpush.msra.mxu0 %v663
      %784 = vmatpush.msra.mxu0 %v662
      %785 = vmatmul.f32.gmra.mxu0 %v767
      %v786 = vpop.f32.mrf.mxu0
      %v787 = vadd.f32 %v764, %v786
      %788 = vdwg.mxu0
      %v790 = vsel %vm495, %v760, 0
      %792 = vmatpush.msra.mxu0 0.0
      %793 = vmatpush.msra.mxu0 0.0
      %794 = vmatpush.msra.mxu0 0.0
      %795 = vmatpush.msra.mxu0 0.0
      %796 = vmatpush.msra.mxu0 0.0
      %797 = vmatpush.msra.mxu0 0.0
      %798 = vmatpush.msra.mxu0 0.0
      %799 = vmatpush.msra.mxu0 %v670
      %800 = vmatpush.msra.mxu0 %v669
      %801 = vmatpush.msra.mxu0 %v668
      %802 = vmatpush.msra.mxu0 %v667
      %803 = vmatpush.msra.mxu0 %v666
      %804 = vmatpush.msra.mxu0 %v665
      %805 = vmatpush.msra.mxu0 %v664
      %806 = vmatpush.msra.mxu0 %v663
      %807 = vmatpush.msra.mxu0 %v662
      %808 = vmatmul.f32.gmra.mxu0 %v790
      %v809 = vpop.f32.mrf.mxu0
      %v810 = vadd.f32 %v764, %v809
      %811 = vdwg.mxu0
      %v813 = vsel %vm495, %v761, 0
      %815 = vmatpush.msra.mxu0 0.0
      %816 = vmatpush.msra.mxu0 0.0
      %817 = vmatpush.msra.mxu0 0.0
      %818 = vmatpush.msra.mxu0 0.0
      %819 = vmatpush.msra.mxu0 0.0
      %820 = vmatpush.msra.mxu0 0.0
      %821 = vmatpush.msra.mxu0 0.0
      %822 = vmatpush.msra.mxu0 %v670
      %823 = vmatpush.msra.mxu0 %v669
      %824 = vmatpush.msra.mxu0 %v668
      %825 = vmatpush.msra.mxu0 %v667
      %826 = vmatpush.msra.mxu0 %v666
      %827 = vmatpush.msra.mxu0 %v665
      %828 = vmatpush.msra.mxu0 %v664
      %829 = vmatpush.msra.mxu0 %v663
      %830 = vmatpush.msra.mxu0 %v662
      %831 = vmatmul.f32.gmra.mxu0 %v813
      %v832 = vpop.f32.mrf.mxu0
      %v833 = vadd.f32 %v764, %v832
      %834 = vdwg.mxu0
      %v836 = vsel %vm495, %v762, 0
      %838 = vmatpush.msra.mxu0 0.0
      %839 = vmatpush.msra.mxu0 0.0
      %840 = vmatpush.msra.mxu0 0.0
      %841 = vmatpush.msra.mxu0 0.0
      %842 = vmatpush.msra.mxu0 0.0
      %843 = vmatpush.msra.mxu0 0.0
      %844 = vmatpush.msra.mxu0 0.0
      %845 = vmatpush.msra.mxu0 %v670
      %846 = vmatpush.msra.mxu0 %v669
      %847 = vmatpush.msra.mxu0 %v668
      %848 = vmatpush.msra.mxu0 %v667
      %849 = vmatpush.msra.mxu0 %v666
      %850 = vmatpush.msra.mxu0 %v665
      %851 = vmatpush.msra.mxu0 %v664
      %852 = vmatpush.msra.mxu0 %v663
      %853 = vmatpush.msra.mxu0 %v662
      %854 = vmatmul.f32.gmra.mxu0 %v836
      %v855 = vpop.f32.mrf.mxu0
      %v856 = vadd.f32 %v764, %v855
      %857 = vdwg.mxu0
      %v858 = vadd.f32 %v787, %v387
      %v859 = vadd.f32 %v810, %v388
      %v860 = vadd.f32 %v833, %v389
      %v861 = vadd.f32 %v856, %v390
      %vm862 = vcmask 191488
      %863 = vst.msk [vmem:[%s386] sm:$0xf] %vm862, %v858
      %864 = vst.msk [vmem:[%s386 + $0x4] sm:$0xf] %vm862, %v859
      %865 = vst.msk [vmem:[%s386 + $0x8] sm:$0xf] %vm862, %v860
      %866 = vst.msk [vmem:[%s386 + $0xc] sm:$0xf] %vm862, %v861
      %p867 = scmp.lt.s32.totalorder %s22, 1
      %s868 = scalar_select %p867, %s22, 1
      %s869 = smul.addr %s868, 4
      %s870 = smul.addr %s869, 4
      %s871 = scalar_lea.vmem %s11, %s870
      // Predicated region
      $region65: #{_lambda_.10} parent=63 // pred_check
        %p872 = pneg %p276
      $region66: #{_lambda_.10} parent=63 // pred_check_branch
        %874 = sbr.rel (%p872) target = $region68
      $region67: #{_lambda_.10} parent=63 // pred_region
        _
      $region68: #{_lambda_.10} parent=63 // pred_fallthru
        _
    $region64: #{_lambda_.10} parent=5 // pred_fallthru
      _
    %p875 = scmp.le.s32.totalorder 2, %s17
    // Predicated region
    $region69: #{_lambda_.10} parent=5 // pred_check
      %p876 = pneg %p875
    $region70: #{_lambda_.10} parent=5 // pred_check_branch
      %878 = sbr.rel (%p876) target = $region72
    $region71: #{_lambda_.10} parent=5 // pred_region
      %s879 = ssub.s32 %s17, 2
      // Predicated region
      $region73: #{_lambda_.10} parent=71 // pred_check
        %p880 = pneg %p282
      $region74: #{_lambda_.10} parent=71 // pred_check_branch
        %882 = sbr.rel (%p880) target = $region76
      $region75: #{_lambda_.10} parent=71 // pred_region
        %p883 = scmp.lt.s32.totalorder %s23, 1
        %s884 = scalar_select %p883, %s23, 1
        %s885 = smul.addr %s884, 4
        %s886 = smul.addr %s885, 4
        %s887 = scalar_lea.vmem %s11, %s886
      $region76: #{_lambda_.10} parent=71 // pred_fallthru
        _
    $region72: #{_lambda_.10} parent=5 // pred_fallthru
      _
  $region6: #{_lambda_.10} parent=0 // loop_footer
    %s21 = sadd.s32 1, %s17
  $region7: #{_lambda_.10} parent=0 // loop_footer_branch
    %16 = sbr.rel target = $region3
  $region8: #{_lambda_.10} parent=0 // loop_exit
    _

</llo_original>
